<compile_context>
chip_gen: v6e
topology: v6e:2x2x1
jax: 0.10.0
libtpu: 0.0.40
codegen_flags: <defaults>
</compile_context>

<pallas_src>
import math

import jax
import jax.numpy as jnp
import numpy as np
from jax import lax
from jax.experimental import pallas as pl
from jax.experimental.pallas import tpu as pltpu


# --------------------------------------------------------------------------
# Pallas kernel: one batch *block* (BB elements) per grid step.
# --------------------------------------------------------------------------
def mtan_enc_kernel(
    # per-batch-block data
    qt_ref,    # (BB, R)  f32  reference (query) times
    ts_ref,    # (BB, L)  f32  event times
    val_ref,   # (BB, L)  f32  event values
    mark_ref,  # (BB, L)  i32  feature index in [1, K]  (data contract: valid when npm==1)
    npm_ref,   # (BB, L)  f32  non-pad mask (0/1)
    # folded time-embedding params: column 0 = linear, columns 1..E-1 = periodic
    wemb_ref,  # (1, E)
    bemb_ref,  # (1, E)
    # packed q/k projection: [wq * 1/sqrt(E) | wk]
    wqk_ref,   # (E, 2E)
    bqk_ref,   # (1, 2E)
    # fused output-projection + GRU input weights: wo@wih, bo@wih + bih
    wgi_ref,   # (K, 3H)
    bgi_ref,   # (1, 3H)
    # GRU recurrent weights (stored transposed, gate order r|z|n)
    whh_ref,   # (H, 3H)
    bhh_ref,   # (1, 3H)
    # output, lane-dense
    out_ref,   # (BB, R*H)
):
    BB, R = qt_ref.shape
    L = ts_ref.shape[1]
    E = wemb_ref.shape[1]
    K = wgi_ref.shape[0]
    H = whh_ref.shape[0]

    qt = qt_ref[...]          # (BB, R)
    ts = ts_ref[...]          # (BB, L)
    val = val_ref[...]        # (BB, L)
    mark = mark_ref[...]      # (BB, L) int32
    npm = npm_ref[...]        # (BB, L)

    # --- learned time embedding on [qt | ts] at once (single sin pass) ------
    t_all = jnp.concatenate([qt, ts], axis=-1)              # (BB, R+L)
    w_emb = wemb_ref[...][None, :, :]                        # (1, 1, E)
    b_emb = bemb_ref[...][None, :, :]
    pre = t_all[:, :, None] * w_emb + b_emb                  # (BB, R+L, E)
    lane = lax.broadcasted_iota(jnp.int32, pre.shape, 2)
    emb = jnp.where(lane == 0, pre, jnp.sin(pre))            # col 0 linear, rest sin

    # --- packed query/key projection: one matmul against [wq*scale | wk] ----
    qk = (jnp.dot(emb.reshape(BB * (R + L), E), wqk_ref[...],
                  preferred_element_type=jnp.float32)
          + bqk_ref[...]).reshape(BB, R + L, 2 * E)
    q = qk[:, :R, :E]                                        # (BB, R, E) (scale folded)
    k = qk[:, R:, E:]                                        # (BB, L, E)

    # --- scaled dot-product scores + multiplicative causal mask --------------
    # NOTE: this batched einsum lowers to BB tiny MXU matmuls; at these dims it
    # is an accepted serialization point (perf-review item 6).
    scores = jnp.einsum('bre,ble->brl', q, k,
                        preferred_element_type=jnp.float32)  # (BB, R, L)
    att = (qt[:, :, None] >= ts[:, None, :]).astype(jnp.float32)
    sc = scores * att

    # --- per-feature masked softmax WITHOUT a (BB,R,K,L) array ---------------
    # The per-(b,r) row max over all L dominates each feature's hit subset and
    # softmax is shift invariant, so one exp pass over (BB,R,L) suffices.
    # Numerator & denominator then come from one batched contraction over L
    # against the stacked [one-hot ; one-hot*val] matrix (in-kernel scatter).
    k2 = lax.broadcasted_iota(jnp.int32, (BB, 2 * K, L), 1)
    hit2 = ((k2 % K) == (mark - 1)[:, None, :]) & (npm[:, None, :] != 0.0)
    hv = jnp.where(hit2, jnp.where(k2 < K, 1.0, val[:, None, :]), 0.0)  # (BB,2K,L)

    m = jnp.max(sc, axis=-1, keepdims=True)                  # (BB, R, 1)
    e = jnp.exp(sc - m)                                      # (BB, R, L) single EUP pass
    nd = jnp.einsum('brl,bkl->brk', e, hv,
                    preferred_element_type=jnp.float32)      # (BB, R, 2K)
    denom = nd[:, :, :K]
    num = nd[:, :, K:]
    # denom == 0 exactly when a feature has no observed events: the reference
    # softmax then multiplies a uniform distribution by an all-zero value row,
    # i.e. the result is 0.  Normalize AFTER the reduction (approx EUP recip).
    x = jnp.where(denom > 0.0,
                  num * pl.reciprocal(denom, approx=True),
                  0.0)                                       # (BB, R, K)

    # --- fused output-projection + GRU input gates (batch folded) ------------
    gi = (jnp.dot(x.reshape(BB * R, K), wgi_ref[...],
                  preferred_element_type=jnp.float32)
          + bgi_ref[...]).reshape(BB, R, 3 * H)              # (BB, R, 3H)

    # --- GRU recurrence: hidden state carried in vregs, fully unrolled -------
    whh = whh_ref[...]
    bhh = bhh_ref[...]
    h = jnp.zeros((BB, H), jnp.float32)
    hs = []
    for t in range(R):
        gi_t = gi[:, t, :]                                   # (BB, 3H)
        if t == 0:
            gh = jnp.broadcast_to(bhh, (BB, 3 * H))          # h0 == 0: skip the matmul
        else:
            gh = jnp.dot(h, whh, preferred_element_type=jnp.float32) + bhh
        rz = jax.nn.sigmoid(gi_t[:, :2 * H] + gh[:, :2 * H]) # r|z in one EUP pass
        r = rz[:, :H]
        z = rz[:, H:]
        n = jnp.tanh(gi_t[:, 2 * H:] + r * gh[:, 2 * H:])
        h = (1.0 - z) * n + z * h
        hs.append(h)

    # single lane-dense store: (BB, R*H)
    out_ref[...] = jnp.concatenate(hs, axis=-1)


# --------------------------------------------------------------------------
# Wrapper
# --------------------------------------------------------------------------
def mtan_enc_forward(params, time_steps, val, mark, non_pad_mask, qtime,
                     *, batch_block=None):
    B, L = time_steps.shape
    R = qtime.shape[1]
    K, H = params["wo"].shape
    E = params["wq"].shape[0]

    # Batch-block selection:
    #  * whole batch when B is small (single grid step);
    #  * otherwise a multiple-of-8 block giving >= 2 grid steps so the
    #    "parallel" grid axis shards across v7x's two TensorCores, capped at
    #    256 so live intermediates stay well inside v7x's 64 MiB VMEM and
    #    v5e's smaller scoped-VMEM default.
    if batch_block is None:
        BB = B
        for cand in (256, 128, 64, 32, 16, 8):
            if B % cand == 0 and B // cand >= 2:
                BB = cand
                break
    else:
        BB = batch_block
    assert B % BB == 0, "batch must be divisible by batch_block"
    assert BB == B or BB % 8 == 0, (
        "batch_block must be a multiple of 8 (sublane tiling) unless it equals "
        "the full batch")
    nb = B // BB

    # ---- fold / fuse weights (tiny; done once, outside the kernel) ----------
    scale = 1.0 / math.sqrt(E)
    wemb = jnp.concatenate([params["wlin"], params["wper"]], axis=-1)      # (1, E)
    bemb = jnp.concatenate([params["blin"], params["bper"]], axis=-1)      # (1, E)
    wqk = jnp.concatenate([params["wq"] * scale, params["wk"]], axis=-1)   # (E, 2E)
    bqk = jnp.concatenate([params["bq"] * scale, params["bk"]], axis=-1)   # (1, 2E)
    wgi = params["wo"] @ params["wih"]                                     # (K, 3H)
    bgi = params["bo"] @ params["wih"] + params["bih"]                     # (1, 3H)

    qt = qtime.astype(jnp.float32)
    ts = time_steps.astype(jnp.float32)
    vl = val.astype(jnp.float32)
    mk = mark.astype(jnp.int32)
    npm = non_pad_mask[:, :, 0].astype(jnp.float32)

    data_spec = lambda shape: pl.BlockSpec(shape, lambda b: (b, 0))
    w_spec = lambda shape: pl.BlockSpec(shape, lambda b: (0, 0))

    out = pl.pallas_call(
        mtan_enc_kernel,
        out_shape=jax.ShapeDtypeStruct((B, R * H), jnp.float32),
        grid=(nb,),
        in_specs=[
            data_spec((BB, R)),      # qtime
            data_spec((BB, L)),      # time_steps
            data_spec((BB, L)),      # val
            data_spec((BB, L)),      # mark
            data_spec((BB, L)),      # non_pad_mask
            w_spec((1, E)), w_spec((1, E)),             # wemb, bemb
            w_spec((E, 2 * E)), w_spec((1, 2 * E)),     # wqk, bqk
            w_spec((K, 3 * H)), w_spec((1, 3 * H)),     # wgi, bgi
            w_spec((H, 3 * H)), w_spec((1, 3 * H)),     # whh, bhh
        ],
        out_specs=pl.BlockSpec((BB, R * H), lambda b: (b, 0)),
        # Per-step HBM traffic is only a few KiB -> compute/latency bound on
        # every generation: keep default double buffering and VMEM limits.
        compiler_params=pltpu.CompilerParams(
            dimension_semantics=("parallel",),
        ),
    )(qt, ts, vl, mk, npm,
      wemb, bemb, wqk, bqk, wgi, bgi,
      params["whh"], params["bhh"])

    return out.reshape(B, R, H)


# --------------------------------------------------------------------------
# Pure-JAX reference (same math as the PyTorch module) for verification.
# --------------------------------------------------------------------------
def mtan_enc_reference(params, time_steps, val, mark, non_pad_mask, qtime):
    B, L = time_steps.shape
    K, H = params["wo"].shape
    E = params["wq"].shape[0]

    npm = non_pad_mask[:, :, 0]
    npm_bool = npm != 0
    onehot = jax.nn.one_hot(mark - 1, K, dtype=jnp.float32)
    val_blk = jnp.where(npm_bool[:, :, None], onehot * val[:, :, None], 0.0)
    mask_blk = jnp.where(npm_bool[:, :, None], onehot * npm[:, :, None], 0.0)

    qt3 = qtime[:, :, None]
    ts3 = time_steps[:, :, None]

    def embed(t):
        lin = t * params["wlin"] + params["blin"]
        per = jnp.sin(t * params["wper"] + params["bper"])
        return jnp.concatenate([lin, per], axis=-1)

    q = embed(qt3) @ params["wq"] + params["bq"]                   # (B, R, E)
    k = embed(ts3) @ params["wk"] + params["bk"]                   # (B, L, E)
    scores = jnp.einsum("bre,ble->brl", q, k) / math.sqrt(E)
    att = (qt3 >= jnp.swapaxes(ts3, 1, 2)).astype(jnp.float32)     # (B, R, L)
    s3 = (scores * att)[..., None]                                 # (B, R, L, 1)
    masked = jnp.where(mask_blk[:, None, :, :] == 0.0, -1e9, s3)   # (B, R, L, K)
    p = jax.nn.softmax(masked, axis=2)
    x = jnp.sum(p * val_blk[:, None, :, :], axis=2)                # (B, R, K)
    x = x @ params["wo"] + params["bo"]                            # (B, R, H)

    gi = x @ params["wih"] + params["bih"]                         # (B, R, 3H)

    def step(h, gi_t):
        gh = h @ params["whh"] + params["bhh"]
        r = jax.nn.sigmoid(gi_t[:, :H] + gh[:, :H])
        z = jax.nn.sigmoid(gi_t[:, H:2 * H] + gh[:, H:2 * H])
        n = jnp.tanh(gi_t[:, 2 * H:] + r * gh[:, 2 * H:])
        h_new = (1.0 - z) * n + z * h
        return h_new, h_new

    _, hs = lax.scan(step, jnp.zeros((B, H), jnp.float32),
                     jnp.swapaxes(gi, 0, 1))
    return jnp.swapaxes(hs, 0, 1)                                  # (B, R, H)


# --------------------------------------------------------------------------
# Main
# --------------------------------------------------------------------------
if __name__ == "__main__":
    B, L, R = 2, 16, 8          # batch, event-seq length, #reference points
    K = 4                       # input_dim (number of features / marks)
    E = 16                      # embed_time
    H = 16                      # nhidden

    root = jax.random.PRNGKey(0)
    pkeys = jax.random.split(root, 16)
    ikeys = jax.random.split(jax.random.fold_in(root, 1), 8)

    def init(key, shape, scale=0.1):
        return scale * jax.random.normal(key, shape, jnp.float32)

    params = {
        # learn_time_embedding: Linear(1,1) and Linear(1, E-1) (stored transposed)
        "wlin": init(pkeys[0], (1, 1)),
        "blin": init(pkeys[1], (1, 1)),
        "wper": init(pkeys[2], (1, E - 1)),
        "bper": init(pkeys[3], (1, E - 1)),
        # multiTimeAttention.linears[0] / [1]: Linear(E, E) (transposed)
        "wq": init(pkeys[4], (E, E)),
        "bq": init(pkeys[5], (1, E)),
        "wk": init(pkeys[6], (E, E)),
        "bk": init(pkeys[7], (1, E)),
        # multiTimeAttention.linears[2]: Linear(K*h, H) (transposed)
        "wo": init(pkeys[8], (K, H)),
        "bo": init(pkeys[9], (1, H)),
        # GRU(H, H): weight_ih/hh (3H, H) -> stored transposed (H, 3H), gates r|z|n
        "wih": init(pkeys[10], (H, 3 * H)),
        "bih": init(pkeys[11], (1, 3 * H)),
        "whh": init(pkeys[12], (H, 3 * H)),
        "bhh": init(pkeys[13], (1, 3 * H)),
    }

    time_steps = jnp.sort(jax.random.uniform(ikeys[0], (B, L)), axis=1).astype(jnp.float32)
    val = jax.random.normal(ikeys[1], (B, L), jnp.float32)
    mark = jax.random.randint(ikeys[2], (B, L), 1, K + 1, jnp.int32)
    non_pad_mask = (jax.random.uniform(ikeys[3], (B, L, 1)) > 0.2).astype(jnp.float32)
    qtime = jnp.sort(jax.random.uniform(ikeys[4], (B, R)), axis=1).astype(jnp.float32)

    out = mtan_enc_forward(params, time_steps, val, mark, non_pad_mask, qtime)
    out = jax.block_until_ready(out)

    ref = mtan_enc_reference(params, time_steps, val, mark, non_pad_mask, qtime)
    # tolerance intentionally loose: softmax normalization uses the EUP
    # approximate reciprocal and the tiny linears are fused/refactored.
    np.testing.assert_allclose(np.asarray(out), np.asarray(ref), rtol=2e-3, atol=2e-3)

    assert out.shape == (B, R, H)
    print("KERNEL_OK")
</pallas_src>

<mosaic_0001>
module attributes {stable_mosaic.version = 11 : i64} {
  func.func @mtan_enc_kernel(%arg0: i32, %arg1: memref<2x8xf32, #tpu.memory_space<vmem>>, %arg2: memref<2x16xf32, #tpu.memory_space<vmem>>, %arg3: memref<2x16xf32, #tpu.memory_space<vmem>>, %arg4: memref<2x16xi32, #tpu.memory_space<vmem>>, %arg5: memref<2x16xf32, #tpu.memory_space<vmem>>, %arg6: memref<1x16xf32, #tpu.memory_space<vmem>>, %arg7: memref<1x16xf32, #tpu.memory_space<vmem>>, %arg8: memref<16x32xf32, #tpu.memory_space<vmem>>, %arg9: memref<1x32xf32, #tpu.memory_space<vmem>>, %arg10: memref<4x48xf32, #tpu.memory_space<vmem>>, %arg11: memref<1x48xf32, #tpu.memory_space<vmem>>, %arg12: memref<16x48xf32, #tpu.memory_space<vmem>>, %arg13: memref<1x48xf32, #tpu.memory_space<vmem>>, %arg14: memref<2x128xf32, #tpu.memory_space<vmem>>) attributes {dimension_semantics = [#tpu.dimension_semantics<parallel>], iteration_bounds = array<i64: 1>, scalar_prefetch = 0 : i64, scratch_operands = 0 : i64, tpu.core_type = #tpu.core_type<tc>, window_params = [{transform_indices = @transform_0, window_bounds = array<i64: 2, 8>}, {transform_indices = @transform_1, window_bounds = array<i64: 2, 16>}, {transform_indices = @transform_2, window_bounds = array<i64: 2, 16>}, {transform_indices = @transform_3, window_bounds = array<i64: 2, 16>}, {transform_indices = @transform_4, window_bounds = array<i64: 2, 16>}, {pipeline_mode = #tpu.pipeline_mode<synchronous>, transform_indices = @transform_5, window_bounds = array<i64: 1, 16>}, {pipeline_mode = #tpu.pipeline_mode<synchronous>, transform_indices = @transform_6, window_bounds = array<i64: 1, 16>}, {pipeline_mode = #tpu.pipeline_mode<synchronous>, transform_indices = @transform_7, window_bounds = array<i64: 16, 32>}, {pipeline_mode = #tpu.pipeline_mode<synchronous>, transform_indices = @transform_8, window_bounds = array<i64: 1, 32>}, {pipeline_mode = #tpu.pipeline_mode<synchronous>, transform_indices = @transform_9, window_bounds = array<i64: 4, 48>}, {pipeline_mode = #tpu.pipeline_mode<synchronous>, transform_indices = @transform_10, window_bounds = array<i64: 1, 48>}, {pipeline_mode = #tpu.pipeline_mode<synchronous>, transform_indices = @transform_11, window_bounds = array<i64: 16, 48>}, {pipeline_mode = #tpu.pipeline_mode<synchronous>, transform_indices = @transform_12, window_bounds = array<i64: 1, 48>}, {transform_indices = @transform_13, window_bounds = array<i64: 2, 128>}]} {
    %c0 = arith.constant 0 : index
    %c0_0 = arith.constant 0 : index
    %0 = vector.load %arg1[%c0, %c0_0] : memref<2x8xf32, #tpu.memory_space<vmem>>, vector<2x8xf32>
    %c0_1 = arith.constant 0 : index
    %c0_2 = arith.constant 0 : index
    %1 = vector.load %arg2[%c0_1, %c0_2] : memref<2x16xf32, #tpu.memory_space<vmem>>, vector<2x16xf32>
    %c0_3 = arith.constant 0 : index
    %c0_4 = arith.constant 0 : index
    %2 = vector.load %arg3[%c0_3, %c0_4] : memref<2x16xf32, #tpu.memory_space<vmem>>, vector<2x16xf32>
    %c0_5 = arith.constant 0 : index
    %c0_6 = arith.constant 0 : index
    %3 = vector.load %arg4[%c0_5, %c0_6] : memref<2x16xi32, #tpu.memory_space<vmem>>, vector<2x16xi32>
    %c0_7 = arith.constant 0 : index
    %c0_8 = arith.constant 0 : index
    %4 = vector.load %arg5[%c0_7, %c0_8] : memref<2x16xf32, #tpu.memory_space<vmem>>, vector<2x16xf32>
    %5 = tpu.concatenate %0, %1 in 1 : vector<2x8xf32>, vector<2x16xf32> -> vector<2x24xf32>
    %c0_9 = arith.constant 0 : index
    %c0_10 = arith.constant 0 : index
    %6 = vector.load %arg6[%c0_9, %c0_10] : memref<1x16xf32, #tpu.memory_space<vmem>>, vector<1x16xf32>
    %7 = vector.shape_cast %6 : vector<1x16xf32> to vector<1x1x16xf32>
    %c0_11 = arith.constant 0 : index
    %c0_12 = arith.constant 0 : index
    %8 = vector.load %arg7[%c0_11, %c0_12] : memref<1x16xf32, #tpu.memory_space<vmem>>, vector<1x16xf32>
    %9 = vector.shape_cast %8 : vector<1x16xf32> to vector<1x1x16xf32>
    %10 = vector.shape_cast %5 : vector<2x24xf32> to vector<2x24x1xf32>
    %11 = vector.broadcast %10 : vector<2x24x1xf32> to vector<2x24x16xf32>
    %12 = vector.broadcast %7 : vector<1x1x16xf32> to vector<2x24x16xf32>
    %13 = arith.mulf %11, %12 : vector<2x24x16xf32>
    %14 = vector.broadcast %9 : vector<1x1x16xf32> to vector<2x24x16xf32>
    %15 = arith.addf %13, %14 : vector<2x24x16xf32>
    %16 = tpu.iota {dimensions = array<i32: 2>} : vector<2x24x16xi32>
    %c0_i32 = arith.constant 0 : i32
    %17 = vector.broadcast %c0_i32 : i32 to vector<2x24x16xi32>
    %18 = arith.cmpi eq, %16, %17 : vector<2x24x16xi32>
    %19 = math.sin %15 : vector<2x24x16xf32>
    %20 = arith.select %18, %15, %19 : vector<2x24x16xi1>, vector<2x24x16xf32>
    %21 = vector.shape_cast %20 : vector<2x24x16xf32> to vector<48x16xf32>
    %c0_13 = arith.constant 0 : index
    %c0_14 = arith.constant 0 : index
    %22 = vector.load %arg8[%c0_13, %c0_14] : memref<16x32xf32, #tpu.memory_space<vmem>>, vector<16x32xf32>
    %cst = arith.constant dense<0.000000e+00> : vector<48x32xf32>
    %23 = tpu.matmul %21, %22, %cst {dimension_numbers = #tpu.dot_dimension_numbers<[1], [0], [0], [1], [0, 0, 1, 1], [], []>} : vector<48x16xf32>, vector<16x32xf32>, vector<48x32xf32> -> vector<48x32xf32>
    %c0_15 = arith.constant 0 : index
    %c0_16 = arith.constant 0 : index
    %24 = vector.load %arg9[%c0_15, %c0_16] : memref<1x32xf32, #tpu.memory_space<vmem>>, vector<1x32xf32>
    %25 = vector.broadcast %24 : vector<1x32xf32> to vector<48x32xf32>
    %26 = arith.addf %23, %25 : vector<48x32xf32>
    %27 = vector.shape_cast %26 : vector<48x32xf32> to vector<2x24x32xf32>
    %28 = vector.extract_strided_slice %27 {offsets = [0, 0, 0], sizes = [2, 8, 16], strides = [1, 1, 1]} : vector<2x24x32xf32> to vector<2x8x16xf32>
    %29 = vector.extract_strided_slice %27 {offsets = [0, 8, 16], sizes = [2, 16, 16], strides = [1, 1, 1]} : vector<2x24x32xf32> to vector<2x16x16xf32>
    "tpu.trace_start"() <{level = 10 : i32, message = "bre,ble->brl"}> : () -> ()
    %cst_17 = arith.constant dense<0.000000e+00> : vector<2x8x16xf32>
    %30 = tpu.matmul %28, %29, %cst_17 {dimension_numbers = #tpu.dot_dimension_numbers<[2], [2], [1], [1], [0, 0, 0, 1, 1, 1], [0], [0]>} : vector<2x8x16xf32>, vector<2x16x16xf32>, vector<2x8x16xf32> -> vector<2x8x16xf32>
    "tpu.trace_stop"() : () -> ()
    %31 = vector.shape_cast %0 : vector<2x8xf32> to vector<2x8x1xf32>
    %32 = vector.shape_cast %1 : vector<2x16xf32> to vector<2x1x16xf32>
    %33 = vector.broadcast %31 : vector<2x8x1xf32> to vector<2x8x16xf32>
    %34 = vector.broadcast %32 : vector<2x1x16xf32> to vector<2x8x16xf32>
    %35 = arith.cmpf oge, %33, %34 : vector<2x8x16xf32>
    %36 = arith.extui %35 : vector<2x8x16xi1> to vector<2x8x16xi32>
    %37 = arith.sitofp %36 : vector<2x8x16xi32> to vector<2x8x16xf32>
    %38 = arith.mulf %30, %37 : vector<2x8x16xf32>
    %39 = tpu.iota {dimensions = array<i32: 1>} : vector<2x8x16xi32>
    %c4_i32 = arith.constant 4 : i32
    %c0_i32_18 = arith.constant 0 : i32
    %40 = arith.cmpi eq, %c4_i32, %c0_i32_18 : i32
    %c1_i32 = arith.constant 1 : i32
    %41 = arith.select %40, %c1_i32, %c4_i32 : i32
    %42 = vector.broadcast %41 : i32 to vector<2x8x16xi32>
    %43 = arith.remsi %39, %42 : vector<2x8x16xi32>
    %c0_i32_19 = arith.constant 0 : i32
    %44 = vector.broadcast %c0_i32_19 : i32 to vector<2x8x16xi32>
    %45 = arith.cmpi ne, %43, %44 : vector<2x8x16xi32>
    %c0_i32_20 = arith.constant 0 : i32
    %46 = vector.broadcast %c0_i32_20 : i32 to vector<2x8x16xi32>
    %47 = arith.cmpi slt, %43, %46 : vector<2x8x16xi32>
    %c0_i32_21 = arith.constant 0 : i32
    %48 = arith.cmpi slt, %41, %c0_i32_21 : i32
    %49 = vector.broadcast %48 : i1 to vector<2x8x16xi1>
    %50 = vector.broadcast %49 : vector<2x8x16xi1> to vector<2x8x16xi1>
    %51 = arith.xori %47, %50 : vector<2x8x16xi1>
    %52 = arith.andi %51, %45 : vector<2x8x16xi1>
    %53 = vector.broadcast %41 : i32 to vector<2x8x16xi32>
    %54 = arith.addi %43, %53 : vector<2x8x16xi32>
    %55 = arith.select %52, %54, %43 : vector<2x8x16xi1>, vector<2x8x16xi32>
    %c1_i32_22 = arith.constant 1 : i32
    %56 = vector.broadcast %c1_i32_22 : i32 to vector<2x16xi32>
    %57 = arith.subi %3, %56 : vector<2x16xi32>
    %58 = vector.shape_cast %57 : vector<2x16xi32> to vector<2x1x16xi32>
    %59 = vector.broadcast %58 : vector<2x1x16xi32> to vector<2x8x16xi32>
    %60 = arith.cmpi eq, %55, %59 : vector<2x8x16xi32>
    %61 = vector.shape_cast %4 : vector<2x16xf32> to vector<2x1x16xf32>
    %cst_23 = arith.constant 0.000000e+00 : f32
    %62 = vector.broadcast %cst_23 : f32 to vector<2x1x16xf32>
    %63 = arith.cmpf one, %61, %62 : vector<2x1x16xf32>
    %64 = vector.broadcast %63 : vector<2x1x16xi1> to vector<2x8x16xi1>
    %65 = arith.andi %60, %64 : vector<2x8x16xi1>
    %c4_i32_24 = arith.constant 4 : i32
    %66 = vector.broadcast %c4_i32_24 : i32 to vector<2x8x16xi32>
    %67 = arith.cmpi slt, %39, %66 : vector<2x8x16xi32>
    %68 = vector.shape_cast %2 : vector<2x16xf32> to vector<2x1x16xf32>
    %cst_25 = arith.constant 1.000000e+00 : f32
    %69 = vector.broadcast %cst_25 : f32 to vector<2x8x16xf32>
    %70 = vector.shape_cast %68 : vector<2x1x16xf32> to vector<2x1x16xf32>
    %71 = vector.broadcast %70 : vector<2x1x16xf32> to vector<2x8x16xf32>
    %72 = arith.select %67, %69, %71 : vector<2x8x16xi1>, vector<2x8x16xf32>
    %cst_26 = arith.constant 0.000000e+00 : f32
    %73 = vector.broadcast %cst_26 : f32 to vector<2x8x16xf32>
    %74 = arith.select %65, %72, %73 : vector<2x8x16xi1>, vector<2x8x16xf32>
    %cst_27 = arith.constant dense<0xFF800000> : vector<2x8xf32>
    %75 = vector.multi_reduction <maximumf>, %38, %cst_27 [2] : vector<2x8x16xf32> to vector<2x8xf32>
    %76 = vector.shape_cast %75 : vector<2x8xf32> to vector<2x8x1xf32>
    %77 = vector.broadcast %76 : vector<2x8x1xf32> to vector<2x8x16xf32>
    %78 = arith.subf %38, %77 : vector<2x8x16xf32>
    %79 = math.exp %78 : vector<2x8x16xf32>
    "tpu.trace_start"() <{level = 10 : i32, message = "brl,bkl->brk"}> : () -> ()
    %cst_28 = arith.constant dense<0.000000e+00> : vector<2x8x8xf32>
    %80 = tpu.matmul %79, %74, %cst_28 {dimension_numbers = #tpu.dot_dimension_numbers<[2], [2], [1], [1], [0, 0, 0, 1, 1, 1], [0], [0]>} : vector<2x8x16xf32>, vector<2x8x16xf32>, vector<2x8x8xf32> -> vector<2x8x8xf32>
    "tpu.trace_stop"() : () -> ()
    %81 = vector.extract_strided_slice %80 {offsets = [0, 0, 0], sizes = [2, 8, 4], strides = [1, 1, 1]} : vector<2x8x8xf32> to vector<2x8x4xf32>
    %82 = vector.extract_strided_slice %80 {offsets = [0, 0, 4], sizes = [2, 8, 4], strides = [1, 1, 1]} : vector<2x8x8xf32> to vector<2x8x4xf32>
    %cst_29 = arith.constant 0.000000e+00 : f32
    %83 = vector.broadcast %cst_29 : f32 to vector<2x8x4xf32>
    %84 = arith.cmpf ogt, %81, %83 : vector<2x8x4xf32>
    %85 = tpu.reciprocal %81 {approx = true} : vector<2x8x4xf32> -> vector<2x8x4xf32>
    %86 = arith.mulf %82, %85 : vector<2x8x4xf32>
    %cst_30 = arith.constant 0.000000e+00 : f32
    %87 = vector.broadcast %cst_30 : f32 to vector<2x8x4xf32>
    %88 = arith.select %84, %86, %87 : vector<2x8x4xi1>, vector<2x8x4xf32>
    %89 = vector.shape_cast %88 : vector<2x8x4xf32> to vector<16x4xf32>
    %c0_31 = arith.constant 0 : index
    %c0_32 = arith.constant 0 : index
    %90 = vector.load %arg10[%c0_31, %c0_32] : memref<4x48xf32, #tpu.memory_space<vmem>>, vector<4x48xf32>
    %cst_33 = arith.constant dense<0.000000e+00> : vector<16x48xf32>
    %91 = tpu.matmul %89, %90, %cst_33 {dimension_numbers = #tpu.dot_dimension_numbers<[1], [0], [0], [1], [0, 0, 1, 1], [], []>} : vector<16x4xf32>, vector<4x48xf32>, vector<16x48xf32> -> vector<16x48xf32>
    %c0_34 = arith.constant 0 : index
    %c0_35 = arith.constant 0 : index
    %92 = vector.load %arg11[%c0_34, %c0_35] : memref<1x48xf32, #tpu.memory_space<vmem>>, vector<1x48xf32>
    %93 = vector.broadcast %92 : vector<1x48xf32> to vector<16x48xf32>
    %94 = arith.addf %91, %93 : vector<16x48xf32>
    %95 = vector.shape_cast %94 : vector<16x48xf32> to vector<2x8x48xf32>
    %c0_36 = arith.constant 0 : index
    %c0_37 = arith.constant 0 : index
    %96 = vector.load %arg12[%c0_36, %c0_37] : memref<16x48xf32, #tpu.memory_space<vmem>>, vector<16x48xf32>
    %c0_38 = arith.constant 0 : index
    %c0_39 = arith.constant 0 : index
    %97 = vector.load %arg13[%c0_38, %c0_39] : memref<1x48xf32, #tpu.memory_space<vmem>>, vector<1x48xf32>
    %cst_40 = arith.constant 0.000000e+00 : f32
    %98 = vector.broadcast %cst_40 : f32 to vector<2x16xf32>
    %99 = vector.extract_strided_slice %95 {offsets = [0, 0, 0], sizes = [2, 1, 48], strides = [1, 1, 1]} : vector<2x8x48xf32> to vector<2x1x48xf32>
    %100 = vector.shape_cast %99 : vector<2x1x48xf32> to vector<2x48xf32>
    %101 = vector.shape_cast %97 : vector<1x48xf32> to vector<1x48xf32>
    %102 = vector.broadcast %101 : vector<1x48xf32> to vector<2x48xf32>
    %103 = vector.extract_strided_slice %100 {offsets = [0, 0], sizes = [2, 32], strides = [1, 1]} : vector<2x48xf32> to vector<2x32xf32>
    %104 = vector.extract_strided_slice %102 {offsets = [0, 0], sizes = [2, 32], strides = [1, 1]} : vector<2x48xf32> to vector<2x32xf32>
    %105 = arith.addf %103, %104 : vector<2x32xf32>
    %106 = arith.negf %105 : vector<2x32xf32>
    %107 = math.exp %106 : vector<2x32xf32>
    %cst_41 = arith.constant 1.000000e+00 : f32
    %108 = vector.broadcast %cst_41 : f32 to vector<2x32xf32>
    %109 = arith.addf %108, %107 : vector<2x32xf32>
    %110 = arith.divf %108, %109 : vector<2x32xf32>
    %111 = vector.extract_strided_slice %110 {offsets = [0, 0], sizes = [2, 16], strides = [1, 1]} : vector<2x32xf32> to vector<2x16xf32>
    %112 = vector.extract_strided_slice %110 {offsets = [0, 16], sizes = [2, 16], strides = [1, 1]} : vector<2x32xf32> to vector<2x16xf32>
    %113 = vector.extract_strided_slice %100 {offsets = [0, 32], sizes = [2, 16], strides = [1, 1]} : vector<2x48xf32> to vector<2x16xf32>
    %114 = vector.extract_strided_slice %102 {offsets = [0, 32], sizes = [2, 16], strides = [1, 1]} : vector<2x48xf32> to vector<2x16xf32>
    %115 = arith.mulf %111, %114 : vector<2x16xf32>
    %116 = arith.addf %113, %115 : vector<2x16xf32>
    %117 = math.tanh %116 : vector<2x16xf32>
    %cst_42 = arith.constant 1.000000e+00 : f32
    %118 = vector.broadcast %cst_42 : f32 to vector<2x16xf32>
    %119 = arith.subf %118, %112 : vector<2x16xf32>
    %120 = arith.mulf %119, %117 : vector<2x16xf32>
    %121 = arith.mulf %112, %98 : vector<2x16xf32>
    %122 = arith.addf %120, %121 : vector<2x16xf32>
    %123 = vector.extract_strided_slice %95 {offsets = [0, 1, 0], sizes = [2, 1, 48], strides = [1, 1, 1]} : vector<2x8x48xf32> to vector<2x1x48xf32>
    %124 = vector.shape_cast %123 : vector<2x1x48xf32> to vector<2x48xf32>
    %cst_43 = arith.constant dense<0.000000e+00> : vector<2x48xf32>
    %125 = tpu.matmul %122, %96, %cst_43 {dimension_numbers = #tpu.dot_dimension_numbers<[1], [0], [0], [1], [0, 0, 1, 1], [], []>} : vector<2x16xf32>, vector<16x48xf32>, vector<2x48xf32> -> vector<2x48xf32>
    %126 = vector.broadcast %97 : vector<1x48xf32> to vector<2x48xf32>
    %127 = arith.addf %125, %126 : vector<2x48xf32>
    %128 = vector.extract_strided_slice %124 {offsets = [0, 0], sizes = [2, 32], strides = [1, 1]} : vector<2x48xf32> to vector<2x32xf32>
    %129 = vector.extract_strided_slice %127 {offsets = [0, 0], sizes = [2, 32], strides = [1, 1]} : vector<2x48xf32> to vector<2x32xf32>
    %130 = arith.addf %128, %129 : vector<2x32xf32>
    %131 = arith.negf %130 : vector<2x32xf32>
    %132 = math.exp %131 : vector<2x32xf32>
    %cst_44 = arith.constant 1.000000e+00 : f32
    %133 = vector.broadcast %cst_44 : f32 to vector<2x32xf32>
    %134 = arith.addf %133, %132 : vector<2x32xf32>
    %135 = arith.divf %133, %134 : vector<2x32xf32>
    %136 = vector.extract_strided_slice %135 {offsets = [0, 0], sizes = [2, 16], strides = [1, 1]} : vector<2x32xf32> to vector<2x16xf32>
    %137 = vector.extract_strided_slice %135 {offsets = [0, 16], sizes = [2, 16], strides = [1, 1]} : vector<2x32xf32> to vector<2x16xf32>
    %138 = vector.extract_strided_slice %124 {offsets = [0, 32], sizes = [2, 16], strides = [1, 1]} : vector<2x48xf32> to vector<2x16xf32>
    %139 = vector.extract_strided_slice %127 {offsets = [0, 32], sizes = [2, 16], strides = [1, 1]} : vector<2x48xf32> to vector<2x16xf32>
    %140 = arith.mulf %136, %139 : vector<2x16xf32>
    %141 = arith.addf %138, %140 : vector<2x16xf32>
    %142 = math.tanh %141 : vector<2x16xf32>
    %cst_45 = arith.constant 1.000000e+00 : f32
    %143 = vector.broadcast %cst_45 : f32 to vector<2x16xf32>
    %144 = arith.subf %143, %137 : vector<2x16xf32>
    %145 = arith.mulf %144, %142 : vector<2x16xf32>
    %146 = arith.mulf %137, %122 : vector<2x16xf32>
    %147 = arith.addf %145, %146 : vector<2x16xf32>
    %148 = vector.extract_strided_slice %95 {offsets = [0, 2, 0], sizes = [2, 1, 48], strides = [1, 1, 1]} : vector<2x8x48xf32> to vector<2x1x48xf32>
    %149 = vector.shape_cast %148 : vector<2x1x48xf32> to vector<2x48xf32>
    %cst_46 = arith.constant dense<0.000000e+00> : vector<2x48xf32>
    %150 = tpu.matmul %147, %96, %cst_46 {dimension_numbers = #tpu.dot_dimension_numbers<[1], [0], [0], [1], [0, 0, 1, 1], [], []>} : vector<2x16xf32>, vector<16x48xf32>, vector<2x48xf32> -> vector<2x48xf32>
    %151 = vector.broadcast %97 : vector<1x48xf32> to vector<2x48xf32>
    %152 = arith.addf %150, %151 : vector<2x48xf32>
    %153 = vector.extract_strided_slice %149 {offsets = [0, 0], sizes = [2, 32], strides = [1, 1]} : vector<2x48xf32> to vector<2x32xf32>
    %154 = vector.extract_strided_slice %152 {offsets = [0, 0], sizes = [2, 32], strides = [1, 1]} : vector<2x48xf32> to vector<2x32xf32>
    %155 = arith.addf %153, %154 : vector<2x32xf32>
    %156 = arith.negf %155 : vector<2x32xf32>
    %157 = math.exp %156 : vector<2x32xf32>
    %cst_47 = arith.constant 1.000000e+00 : f32
    %158 = vector.broadcast %cst_47 : f32 to vector<2x32xf32>
    %159 = arith.addf %158, %157 : vector<2x32xf32>
    %160 = arith.divf %158, %159 : vector<2x32xf32>
    %161 = vector.extract_strided_slice %160 {offsets = [0, 0], sizes = [2, 16], strides = [1, 1]} : vector<2x32xf32> to vector<2x16xf32>
    %162 = vector.extract_strided_slice %160 {offsets = [0, 16], sizes = [2, 16], strides = [1, 1]} : vector<2x32xf32> to vector<2x16xf32>
    %163 = vector.extract_strided_slice %149 {offsets = [0, 32], sizes = [2, 16], strides = [1, 1]} : vector<2x48xf32> to vector<2x16xf32>
    %164 = vector.extract_strided_slice %152 {offsets = [0, 32], sizes = [2, 16], strides = [1, 1]} : vector<2x48xf32> to vector<2x16xf32>
    %165 = arith.mulf %161, %164 : vector<2x16xf32>
    %166 = arith.addf %163, %165 : vector<2x16xf32>
    %167 = math.tanh %166 : vector<2x16xf32>
    %cst_48 = arith.constant 1.000000e+00 : f32
    %168 = vector.broadcast %cst_48 : f32 to vector<2x16xf32>
    %169 = arith.subf %168, %162 : vector<2x16xf32>
    %170 = arith.mulf %169, %167 : vector<2x16xf32>
    %171 = arith.mulf %162, %147 : vector<2x16xf32>
    %172 = arith.addf %170, %171 : vector<2x16xf32>
    %173 = vector.extract_strided_slice %95 {offsets = [0, 3, 0], sizes = [2, 1, 48], strides = [1, 1, 1]} : vector<2x8x48xf32> to vector<2x1x48xf32>
    %174 = vector.shape_cast %173 : vector<2x1x48xf32> to vector<2x48xf32>
    %cst_49 = arith.constant dense<0.000000e+00> : vector<2x48xf32>
    %175 = tpu.matmul %172, %96, %cst_49 {dimension_numbers = #tpu.dot_dimension_numbers<[1], [0], [0], [1], [0, 0, 1, 1], [], []>} : vector<2x16xf32>, vector<16x48xf32>, vector<2x48xf32> -> vector<2x48xf32>
    %176 = vector.broadcast %97 : vector<1x48xf32> to vector<2x48xf32>
    %177 = arith.addf %175, %176 : vector<2x48xf32>
    %178 = vector.extract_strided_slice %174 {offsets = [0, 0], sizes = [2, 32], strides = [1, 1]} : vector<2x48xf32> to vector<2x32xf32>
    %179 = vector.extract_strided_slice %177 {offsets = [0, 0], sizes = [2, 32], strides = [1, 1]} : vector<2x48xf32> to vector<2x32xf32>
    %180 = arith.addf %178, %179 : vector<2x32xf32>
    %181 = arith.negf %180 : vector<2x32xf32>
    %182 = math.exp %181 : vector<2x32xf32>
    %cst_50 = arith.constant 1.000000e+00 : f32
    %183 = vector.broadcast %cst_50 : f32 to vector<2x32xf32>
    %184 = arith.addf %183, %182 : vector<2x32xf32>
    %185 = arith.divf %183, %184 : vector<2x32xf32>
    %186 = vector.extract_strided_slice %185 {offsets = [0, 0], sizes = [2, 16], strides = [1, 1]} : vector<2x32xf32> to vector<2x16xf32>
    %187 = vector.extract_strided_slice %185 {offsets = [0, 16], sizes = [2, 16], strides = [1, 1]} : vector<2x32xf32> to vector<2x16xf32>
    %188 = vector.extract_strided_slice %174 {offsets = [0, 32], sizes = [2, 16], strides = [1, 1]} : vector<2x48xf32> to vector<2x16xf32>
    %189 = vector.extract_strided_slice %177 {offsets = [0, 32], sizes = [2, 16], strides = [1, 1]} : vector<2x48xf32> to vector<2x16xf32>
    %190 = arith.mulf %186, %189 : vector<2x16xf32>
    %191 = arith.addf %188, %190 : vector<2x16xf32>
    %192 = math.tanh %191 : vector<2x16xf32>
    %cst_51 = arith.constant 1.000000e+00 : f32
    %193 = vector.broadcast %cst_51 : f32 to vector<2x16xf32>
    %194 = arith.subf %193, %187 : vector<2x16xf32>
    %195 = arith.mulf %194, %192 : vector<2x16xf32>
    %196 = arith.mulf %187, %172 : vector<2x16xf32>
    %197 = arith.addf %195, %196 : vector<2x16xf32>
    %198 = vector.extract_strided_slice %95 {offsets = [0, 4, 0], sizes = [2, 1, 48], strides = [1, 1, 1]} : vector<2x8x48xf32> to vector<2x1x48xf32>
    %199 = vector.shape_cast %198 : vector<2x1x48xf32> to vector<2x48xf32>
    %cst_52 = arith.constant dense<0.000000e+00> : vector<2x48xf32>
    %200 = tpu.matmul %197, %96, %cst_52 {dimension_numbers = #tpu.dot_dimension_numbers<[1], [0], [0], [1], [0, 0, 1, 1], [], []>} : vector<2x16xf32>, vector<16x48xf32>, vector<2x48xf32> -> vector<2x48xf32>
    %201 = vector.broadcast %97 : vector<1x48xf32> to vector<2x48xf32>
    %202 = arith.addf %200, %201 : vector<2x48xf32>
    %203 = vector.extract_strided_slice %199 {offsets = [0, 0], sizes = [2, 32], strides = [1, 1]} : vector<2x48xf32> to vector<2x32xf32>
    %204 = vector.extract_strided_slice %202 {offsets = [0, 0], sizes = [2, 32], strides = [1, 1]} : vector<2x48xf32> to vector<2x32xf32>
    %205 = arith.addf %203, %204 : vector<2x32xf32>
    %206 = arith.negf %205 : vector<2x32xf32>
    %207 = math.exp %206 : vector<2x32xf32>
    %cst_53 = arith.constant 1.000000e+00 : f32
    %208 = vector.broadcast %cst_53 : f32 to vector<2x32xf32>
    %209 = arith.addf %208, %207 : vector<2x32xf32>
    %210 = arith.divf %208, %209 : vector<2x32xf32>
    %211 = vector.extract_strided_slice %210 {offsets = [0, 0], sizes = [2, 16], strides = [1, 1]} : vector<2x32xf32> to vector<2x16xf32>
    %212 = vector.extract_strided_slice %210 {offsets = [0, 16], sizes = [2, 16], strides = [1, 1]} : vector<2x32xf32> to vector<2x16xf32>
    %213 = vector.extract_strided_slice %199 {offsets = [0, 32], sizes = [2, 16], strides = [1, 1]} : vector<2x48xf32> to vector<2x16xf32>
    %214 = vector.extract_strided_slice %202 {offsets = [0, 32], sizes = [2, 16], strides = [1, 1]} : vector<2x48xf32> to vector<2x16xf32>
    %215 = arith.mulf %211, %214 : vector<2x16xf32>
    %216 = arith.addf %213, %215 : vector<2x16xf32>
    %217 = math.tanh %216 : vector<2x16xf32>
    %cst_54 = arith.constant 1.000000e+00 : f32
    %218 = vector.broadcast %cst_54 : f32 to vector<2x16xf32>
    %219 = arith.subf %218, %212 : vector<2x16xf32>
    %220 = arith.mulf %219, %217 : vector<2x16xf32>
    %221 = arith.mulf %212, %197 : vector<2x16xf32>
    %222 = arith.addf %220, %221 : vector<2x16xf32>
    %223 = vector.extract_strided_slice %95 {offsets = [0, 5, 0], sizes = [2, 1, 48], strides = [1, 1, 1]} : vector<2x8x48xf32> to vector<2x1x48xf32>
    %224 = vector.shape_cast %223 : vector<2x1x48xf32> to vector<2x48xf32>
    %cst_55 = arith.constant dense<0.000000e+00> : vector<2x48xf32>
    %225 = tpu.matmul %222, %96, %cst_55 {dimension_numbers = #tpu.dot_dimension_numbers<[1], [0], [0], [1], [0, 0, 1, 1], [], []>} : vector<2x16xf32>, vector<16x48xf32>, vector<2x48xf32> -> vector<2x48xf32>
    %226 = vector.broadcast %97 : vector<1x48xf32> to vector<2x48xf32>
    %227 = arith.addf %225, %226 : vector<2x48xf32>
    %228 = vector.extract_strided_slice %224 {offsets = [0, 0], sizes = [2, 32], strides = [1, 1]} : vector<2x48xf32> to vector<2x32xf32>
    %229 = vector.extract_strided_slice %227 {offsets = [0, 0], sizes = [2, 32], strides = [1, 1]} : vector<2x48xf32> to vector<2x32xf32>
    %230 = arith.addf %228, %229 : vector<2x32xf32>
    %231 = arith.negf %230 : vector<2x32xf32>
    %232 = math.exp %231 : vector<2x32xf32>
    %cst_56 = arith.constant 1.000000e+00 : f32
    %233 = vector.broadcast %cst_56 : f32 to vector<2x32xf32>
    %234 = arith.addf %233, %232 : vector<2x32xf32>
    %235 = arith.divf %233, %234 : vector<2x32xf32>
    %236 = vector.extract_strided_slice %235 {offsets = [0, 0], sizes = [2, 16], strides = [1, 1]} : vector<2x32xf32> to vector<2x16xf32>
    %237 = vector.extract_strided_slice %235 {offsets = [0, 16], sizes = [2, 16], strides = [1, 1]} : vector<2x32xf32> to vector<2x16xf32>
    %238 = vector.extract_strided_slice %224 {offsets = [0, 32], sizes = [2, 16], strides = [1, 1]} : vector<2x48xf32> to vector<2x16xf32>
    %239 = vector.extract_strided_slice %227 {offsets = [0, 32], sizes = [2, 16], strides = [1, 1]} : vector<2x48xf32> to vector<2x16xf32>
    %240 = arith.mulf %236, %239 : vector<2x16xf32>
    %241 = arith.addf %238, %240 : vector<2x16xf32>
    %242 = math.tanh %241 : vector<2x16xf32>
    %cst_57 = arith.constant 1.000000e+00 : f32
    %243 = vector.broadcast %cst_57 : f32 to vector<2x16xf32>
    %244 = arith.subf %243, %237 : vector<2x16xf32>
    %245 = arith.mulf %244, %242 : vector<2x16xf32>
    %246 = arith.mulf %237, %222 : vector<2x16xf32>
    %247 = arith.addf %245, %246 : vector<2x16xf32>
    %248 = vector.extract_strided_slice %95 {offsets = [0, 6, 0], sizes = [2, 1, 48], strides = [1, 1, 1]} : vector<2x8x48xf32> to vector<2x1x48xf32>
    %249 = vector.shape_cast %248 : vector<2x1x48xf32> to vector<2x48xf32>
    %cst_58 = arith.constant dense<0.000000e+00> : vector<2x48xf32>
    %250 = tpu.matmul %247, %96, %cst_58 {dimension_numbers = #tpu.dot_dimension_numbers<[1], [0], [0], [1], [0, 0, 1, 1], [], []>} : vector<2x16xf32>, vector<16x48xf32>, vector<2x48xf32> -> vector<2x48xf32>
    %251 = vector.broadcast %97 : vector<1x48xf32> to vector<2x48xf32>
    %252 = arith.addf %250, %251 : vector<2x48xf32>
    %253 = vector.extract_strided_slice %249 {offsets = [0, 0], sizes = [2, 32], strides = [1, 1]} : vector<2x48xf32> to vector<2x32xf32>
    %254 = vector.extract_strided_slice %252 {offsets = [0, 0], sizes = [2, 32], strides = [1, 1]} : vector<2x48xf32> to vector<2x32xf32>
    %255 = arith.addf %253, %254 : vector<2x32xf32>
    %256 = arith.negf %255 : vector<2x32xf32>
    %257 = math.exp %256 : vector<2x32xf32>
    %cst_59 = arith.constant 1.000000e+00 : f32
    %258 = vector.broadcast %cst_59 : f32 to vector<2x32xf32>
    %259 = arith.addf %258, %257 : vector<2x32xf32>
    %260 = arith.divf %258, %259 : vector<2x32xf32>
    %261 = vector.extract_strided_slice %260 {offsets = [0, 0], sizes = [2, 16], strides = [1, 1]} : vector<2x32xf32> to vector<2x16xf32>
    %262 = vector.extract_strided_slice %260 {offsets = [0, 16], sizes = [2, 16], strides = [1, 1]} : vector<2x32xf32> to vector<2x16xf32>
    %263 = vector.extract_strided_slice %249 {offsets = [0, 32], sizes = [2, 16], strides = [1, 1]} : vector<2x48xf32> to vector<2x16xf32>
    %264 = vector.extract_strided_slice %252 {offsets = [0, 32], sizes = [2, 16], strides = [1, 1]} : vector<2x48xf32> to vector<2x16xf32>
    %265 = arith.mulf %261, %264 : vector<2x16xf32>
    %266 = arith.addf %263, %265 : vector<2x16xf32>
    %267 = math.tanh %266 : vector<2x16xf32>
    %cst_60 = arith.constant 1.000000e+00 : f32
    %268 = vector.broadcast %cst_60 : f32 to vector<2x16xf32>
    %269 = arith.subf %268, %262 : vector<2x16xf32>
    %270 = arith.mulf %269, %267 : vector<2x16xf32>
    %271 = arith.mulf %262, %247 : vector<2x16xf32>
    %272 = arith.addf %270, %271 : vector<2x16xf32>
    %273 = vector.extract_strided_slice %95 {offsets = [0, 7, 0], sizes = [2, 1, 48], strides = [1, 1, 1]} : vector<2x8x48xf32> to vector<2x1x48xf32>
    %274 = vector.shape_cast %273 : vector<2x1x48xf32> to vector<2x48xf32>
    %cst_61 = arith.constant dense<0.000000e+00> : vector<2x48xf32>
    %275 = tpu.matmul %272, %96, %cst_61 {dimension_numbers = #tpu.dot_dimension_numbers<[1], [0], [0], [1], [0, 0, 1, 1], [], []>} : vector<2x16xf32>, vector<16x48xf32>, vector<2x48xf32> -> vector<2x48xf32>
    %276 = vector.broadcast %97 : vector<1x48xf32> to vector<2x48xf32>
    %277 = arith.addf %275, %276 : vector<2x48xf32>
    %278 = vector.extract_strided_slice %274 {offsets = [0, 0], sizes = [2, 32], strides = [1, 1]} : vector<2x48xf32> to vector<2x32xf32>
    %279 = vector.extract_strided_slice %277 {offsets = [0, 0], sizes = [2, 32], strides = [1, 1]} : vector<2x48xf32> to vector<2x32xf32>
    %280 = arith.addf %278, %279 : vector<2x32xf32>
    %281 = arith.negf %280 : vector<2x32xf32>
    %282 = math.exp %281 : vector<2x32xf32>
    %cst_62 = arith.constant 1.000000e+00 : f32
    %283 = vector.broadcast %cst_62 : f32 to vector<2x32xf32>
    %284 = arith.addf %283, %282 : vector<2x32xf32>
    %285 = arith.divf %283, %284 : vector<2x32xf32>
    %286 = vector.extract_strided_slice %285 {offsets = [0, 0], sizes = [2, 16], strides = [1, 1]} : vector<2x32xf32> to vector<2x16xf32>
    %287 = vector.extract_strided_slice %285 {offsets = [0, 16], sizes = [2, 16], strides = [1, 1]} : vector<2x32xf32> to vector<2x16xf32>
    %288 = vector.extract_strided_slice %274 {offsets = [0, 32], sizes = [2, 16], strides = [1, 1]} : vector<2x48xf32> to vector<2x16xf32>
    %289 = vector.extract_strided_slice %277 {offsets = [0, 32], sizes = [2, 16], strides = [1, 1]} : vector<2x48xf32> to vector<2x16xf32>
    %290 = arith.mulf %286, %289 : vector<2x16xf32>
    %291 = arith.addf %288, %290 : vector<2x16xf32>
    %292 = math.tanh %291 : vector<2x16xf32>
    %cst_63 = arith.constant 1.000000e+00 : f32
    %293 = vector.broadcast %cst_63 : f32 to vector<2x16xf32>
    %294 = arith.subf %293, %287 : vector<2x16xf32>
    %295 = arith.mulf %294, %292 : vector<2x16xf32>
    %296 = arith.mulf %287, %272 : vector<2x16xf32>
    %297 = arith.addf %295, %296 : vector<2x16xf32>
    %298 = tpu.concatenate %122, %147, %172, %197, %222, %247, %272, %297 in 1 : vector<2x16xf32>, vector<2x16xf32>, vector<2x16xf32>, vector<2x16xf32>, vector<2x16xf32>, vector<2x16xf32>, vector<2x16xf32>, vector<2x16xf32> -> vector<2x128xf32>
    %c0_64 = arith.constant 0 : index
    %c0_65 = arith.constant 0 : index
    %299 = vector.load %arg14[%c0_64, %c0_65] : memref<2x128xf32, #tpu.memory_space<vmem>>, vector<2x128xf32>
    tpu.vector_store %arg14[%c0_64, %c0_65], %298 {strides = array<i32>} : memref<2x128xf32, #tpu.memory_space<vmem>>, vector<2x128xf32>,
    return
  }
  func.func @transform_0(%arg0: i32) -> (i32, i32) {
    %c0_i32 = arith.constant 0 : i32
    %c0_i32_0 = arith.constant 0 : i32
    return %arg0, %c0_i32 : i32, i32
  }
  func.func @transform_1(%arg0: i32) -> (i32, i32) {
    %c0_i32 = arith.constant 0 : i32
    %c0_i32_0 = arith.constant 0 : i32
    return %arg0, %c0_i32 : i32, i32
  }
  func.func @transform_2(%arg0: i32) -> (i32, i32) {
    %c0_i32 = arith.constant 0 : i32
    %c0_i32_0 = arith.constant 0 : i32
    return %arg0, %c0_i32 : i32, i32
  }
  func.func @transform_3(%arg0: i32) -> (i32, i32) {
    %c0_i32 = arith.constant 0 : i32
    %c0_i32_0 = arith.constant 0 : i32
    return %arg0, %c0_i32 : i32, i32
  }
  func.func @transform_4(%arg0: i32) -> (i32, i32) {
    %c0_i32 = arith.constant 0 : i32
    %c0_i32_0 = arith.constant 0 : i32
    return %arg0, %c0_i32 : i32, i32
  }
  func.func @transform_5(%arg0: i32) -> (i32, i32) {
    %c0_i32 = arith.constant 0 : i32
    %c0_i32_0 = arith.constant 0 : i32
    %c0_i32_1 = arith.constant 0 : i32
    return %c0_i32, %c0_i32_0 : i32, i32
  }
  func.func @transform_6(%arg0: i32) -> (i32, i32) {
    %c0_i32 = arith.constant 0 : i32
    %c0_i32_0 = arith.constant 0 : i32
    %c0_i32_1 = arith.constant 0 : i32
    return %c0_i32, %c0_i32_0 : i32, i32
  }
  func.func @transform_7(%arg0: i32) -> (i32, i32) {
    %c0_i32 = arith.constant 0 : i32
    %c0_i32_0 = arith.constant 0 : i32
    %c0_i32_1 = arith.constant 0 : i32
    return %c0_i32, %c0_i32_0 : i32, i32
  }
  func.func @transform_8(%arg0: i32) -> (i32, i32) {
    %c0_i32 = arith.constant 0 : i32
    %c0_i32_0 = arith.constant 0 : i32
    %c0_i32_1 = arith.constant 0 : i32
    return %c0_i32, %c0_i32_0 : i32, i32
  }
  func.func @transform_9(%arg0: i32) -> (i32, i32) {
    %c0_i32 = arith.constant 0 : i32
    %c0_i32_0 = arith.constant 0 : i32
    %c0_i32_1 = arith.constant 0 : i32
    return %c0_i32, %c0_i32_0 : i32, i32
  }
  func.func @transform_10(%arg0: i32) -> (i32, i32) {
    %c0_i32 = arith.constant 0 : i32
    %c0_i32_0 = arith.constant 0 : i32
    %c0_i32_1 = arith.constant 0 : i32
    return %c0_i32, %c0_i32_0 : i32, i32
  }
  func.func @transform_11(%arg0: i32) -> (i32, i32) {
    %c0_i32 = arith.constant 0 : i32
    %c0_i32_0 = arith.constant 0 : i32
    %c0_i32_1 = arith.constant 0 : i32
    return %c0_i32, %c0_i32_0 : i32, i32
  }
  func.func @transform_12(%arg0: i32) -> (i32, i32) {
    %c0_i32 = arith.constant 0 : i32
    %c0_i32_0 = arith.constant 0 : i32
    %c0_i32_1 = arith.constant 0 : i32
    return %c0_i32, %c0_i32_0 : i32, i32
  }
  func.func @transform_13(%arg0: i32) -> (i32, i32) {
    %c0_i32 = arith.constant 0 : i32
    %c0_i32_0 = arith.constant 0 : i32
    return %arg0, %c0_i32 : i32, i32
  }
}

</mosaic_0001>

<llo_original>
// kernel: tpu_custom_call.1
$region0: #{tpu_custom_call.1}
  #allocation0 [shape = 'u32[]', space=smem, size = 0x4, offset = 0x4, fixed_abs, tag = 'smem constant byte address 0x4 - core index']
  #allocation1 [shape = 'u32[144,128]{1,0:T(1,128)}', space=vmem, size = 0x12000, scoped, tag = 'internal scratch']
  %s0 = inlined_call_operand.hbm [shape: f32[2,8], index: 0, kind: input, shape index: {}]
  %s1 = inlined_call_operand.hbm [shape: f32[2,16], index: 1, kind: input, shape index: {}]
  %s2 = inlined_call_operand.hbm [shape: f32[2,16], index: 2, kind: input, shape index: {}]
  %s3 = inlined_call_operand.hbm [shape: s32[2,16], index: 3, kind: input, shape index: {}]
  %s4 = inlined_call_operand.hbm [shape: f32[2,16], index: 4, kind: input, shape index: {}]
  %s5 = inlined_call_operand.hbm [shape: f32[1,16], index: 5, kind: input, shape index: {}]
  %s6 = inlined_call_operand.hbm [shape: f32[1,16], index: 6, kind: input, shape index: {}]
  %s7 = inlined_call_operand.hbm [shape: f32[16,32], index: 7, kind: input, shape index: {}]
  %s8 = inlined_call_operand.hbm [shape: f32[1,32], index: 8, kind: input, shape index: {}]
  %s9 = inlined_call_operand.vmem [shape: f32[4,48], index: 9, kind: input, shape index: {}]
  %s10 = inlined_call_operand.hbm [shape: f32[1,48], index: 10, kind: input, shape index: {}]
  %s11 = inlined_call_operand.vmem [shape: f32[16,48], index: 11, kind: input, shape index: {}]
  %s12 = inlined_call_operand.vmem [shape: f32[1,48], index: 12, kind: input, shape index: {}]
  %s13 = inlined_call_operand.hbm [shape: f32[2,128], index: 13, kind: output, shape index: {}]
  %s14 = sld [smem:[#allocation0]]
  $region102: #{tpu_custom_call.1} parent=0
    _
  %s16 = ssub.s32 1, %s14
  %s17 = scalar_select 0, %s16, %s14
  $region1: #{tpu_custom_call.1} parent=0
    #allocation2 [shape = 'u8[1024]{0}', space=vmem, size = 0x400, scoped, tag = 'input window, operand 0, single buffered']
    #allocation3 [shape = 's32[1]{0}', space=sflag, size = 0x4, scoped, tag = 'scoped memory for tpu_custom_call.1']
    #allocation4 [shape = 's32[1]{0}', space=sflag, size = 0x4, scoped, tag = 'scoped memory for tpu_custom_call.1']
    #allocation5 [shape = 'u8[1024]{0}', space=vmem, size = 0x400, scoped, tag = 'input window, operand 1, single buffered']
    #allocation6 [shape = 's32[1]{0}', space=sflag, size = 0x4, scoped, tag = 'scoped memory for tpu_custom_call.1']
    #allocation7 [shape = 'u8[1024]{0}', space=vmem, size = 0x400, scoped, tag = 'input window, operand 2, single buffered']
    #allocation8 [shape = 'u8[1024]{0}', space=vmem, size = 0x400, scoped, tag = 'input window, operand 3, single buffered']
    #allocation9 [shape = 's32[1]{0}', space=sflag, size = 0x4, scoped, tag = 'scoped memory for tpu_custom_call.1']
    #allocation10 [shape = 'u8[1024]{0}', space=vmem, size = 0x400, scoped, tag = 'input window, operand 4, single buffered']
    #allocation11 [shape = 'u8[512]{0}', space=vmem, size = 0x400, scoped, tag = 'input window, operand 5, single buffered']
    #allocation12 [shape = 's32[1]{0}', space=sflag, size = 0x4, scoped, tag = 'scoped memory for tpu_custom_call.1']
    #allocation13 [shape = 'u8[512]{0}', space=vmem, size = 0x400, scoped, tag = 'input window, operand 6, single buffered']
    #allocation14 [shape = 'u8[8192]{0}', space=vmem, size = 0x2000, scoped, tag = 'input window, operand 7, single buffered']
    #allocation15 [shape = 's32[1]{0}', space=sflag, size = 0x4, scoped, tag = 'scoped memory for tpu_custom_call.1']
    #allocation16 [shape = 'u8[512]{0}', space=vmem, size = 0x400, scoped, tag = 'input window, operand 8, single buffered']
    #allocation17 [shape = 'u8[512]{0}', space=vmem, size = 0x400, scoped, tag = 'input window, operand 10, single buffered']
    #allocation18 [shape = 's32[1]{0}', space=sflag, size = 0x4, scoped, tag = 'scoped memory for tpu_custom_call.1']
    #allocation19 [shape = 'u8[1024]{0}', space=vmem, size = 0x400, scoped, tag = 'output window, operand 0, single buffered']
    %18 = vsyncpa [#allocation3], 0
    %19 = vsyncpa [#allocation6], 0
    %20 = vsyncpa [#allocation9], 0
    %21 = vsyncpa [#allocation12], 0
    %22 = vsyncpa [#allocation15], 0
    %23 = vsyncpa [#allocation18], 0
    %24 = vsyncpa [#allocation4], 0
    // Predicated region
    $region2: #{tpu_custom_call.1} parent=1 // pred_check
      _
    $region3: #{tpu_custom_call.1} parent=1 // pred_check_branch
      %26 = sbr.rel (0) target = $region5
    $region4: #{tpu_custom_call.1} parent=1 // pred_region
      %s28 = ssub.s32 32, 32
      %29 = vsyncadd [#allocation3], %s28
      %s31 = sshll.u32 [#allocation2], 4
      %s32 = int_to_ptr.vmem [resolvable:$true] %s31
      %34 = dma.hbm_to_vmem [thread:$0]  %s0, 32, %s32, [#allocation3]
    $region5: #{tpu_custom_call.1} parent=1 // pred_fallthru
      _
    // Predicated region
    $region6: #{tpu_custom_call.1} parent=1 // pred_check
      _
    $region7: #{tpu_custom_call.1} parent=1 // pred_check_branch
      %36 = sbr.rel (0) target = $region9
    $region8: #{tpu_custom_call.1} parent=1 // pred_region
      %s38 = ssub.s32 32, 32
      %39 = vsyncadd [#allocation6], %s38
      %s41 = sshll.u32 [#allocation5], 4
      %s42 = int_to_ptr.vmem [resolvable:$true] %s41
      %44 = dma.hbm_to_vmem [thread:$0]  %s1, 32, %s42, [#allocation6]
    $region9: #{tpu_custom_call.1} parent=1 // pred_fallthru
      _
    // Predicated region
    $region10: #{tpu_custom_call.1} parent=1 // pred_check
      _
    $region11: #{tpu_custom_call.1} parent=1 // pred_check_branch
      %46 = sbr.rel (0) target = $region13
    $region12: #{tpu_custom_call.1} parent=1 // pred_region
      %s48 = ssub.s32 32, 32
      %49 = vsyncadd [#allocation6], %s48
      %s51 = sshll.u32 [#allocation7], 4
      %s52 = int_to_ptr.vmem [resolvable:$true] %s51
      %54 = dma.hbm_to_vmem [thread:$0]  %s2, 32, %s52, [#allocation6]
    $region13: #{tpu_custom_call.1} parent=1 // pred_fallthru
      _
    // Predicated region
    $region14: #{tpu_custom_call.1} parent=1 // pred_check
      _
    $region15: #{tpu_custom_call.1} parent=1 // pred_check_branch
      %56 = sbr.rel (0) target = $region17
    $region16: #{tpu_custom_call.1} parent=1 // pred_region
      %s58 = ssub.s32 32, 32
      %59 = vsyncadd [#allocation9], %s58
      %s61 = sshll.u32 [#allocation8], 4
      %s62 = int_to_ptr.vmem [resolvable:$true] %s61
      %64 = dma.hbm_to_vmem [thread:$0]  %s3, 32, %s62, [#allocation9]
    $region17: #{tpu_custom_call.1} parent=1 // pred_fallthru
      _
    // Predicated region
    $region18: #{tpu_custom_call.1} parent=1 // pred_check
      _
    $region19: #{tpu_custom_call.1} parent=1 // pred_check_branch
      %66 = sbr.rel (0) target = $region21
    $region20: #{tpu_custom_call.1} parent=1 // pred_region
      %s68 = ssub.s32 32, 32
      %69 = vsyncadd [#allocation9], %s68
      %s71 = sshll.u32 [#allocation10], 4
      %s72 = int_to_ptr.vmem [resolvable:$true] %s71
      %74 = dma.hbm_to_vmem [thread:$0]  %s4, 32, %s72, [#allocation9]
    $region21: #{tpu_custom_call.1} parent=1 // pred_fallthru
      _
    // Predicated region
    $region22: #{tpu_custom_call.1} parent=1 // pred_check
      _
    $region23: #{tpu_custom_call.1} parent=1 // pred_check_branch
      %76 = sbr.rel (0) target = $region25
    $region24: #{tpu_custom_call.1} parent=1 // pred_region
      %s78 = ssub.s32 16, 16
      %79 = vsyncadd [#allocation12], %s78
      %s81 = sshll.u32 [#allocation11], 4
      %s82 = int_to_ptr.vmem [resolvable:$true] %s81
      %84 = dma.hbm_to_vmem [thread:$0]  %s5, 16, %s82, [#allocation12]
    $region25: #{tpu_custom_call.1} parent=1 // pred_fallthru
      _
    // Predicated region
    $region26: #{tpu_custom_call.1} parent=1 // pred_check
      _
    $region27: #{tpu_custom_call.1} parent=1 // pred_check_branch
      %86 = sbr.rel (0) target = $region29
    $region28: #{tpu_custom_call.1} parent=1 // pred_region
      %s88 = ssub.s32 16, 16
      %89 = vsyncadd [#allocation12], %s88
      %s91 = sshll.u32 [#allocation13], 4
      %s92 = int_to_ptr.vmem [resolvable:$true] %s91
      %94 = dma.hbm_to_vmem [thread:$0]  %s6, 16, %s92, [#allocation12]
    $region29: #{tpu_custom_call.1} parent=1 // pred_fallthru
      _
    // Predicated region
    $region30: #{tpu_custom_call.1} parent=1 // pred_check
      _
    $region31: #{tpu_custom_call.1} parent=1 // pred_check_branch
      %96 = sbr.rel (0) target = $region33
    $region32: #{tpu_custom_call.1} parent=1 // pred_region
      %s98 = ssub.s32 256, 256
      %99 = vsyncadd [#allocation15], %s98
      %s100 = sshll.u32 [#allocation14], 4
      %s101 = int_to_ptr.vmem [resolvable:$true] %s100
      %106 = dma.hbm_to_vmem [thread:$0]  %s7, 256, %s101, [#allocation15], 128, 128, 8
    $region33: #{tpu_custom_call.1} parent=1 // pred_fallthru
      _
    // Predicated region
    $region34: #{tpu_custom_call.1} parent=1 // pred_check
      _
    $region35: #{tpu_custom_call.1} parent=1 // pred_check_branch
      %108 = sbr.rel (0) target = $region37
    $region36: #{tpu_custom_call.1} parent=1 // pred_region
      %s110 = ssub.s32 16, 16
      %111 = vsyncadd [#allocation15], %s110
      %s113 = sshll.u32 [#allocation16], 4
      %s114 = int_to_ptr.vmem [resolvable:$true] %s113
      %116 = dma.hbm_to_vmem [thread:$0]  %s8, 16, %s114, [#allocation15]
    $region37: #{tpu_custom_call.1} parent=1 // pred_fallthru
      _
    // Predicated region
    $region38: #{tpu_custom_call.1} parent=1 // pred_check
      _
    $region39: #{tpu_custom_call.1} parent=1 // pred_check_branch
      %118 = sbr.rel (0) target = $region41
    $region40: #{tpu_custom_call.1} parent=1 // pred_region
      _
    $region41: #{tpu_custom_call.1} parent=1 // pred_fallthru
      _
    // Predicated region
    $region42: #{tpu_custom_call.1} parent=1 // pred_check
      _
    $region43: #{tpu_custom_call.1} parent=1 // pred_check_branch
      %120 = sbr.rel (0) target = $region45
    $region44: #{tpu_custom_call.1} parent=1 // pred_region
      %s122 = ssub.s32 16, 16
      %123 = vsyncadd [#allocation18], %s122
      %s125 = sshll.u32 [#allocation17], 4
      %s126 = int_to_ptr.vmem [resolvable:$true] %s125
      %128 = dma.hbm_to_vmem [thread:$0]  %s10, 16, %s126, [#allocation18]
    $region45: #{tpu_custom_call.1} parent=1 // pred_fallthru
      _
    // Predicated region
    $region46: #{tpu_custom_call.1} parent=1 // pred_check
      _
    $region47: #{tpu_custom_call.1} parent=1 // pred_check_branch
      %130 = sbr.rel (0) target = $region49
    $region48: #{tpu_custom_call.1} parent=1 // pred_region
      _
    $region49: #{tpu_custom_call.1} parent=1 // pred_fallthru
      _
    // Predicated region
    $region50: #{tpu_custom_call.1} parent=1 // pred_check
      _
    $region51: #{tpu_custom_call.1} parent=1 // pred_check_branch
      %132 = sbr.rel (0) target = $region53
    $region52: #{tpu_custom_call.1} parent=1 // pred_region
      _
    $region53: #{tpu_custom_call.1} parent=1 // pred_fallthru
      _
    // Predicated region
    $region54: #{tpu_custom_call.1} parent=1 // pred_check
      _
    $region55: #{tpu_custom_call.1} parent=1 // pred_check_branch
      %134 = sbr.rel (0) target = $region57
    $region56: #{tpu_custom_call.1} parent=1 // pred_region
      %135 = dma.done [#allocation3], 32
    $region57: #{tpu_custom_call.1} parent=1 // pred_fallthru
      _
    // Predicated region
    $region58: #{tpu_custom_call.1} parent=1 // pred_check
      _
    $region59: #{tpu_custom_call.1} parent=1 // pred_check_branch
      %137 = sbr.rel (0) target = $region61
    $region60: #{tpu_custom_call.1} parent=1 // pred_region
      %138 = dma.done [#allocation6], 32
    $region61: #{tpu_custom_call.1} parent=1 // pred_fallthru
      _
    // Predicated region
    $region62: #{tpu_custom_call.1} parent=1 // pred_check
      _
    $region63: #{tpu_custom_call.1} parent=1 // pred_check_branch
      %140 = sbr.rel (0) target = $region65
    $region64: #{tpu_custom_call.1} parent=1 // pred_region
      %141 = dma.done [#allocation6], 32
    $region65: #{tpu_custom_call.1} parent=1 // pred_fallthru
      _
    // Predicated region
    $region66: #{tpu_custom_call.1} parent=1 // pred_check
      _
    $region67: #{tpu_custom_call.1} parent=1 // pred_check_branch
      %143 = sbr.rel (0) target = $region69
    $region68: #{tpu_custom_call.1} parent=1 // pred_region
      %144 = dma.done [#allocation9], 32
    $region69: #{tpu_custom_call.1} parent=1 // pred_fallthru
      _
    // Predicated region
    $region70: #{tpu_custom_call.1} parent=1 // pred_check
      _
    $region71: #{tpu_custom_call.1} parent=1 // pred_check_branch
      %146 = sbr.rel (0) target = $region73
    $region72: #{tpu_custom_call.1} parent=1 // pred_region
      %147 = dma.done [#allocation9], 32
    $region73: #{tpu_custom_call.1} parent=1 // pred_fallthru
      _
    // Predicated region
    $region74: #{tpu_custom_call.1} parent=1 // pred_check
      _
    $region75: #{tpu_custom_call.1} parent=1 // pred_check_branch
      %149 = sbr.rel (0) target = $region77
    $region76: #{tpu_custom_call.1} parent=1 // pred_region
      %150 = dma.done [#allocation12], 16
    $region77: #{tpu_custom_call.1} parent=1 // pred_fallthru
      _
    // Predicated region
    $region78: #{tpu_custom_call.1} parent=1 // pred_check
      _
    $region79: #{tpu_custom_call.1} parent=1 // pred_check_branch
      %152 = sbr.rel (0) target = $region81
    $region80: #{tpu_custom_call.1} parent=1 // pred_region
      %153 = dma.done [#allocation12], 16
    $region81: #{tpu_custom_call.1} parent=1 // pred_fallthru
      _
    // Predicated region
    $region82: #{tpu_custom_call.1} parent=1 // pred_check
      _
    $region83: #{tpu_custom_call.1} parent=1 // pred_check_branch
      %155 = sbr.rel (0) target = $region85
    $region84: #{tpu_custom_call.1} parent=1 // pred_region
      %156 = dma.done [#allocation15], 256
    $region85: #{tpu_custom_call.1} parent=1 // pred_fallthru
      _
    // Predicated region
    $region86: #{tpu_custom_call.1} parent=1 // pred_check
      _
    $region87: #{tpu_custom_call.1} parent=1 // pred_check_branch
      %158 = sbr.rel (0) target = $region89
    $region88: #{tpu_custom_call.1} parent=1 // pred_region
      %159 = dma.done [#allocation15], 16
    $region89: #{tpu_custom_call.1} parent=1 // pred_fallthru
      _
    // Predicated region
    $region90: #{tpu_custom_call.1} parent=1 // pred_check
      _
    $region91: #{tpu_custom_call.1} parent=1 // pred_check_branch
      %161 = sbr.rel (0) target = $region93
    $region92: #{tpu_custom_call.1} parent=1 // pred_region
      %162 = dma.done [#allocation18], 16
    $region93: #{tpu_custom_call.1} parent=1 // pred_fallthru
      _
    %v163 = vld [vmem:[#allocation2] sm:$0x3]
    %v164 = vld [vmem:[#allocation5] sm:$0x3]
    %v165 = vld [vmem:[#allocation7] sm:$0x3]
    %v166 = vld [vmem:[#allocation8] sm:$0x3]
    %v167 = vld [vmem:[#allocation10] sm:$0x3]
    %169 = vrot.lane.b32.xlu0 %v164, 8
    %v170 = vpop.permute.xlu0 %169
    %vm172 = vcmask 64512
    %v173 = vsel %vm172, %v163, %v170
    %v174 = vld [vmem:[#allocation11] sm:$0x1]
    %v175 = vld [vmem:[#allocation13] sm:$0x1]
    %v176 = vlaneseq
    %v177 = vshrl.u32 %v176, 7
    %v178 = vsub.s32 0, %v177
    %v179 = vrot.slane %v173, %v178
    %181 = vbcast.lane.b32.xlu0 %v179, 256
    %v182 = vpop.permute.xlu0 %181
    %s184 = sor.u32 256, 8
    %185 = vbcast.lane.b32.xlu0 %v179, %s184
    %v186 = vpop.permute.xlu0 %185
    %s188 = sor.u32 256, 16
    %189 = vbcast.lane.b32.xlu0 %v179, %s188
    %v190 = vpop.permute.xlu0 %189
    %v191 = vlaneseq
    %v192 = vshrl.u32 %v191, 7
    %v193 = vsub.s32 1, %v192
    %v194 = vrot.slane %v173, %v193
    %196 = vbcast.lane.b32.xlu0 %v194, 256
    %v197 = vpop.permute.xlu0 %196
    %s199 = sor.u32 256, 8
    %200 = vbcast.lane.b32.xlu0 %v194, %s199
    %v201 = vpop.permute.xlu0 %200
    %s203 = sor.u32 256, 16
    %204 = vbcast.lane.b32.xlu0 %v194, %s203
    %v205 = vpop.permute.xlu0 %204
    %v207 = vlaneseq
    %v208 = vshrl.u32 %v207, 7
    %v209 = vsub.s32 0, %v208
    %v210 = vrot.slane %v174, %v209
    %v212 = vmul.f32 %v182, %v210
    %v213 = vmul.f32 %v186, %v210
    %v214 = vmul.f32 %v190, %v210
    %v215 = vmul.f32 %v197, %v210
    %v216 = vmul.f32 %v201, %v210
    %v217 = vmul.f32 %v205, %v210
    %v219 = vlaneseq
    %v220 = vshrl.u32 %v219, 7
    %v221 = vsub.s32 0, %v220
    %v222 = vrot.slane %v175, %v221
    %v224 = vadd.f32 %v212, %v222
    %v225 = vadd.f32 %v213, %v222
    %v226 = vadd.f32 %v214, %v222
    %v227 = vadd.f32 %v215, %v222
    %v228 = vadd.f32 %v216, %v222
    %v229 = vadd.f32 %v217, %v222
    %v230 = vlaneseq
    %v231 = vand.u32 %v230, 127
    %vm232 = vcmp.eq.s32.totalorder %v231, 0
    %v233 = vand.u32 2147483647, %v224
    %vm234 = vcmp.le.f32.partialorder %v233, 0.7853982
    %vm235 = vcmp.lt.s32.totalorder %v224, 0
    %v236 = vand.u32 %v224, 2139095040
    %v237 = vshrl.u32 %v236, 23
    %v238 = vsub.s32 %v237, 127
    %v239 = vand.u32 2147483647, %v224
    %v240 = vand.u32 %v239, 8388607
    %v241 = vor.u32 %v240, 8388608
    %v242 = vsub.s32 0, %v241
    %v243 = vadd.s32 %v238, 1
    %vm244 = vcmp.gt.s32.totalorder %v243, 0
    %v245 = vsel %vm244, %v243, 0
    %v246 = vshrl.u32 %v245, 5
    %v247 = vand.u32 %v245, 31
    %v248 = vsub.s32 32, %v247
    %v249 = vshrl.u32 683565275, %v248
    %v250 = vshll.u32 683565275, %v247
    %v251 = vshrl.u32 2475754826, %v248
    %v252 = vor.u32 %v250, %v251
    %v253 = vshll.u32 2475754826, %v247
    %v254 = vshrl.u32 2131351028, %v248
    %v255 = vor.u32 %v253, %v254
    %v256 = vshll.u32 2131351028, %v247
    %v257 = vshrl.u32 2102212464, %v248
    %v258 = vor.u32 %v256, %v257
    %v259 = vshll.u32 2102212464, %v247
    %v260 = vshrl.u32 920167782, %v248
    %v261 = vor.u32 %v259, %v260
    %v262 = vshll.u32 920167782, %v247
    %v263 = vshrl.u32 1326507024, %v248
    %v264 = vor.u32 %v262, %v263
    %vm265 = vcmp.lt.s32.totalorder %v246, 1
    %vm266 = vcmp.lt.s32.totalorder %v246, 2
    %vm267 = vcmp.lt.s32.totalorder %v246, 3
    %vm268 = vcmp.lt.s32.totalorder %v246, 4
    %v269 = vsel %vm265, %v249, %v252
    %v270 = vsel %vm268, %v258, 2102212464
    %v271 = vsel %vm267, %v255, %v270
    %v272 = vsel %vm266, %v269, %v271
    %v273 = vsel %vm265, %v252, %v255
    %v274 = vsel %vm268, %v261, 920167782
    %v275 = vsel %vm267, %v258, %v274
    %v276 = vsel %vm266, %v273, %v275
    %v277 = vsel %vm265, %v255, %v258
    %v278 = vsel %vm268, %v264, 1326507024
    %v279 = vsel %vm267, %v261, %v278
    %v280 = vsel %vm266, %v277, %v279
    %v281 = vshll.u32 %v241, 8
    %v282 = vmul.u32.u64.compose %v281, %v280
    %v283 = vextract.low.u32 %v282
    %v284 = vextract.high.u32 %v282
    %v285 = vmul.u32.u64.compose %v281, %v276
    %v286 = vextract.low.u32 %v285
    %v287 = vextract.high.u32 %v285
    %v288 = vmul.u32 %v281, %v272
    %v289 = vadd.s32 %v284, %v286
    %vm290 = vc.u32 %v284, %v286
    %v291 = vadd.s32 %v287, 1
    %v292 = vsel %vm290, %v291, %v287
    %v293 = vadd.s32 %v288, %v292
    %v294 = vadd.s32 %v293, 536870912
    %v295 = vshrl.u32 %v294, 30
    %v296 = vshll.u32 %v295, 30
    %v297 = vsub.s32 %v293, %v296
    %vm298 = vcmp.lt.s32.totalorder %v297, 0
    %v299 = vsub.s32 0, %v297
    %v300 = vsel %vm298, %v299, %v297
    %v301 = vclz %v300
    %v302 = vsub.s32 %v301, 2
    %vm303 = vcmp.gt.s32.totalorder 0, %v302
    %v304 = vsel %vm303, 0, %v302
    %v305 = vsub.s32 32, %v304
    %v306 = vshll.u32 %v297, %v304
    %v307 = vshrl.u32 %v289, %v305
    %v308 = vor.u32 %v306, %v307
    %v309 = vsub.s32 4294967266, %v304
    %v310 = vadd.s32 %v309, 127
    %v311 = vshll.u32 %v310, 23
    %v312 = vor.u32 4788187, %v311
    %v313 = vand.u32 2147483647, %v312
    %v315 = vcvt.s32.f32 %v308
    %v316 = vmul.f32 %v315, %v313
    %v317 = vxor.u32 %v316, 2147483648
    %v318 = vsel %vm235, %v317, %v316
    %v319 = vsub.s32 4, %v295
    %v320 = vsel %vm235, %v319, %v295
    %v321 = vsel %vm234, %v224, %v318
    %v322 = vsel %vm234, 0, %v320
    %v323 = vcosq.f32.pop %v321
    %v324 = vsinq.f32.pop %v321
    %vm325 = vweird.f32 %v224
    %v326 = vadd.s32 %v322, 3
    %v327 = vand.u32 %v326, 3
    %vm328 = vcmp.lt.s32.totalorder %v327, 2
    %vm329 = vcmp.eq.s32.totalorder %v327, 0
    %v330 = vxor.u32 %v324, 2147483648
    %v331 = vsel %vm329, %v323, %v330
    %vm332 = vcmp.eq.s32.totalorder %v327, 2
    %v333 = vxor.u32 %v323, 2147483648
    %v334 = vsel %vm332, %v333, %v324
    %v335 = vsel %vm328, %v331, %v334
    %v336 = vsel %vm325, nan, %v335
    %v337 = vand.u32 2147483647, %v225
    %vm338 = vcmp.le.f32.partialorder %v337, 0.7853982
    %vm339 = vcmp.lt.s32.totalorder %v225, 0
    %v340 = vand.u32 %v225, 2139095040
    %v341 = vshrl.u32 %v340, 23
    %v342 = vsub.s32 %v341, 127
    %v343 = vand.u32 2147483647, %v225
    %v344 = vand.u32 %v343, 8388607
    %v345 = vor.u32 %v344, 8388608
    %v346 = vsub.s32 0, %v345
    %v347 = vadd.s32 %v342, 1
    %vm348 = vcmp.gt.s32.totalorder %v347, 0
    %v349 = vsel %vm348, %v347, 0
    %v350 = vshrl.u32 %v349, 5
    %v351 = vand.u32 %v349, 31
    %v352 = vsub.s32 32, %v351
    %v353 = vshrl.u32 683565275, %v352
    %v354 = vshll.u32 683565275, %v351
    %v355 = vshrl.u32 2475754826, %v352
    %v356 = vor.u32 %v354, %v355
    %v357 = vshll.u32 2475754826, %v351
    %v358 = vshrl.u32 2131351028, %v352
    %v359 = vor.u32 %v357, %v358
    %v360 = vshll.u32 2131351028, %v351
    %v361 = vshrl.u32 2102212464, %v352
    %v362 = vor.u32 %v360, %v361
    %v363 = vshll.u32 2102212464, %v351
    %v364 = vshrl.u32 920167782, %v352
    %v365 = vor.u32 %v363, %v364
    %v366 = vshll.u32 920167782, %v351
    %v367 = vshrl.u32 1326507024, %v352
    %v368 = vor.u32 %v366, %v367
    %vm369 = vcmp.lt.s32.totalorder %v350, 1
    %vm370 = vcmp.lt.s32.totalorder %v350, 2
    %vm371 = vcmp.lt.s32.totalorder %v350, 3
    %vm372 = vcmp.lt.s32.totalorder %v350, 4
    %v373 = vsel %vm369, %v353, %v356
    %v374 = vsel %vm372, %v362, 2102212464
    %v375 = vsel %vm371, %v359, %v374
    %v376 = vsel %vm370, %v373, %v375
    %v377 = vsel %vm369, %v356, %v359
    %v378 = vsel %vm372, %v365, 920167782
    %v379 = vsel %vm371, %v362, %v378
    %v380 = vsel %vm370, %v377, %v379
    %v381 = vsel %vm369, %v359, %v362
    %v382 = vsel %vm372, %v368, 1326507024
    %v383 = vsel %vm371, %v365, %v382
    %v384 = vsel %vm370, %v381, %v383
    %v385 = vshll.u32 %v345, 8
    %v386 = vmul.u32.u64.compose %v385, %v384
    %v387 = vextract.low.u32 %v386
    %v388 = vextract.high.u32 %v386
    %v389 = vmul.u32.u64.compose %v385, %v380
    %v390 = vextract.low.u32 %v389
    %v391 = vextract.high.u32 %v389
    %v392 = vmul.u32 %v385, %v376
    %v393 = vadd.s32 %v388, %v390
    %vm394 = vc.u32 %v388, %v390
    %v395 = vadd.s32 %v391, 1
    %v396 = vsel %vm394, %v395, %v391
    %v397 = vadd.s32 %v392, %v396
    %v398 = vadd.s32 %v397, 536870912
    %v399 = vshrl.u32 %v398, 30
    %v400 = vshll.u32 %v399, 30
    %v401 = vsub.s32 %v397, %v400
    %vm402 = vcmp.lt.s32.totalorder %v401, 0
    %v403 = vsub.s32 0, %v401
    %v404 = vsel %vm402, %v403, %v401
    %v405 = vclz %v404
    %v406 = vsub.s32 %v405, 2
    %vm407 = vcmp.gt.s32.totalorder 0, %v406
    %v408 = vsel %vm407, 0, %v406
    %v409 = vsub.s32 32, %v408
    %v410 = vshll.u32 %v401, %v408
    %v411 = vshrl.u32 %v393, %v409
    %v412 = vor.u32 %v410, %v411
    %v413 = vsub.s32 4294967266, %v408
    %v414 = vadd.s32 %v413, 127
    %v415 = vshll.u32 %v414, 23
    %v416 = vor.u32 4788187, %v415
    %v417 = vand.u32 2147483647, %v416
    %v419 = vcvt.s32.f32 %v412
    %v420 = vmul.f32 %v419, %v417
    %v421 = vxor.u32 %v420, 2147483648
    %v422 = vsel %vm339, %v421, %v420
    %v423 = vsub.s32 4, %v399
    %v424 = vsel %vm339, %v423, %v399
    %v425 = vsel %vm338, %v225, %v422
    %v426 = vsel %vm338, 0, %v424
    %v427 = vcosq.f32.pop %v425
    %v428 = vsinq.f32.pop %v425
    %vm429 = vweird.f32 %v225
    %v430 = vadd.s32 %v426, 3
    %v431 = vand.u32 %v430, 3
    %vm432 = vcmp.lt.s32.totalorder %v431, 2
    %vm433 = vcmp.eq.s32.totalorder %v431, 0
    %v434 = vxor.u32 %v428, 2147483648
    %v435 = vsel %vm433, %v427, %v434
    %vm436 = vcmp.eq.s32.totalorder %v431, 2
    %v437 = vxor.u32 %v427, 2147483648
    %v438 = vsel %vm436, %v437, %v428
    %v439 = vsel %vm432, %v435, %v438
    %v440 = vsel %vm429, nan, %v439
    %v441 = vand.u32 2147483647, %v226
    %vm442 = vcmp.le.f32.partialorder %v441, 0.7853982
    %vm443 = vcmp.lt.s32.totalorder %v226, 0
    %v444 = vand.u32 %v226, 2139095040
    %v445 = vshrl.u32 %v444, 23
    %v446 = vsub.s32 %v445, 127
    %v447 = vand.u32 2147483647, %v226
    %v448 = vand.u32 %v447, 8388607
    %v449 = vor.u32 %v448, 8388608
    %v450 = vsub.s32 0, %v449
    %v451 = vadd.s32 %v446, 1
    %vm452 = vcmp.gt.s32.totalorder %v451, 0
    %v453 = vsel %vm452, %v451, 0
    %v454 = vshrl.u32 %v453, 5
    %v455 = vand.u32 %v453, 31
    %v456 = vsub.s32 32, %v455
    %v457 = vshrl.u32 683565275, %v456
    %v458 = vshll.u32 683565275, %v455
    %v459 = vshrl.u32 2475754826, %v456
    %v460 = vor.u32 %v458, %v459
    %v461 = vshll.u32 2475754826, %v455
    %v462 = vshrl.u32 2131351028, %v456
    %v463 = vor.u32 %v461, %v462
    %v464 = vshll.u32 2131351028, %v455
    %v465 = vshrl.u32 2102212464, %v456
    %v466 = vor.u32 %v464, %v465
    %v467 = vshll.u32 2102212464, %v455
    %v468 = vshrl.u32 920167782, %v456
    %v469 = vor.u32 %v467, %v468
    %v470 = vshll.u32 920167782, %v455
    %v471 = vshrl.u32 1326507024, %v456
    %v472 = vor.u32 %v470, %v471
    %vm473 = vcmp.lt.s32.totalorder %v454, 1
    %vm474 = vcmp.lt.s32.totalorder %v454, 2
    %vm475 = vcmp.lt.s32.totalorder %v454, 3
    %vm476 = vcmp.lt.s32.totalorder %v454, 4
    %v477 = vsel %vm473, %v457, %v460
    %v478 = vsel %vm476, %v466, 2102212464
    %v479 = vsel %vm475, %v463, %v478
    %v480 = vsel %vm474, %v477, %v479
    %v481 = vsel %vm473, %v460, %v463
    %v482 = vsel %vm476, %v469, 920167782
    %v483 = vsel %vm475, %v466, %v482
    %v484 = vsel %vm474, %v481, %v483
    %v485 = vsel %vm473, %v463, %v466
    %v486 = vsel %vm476, %v472, 1326507024
    %v487 = vsel %vm475, %v469, %v486
    %v488 = vsel %vm474, %v485, %v487
    %v489 = vshll.u32 %v449, 8
    %v490 = vmul.u32.u64.compose %v489, %v488
    %v491 = vextract.low.u32 %v490
    %v492 = vextract.high.u32 %v490
    %v493 = vmul.u32.u64.compose %v489, %v484
    %v494 = vextract.low.u32 %v493
    %v495 = vextract.high.u32 %v493
    %v496 = vmul.u32 %v489, %v480
    %v497 = vadd.s32 %v492, %v494
    %vm498 = vc.u32 %v492, %v494
    %v499 = vadd.s32 %v495, 1
    %v500 = vsel %vm498, %v499, %v495
    %v501 = vadd.s32 %v496, %v500
    %v502 = vadd.s32 %v501, 536870912
    %v503 = vshrl.u32 %v502, 30
    %v504 = vshll.u32 %v503, 30
    %v505 = vsub.s32 %v501, %v504
    %vm506 = vcmp.lt.s32.totalorder %v505, 0
    %v507 = vsub.s32 0, %v505
    %v508 = vsel %vm506, %v507, %v505
    %v509 = vclz %v508
    %v510 = vsub.s32 %v509, 2
    %vm511 = vcmp.gt.s32.totalorder 0, %v510
    %v512 = vsel %vm511, 0, %v510
    %v513 = vsub.s32 32, %v512
    %v514 = vshll.u32 %v505, %v512
    %v515 = vshrl.u32 %v497, %v513
    %v516 = vor.u32 %v514, %v515
    %v517 = vsub.s32 4294967266, %v512
    %v518 = vadd.s32 %v517, 127
    %v519 = vshll.u32 %v518, 23
    %v520 = vor.u32 4788187, %v519
    %v521 = vand.u32 2147483647, %v520
    %v523 = vcvt.s32.f32 %v516
    %v524 = vmul.f32 %v523, %v521
    %v525 = vxor.u32 %v524, 2147483648
    %v526 = vsel %vm443, %v525, %v524
    %v527 = vsub.s32 4, %v503
    %v528 = vsel %vm443, %v527, %v503
    %v529 = vsel %vm442, %v226, %v526
    %v530 = vsel %vm442, 0, %v528
    %v531 = vcosq.f32.pop %v529
    %v532 = vsinq.f32.pop %v529
    %vm533 = vweird.f32 %v226
    %v534 = vadd.s32 %v530, 3
    %v535 = vand.u32 %v534, 3
    %vm536 = vcmp.lt.s32.totalorder %v535, 2
    %vm537 = vcmp.eq.s32.totalorder %v535, 0
    %v538 = vxor.u32 %v532, 2147483648
    %v539 = vsel %vm537, %v531, %v538
    %vm540 = vcmp.eq.s32.totalorder %v535, 2
    %v541 = vxor.u32 %v531, 2147483648
    %v542 = vsel %vm540, %v541, %v532
    %v543 = vsel %vm536, %v539, %v542
    %v544 = vsel %vm533, nan, %v543
    %v545 = vand.u32 2147483647, %v227
    %vm546 = vcmp.le.f32.partialorder %v545, 0.7853982
    %vm547 = vcmp.lt.s32.totalorder %v227, 0
    %v548 = vand.u32 %v227, 2139095040
    %v549 = vshrl.u32 %v548, 23
    %v550 = vsub.s32 %v549, 127
    %v551 = vand.u32 2147483647, %v227
    %v552 = vand.u32 %v551, 8388607
    %v553 = vor.u32 %v552, 8388608
    %v554 = vsub.s32 0, %v553
    %v555 = vadd.s32 %v550, 1
    %vm556 = vcmp.gt.s32.totalorder %v555, 0
    %v557 = vsel %vm556, %v555, 0
    %v558 = vshrl.u32 %v557, 5
    %v559 = vand.u32 %v557, 31
    %v560 = vsub.s32 32, %v559
    %v561 = vshrl.u32 683565275, %v560
    %v562 = vshll.u32 683565275, %v559
    %v563 = vshrl.u32 2475754826, %v560
    %v564 = vor.u32 %v562, %v563
    %v565 = vshll.u32 2475754826, %v559
    %v566 = vshrl.u32 2131351028, %v560
    %v567 = vor.u32 %v565, %v566
    %v568 = vshll.u32 2131351028, %v559
    %v569 = vshrl.u32 2102212464, %v560
    %v570 = vor.u32 %v568, %v569
    %v571 = vshll.u32 2102212464, %v559
    %v572 = vshrl.u32 920167782, %v560
    %v573 = vor.u32 %v571, %v572
    %v574 = vshll.u32 920167782, %v559
    %v575 = vshrl.u32 1326507024, %v560
    %v576 = vor.u32 %v574, %v575
    %vm577 = vcmp.lt.s32.totalorder %v558, 1
    %vm578 = vcmp.lt.s32.totalorder %v558, 2
    %vm579 = vcmp.lt.s32.totalorder %v558, 3
    %vm580 = vcmp.lt.s32.totalorder %v558, 4
    %v581 = vsel %vm577, %v561, %v564
    %v582 = vsel %vm580, %v570, 2102212464
    %v583 = vsel %vm579, %v567, %v582
    %v584 = vsel %vm578, %v581, %v583
    %v585 = vsel %vm577, %v564, %v567
    %v586 = vsel %vm580, %v573, 920167782
    %v587 = vsel %vm579, %v570, %v586
    %v588 = vsel %vm578, %v585, %v587
    %v589 = vsel %vm577, %v567, %v570
    %v590 = vsel %vm580, %v576, 1326507024
    %v591 = vsel %vm579, %v573, %v590
    %v592 = vsel %vm578, %v589, %v591
    %v593 = vshll.u32 %v553, 8
    %v594 = vmul.u32.u64.compose %v593, %v592
    %v595 = vextract.low.u32 %v594
    %v596 = vextract.high.u32 %v594
    %v597 = vmul.u32.u64.compose %v593, %v588
    %v598 = vextract.low.u32 %v597
    %v599 = vextract.high.u32 %v597
    %v600 = vmul.u32 %v593, %v584
    %v601 = vadd.s32 %v596, %v598
    %vm602 = vc.u32 %v596, %v598
    %v603 = vadd.s32 %v599, 1
    %v604 = vsel %vm602, %v603, %v599
    %v605 = vadd.s32 %v600, %v604
    %v606 = vadd.s32 %v605, 536870912
    %v607 = vshrl.u32 %v606, 30
    %v608 = vshll.u32 %v607, 30
    %v609 = vsub.s32 %v605, %v608
    %vm610 = vcmp.lt.s32.totalorder %v609, 0
    %v611 = vsub.s32 0, %v609
    %v612 = vsel %vm610, %v611, %v609
    %v613 = vclz %v612
    %v614 = vsub.s32 %v613, 2
    %vm615 = vcmp.gt.s32.totalorder 0, %v614
    %v616 = vsel %vm615, 0, %v614
    %v617 = vsub.s32 32, %v616
    %v618 = vshll.u32 %v609, %v616
    %v619 = vshrl.u32 %v601, %v617
    %v620 = vor.u32 %v618, %v619
    %v621 = vsub.s32 4294967266, %v616
    %v622 = vadd.s32 %v621, 127
    %v623 = vshll.u32 %v622, 23
    %v624 = vor.u32 4788187, %v623
    %v625 = vand.u32 2147483647, %v624
    %v627 = vcvt.s32.f32 %v620
    %v628 = vmul.f32 %v627, %v625
    %v629 = vxor.u32 %v628, 2147483648
    %v630 = vsel %vm547, %v629, %v628
    %v631 = vsub.s32 4, %v607
    %v632 = vsel %vm547, %v631, %v607
    %v633 = vsel %vm546, %v227, %v630
    %v634 = vsel %vm546, 0, %v632
    %v635 = vcosq.f32.pop %v633
    %v636 = vsinq.f32.pop %v633
    %vm637 = vweird.f32 %v227
    %v638 = vadd.s32 %v634, 3
    %v639 = vand.u32 %v638, 3
    %vm640 = vcmp.lt.s32.totalorder %v639, 2
    %vm641 = vcmp.eq.s32.totalorder %v639, 0
    %v642 = vxor.u32 %v636, 2147483648
    %v643 = vsel %vm641, %v635, %v642
    %vm644 = vcmp.eq.s32.totalorder %v639, 2
    %v645 = vxor.u32 %v635, 2147483648
    %v646 = vsel %vm644, %v645, %v636
    %v647 = vsel %vm640, %v643, %v646
    %v648 = vsel %vm637, nan, %v647
    %v649 = vand.u32 2147483647, %v228
    %vm650 = vcmp.le.f32.partialorder %v649, 0.7853982
    %vm651 = vcmp.lt.s32.totalorder %v228, 0
    %v652 = vand.u32 %v228, 2139095040
    %v653 = vshrl.u32 %v652, 23
    %v654 = vsub.s32 %v653, 127
    %v655 = vand.u32 2147483647, %v228
    %v656 = vand.u32 %v655, 8388607
    %v657 = vor.u32 %v656, 8388608
    %v658 = vsub.s32 0, %v657
    %v659 = vadd.s32 %v654, 1
    %vm660 = vcmp.gt.s32.totalorder %v659, 0
    %v661 = vsel %vm660, %v659, 0
    %v662 = vshrl.u32 %v661, 5
    %v663 = vand.u32 %v661, 31
    %v664 = vsub.s32 32, %v663
    %v665 = vshrl.u32 683565275, %v664
    %v666 = vshll.u32 683565275, %v663
    %v667 = vshrl.u32 2475754826, %v664
    %v668 = vor.u32 %v666, %v667
    %v669 = vshll.u32 2475754826, %v663
    %v670 = vshrl.u32 2131351028, %v664
    %v671 = vor.u32 %v669, %v670
    %v672 = vshll.u32 2131351028, %v663
    %v673 = vshrl.u32 2102212464, %v664
    %v674 = vor.u32 %v672, %v673
    %v675 = vshll.u32 2102212464, %v663
    %v676 = vshrl.u32 920167782, %v664
    %v677 = vor.u32 %v675, %v676
    %v678 = vshll.u32 920167782, %v663
    %v679 = vshrl.u32 1326507024, %v664
    %v680 = vor.u32 %v678, %v679
    %vm681 = vcmp.lt.s32.totalorder %v662, 1
    %vm682 = vcmp.lt.s32.totalorder %v662, 2
    %vm683 = vcmp.lt.s32.totalorder %v662, 3
    %vm684 = vcmp.lt.s32.totalorder %v662, 4
    %v685 = vsel %vm681, %v665, %v668
    %v686 = vsel %vm684, %v674, 2102212464
    %v687 = vsel %vm683, %v671, %v686
    %v688 = vsel %vm682, %v685, %v687
    %v689 = vsel %vm681, %v668, %v671
    %v690 = vsel %vm684, %v677, 920167782
    %v691 = vsel %vm683, %v674, %v690
    %v692 = vsel %vm682, %v689, %v691
    %v693 = vsel %vm681, %v671, %v674
    %v694 = vsel %vm684, %v680, 1326507024
    %v695 = vsel %vm683, %v677, %v694
    %v696 = vsel %vm682, %v693, %v695
    %v697 = vshll.u32 %v657, 8
    %v698 = vmul.u32.u64.compose %v697, %v696
    %v699 = vextract.low.u32 %v698
    %v700 = vextract.high.u32 %v698
    %v701 = vmul.u32.u64.compose %v697, %v692
    %v702 = vextract.low.u32 %v701
    %v703 = vextract.high.u32 %v701
    %v704 = vmul.u32 %v697, %v688
    %v705 = vadd.s32 %v700, %v702
    %vm706 = vc.u32 %v700, %v702
    %v707 = vadd.s32 %v703, 1
    %v708 = vsel %vm706, %v707, %v703
    %v709 = vadd.s32 %v704, %v708
    %v710 = vadd.s32 %v709, 536870912
    %v711 = vshrl.u32 %v710, 30
    %v712 = vshll.u32 %v711, 30
    %v713 = vsub.s32 %v709, %v712
    %vm714 = vcmp.lt.s32.totalorder %v713, 0
    %v715 = vsub.s32 0, %v713
    %v716 = vsel %vm714, %v715, %v713
    %v717 = vclz %v716
    %v718 = vsub.s32 %v717, 2
    %vm719 = vcmp.gt.s32.totalorder 0, %v718
    %v720 = vsel %vm719, 0, %v718
    %v721 = vsub.s32 32, %v720
    %v722 = vshll.u32 %v713, %v720
    %v723 = vshrl.u32 %v705, %v721
    %v724 = vor.u32 %v722, %v723
    %v725 = vsub.s32 4294967266, %v720
    %v726 = vadd.s32 %v725, 127
    %v727 = vshll.u32 %v726, 23
    %v728 = vor.u32 4788187, %v727
    %v729 = vand.u32 2147483647, %v728
    %v731 = vcvt.s32.f32 %v724
    %v732 = vmul.f32 %v731, %v729
    %v733 = vxor.u32 %v732, 2147483648
    %v734 = vsel %vm651, %v733, %v732
    %v735 = vsub.s32 4, %v711
    %v736 = vsel %vm651, %v735, %v711
    %v737 = vsel %vm650, %v228, %v734
    %v738 = vsel %vm650, 0, %v736
    %v739 = vcosq.f32.pop %v737
    %v740 = vsinq.f32.pop %v737
    %vm741 = vweird.f32 %v228
    %v742 = vadd.s32 %v738, 3
    %v743 = vand.u32 %v742, 3
    %vm744 = vcmp.lt.s32.totalorder %v743, 2
    %vm745 = vcmp.eq.s32.totalorder %v743, 0
    %v746 = vxor.u32 %v740, 2147483648
    %v747 = vsel %vm745, %v739, %v746
    %vm748 = vcmp.eq.s32.totalorder %v743, 2
    %v749 = vxor.u32 %v739, 2147483648
    %v750 = vsel %vm748, %v749, %v740
    %v751 = vsel %vm744, %v747, %v750
    %v752 = vsel %vm741, nan, %v751
    %v753 = vand.u32 2147483647, %v229
    %vm754 = vcmp.le.f32.partialorder %v753, 0.7853982
    %vm755 = vcmp.lt.s32.totalorder %v229, 0
    %v756 = vand.u32 %v229, 2139095040
    %v757 = vshrl.u32 %v756, 23
    %v758 = vsub.s32 %v757, 127
    %v759 = vand.u32 2147483647, %v229
    %v760 = vand.u32 %v759, 8388607
    %v761 = vor.u32 %v760, 8388608
    %v762 = vsub.s32 0, %v761
    %v763 = vadd.s32 %v758, 1
    %vm764 = vcmp.gt.s32.totalorder %v763, 0
    %v765 = vsel %vm764, %v763, 0
    %v766 = vshrl.u32 %v765, 5
    %v767 = vand.u32 %v765, 31
    %v768 = vsub.s32 32, %v767
    %v769 = vshrl.u32 683565275, %v768
    %v770 = vshll.u32 683565275, %v767
    %v771 = vshrl.u32 2475754826, %v768
    %v772 = vor.u32 %v770, %v771
    %v773 = vshll.u32 2475754826, %v767
    %v774 = vshrl.u32 2131351028, %v768
    %v775 = vor.u32 %v773, %v774
    %v776 = vshll.u32 2131351028, %v767
    %v777 = vshrl.u32 2102212464, %v768
    %v778 = vor.u32 %v776, %v777
    %v779 = vshll.u32 2102212464, %v767
    %v780 = vshrl.u32 920167782, %v768
    %v781 = vor.u32 %v779, %v780
    %v782 = vshll.u32 920167782, %v767
    %v783 = vshrl.u32 1326507024, %v768
    %v784 = vor.u32 %v782, %v783
    %vm785 = vcmp.lt.s32.totalorder %v766, 1
    %vm786 = vcmp.lt.s32.totalorder %v766, 2
    %vm787 = vcmp.lt.s32.totalorder %v766, 3
    %vm788 = vcmp.lt.s32.totalorder %v766, 4
    %v789 = vsel %vm785, %v769, %v772
    %v790 = vsel %vm788, %v778, 2102212464
    %v791 = vsel %vm787, %v775, %v790
    %v792 = vsel %vm786, %v789, %v791
    %v793 = vsel %vm785, %v772, %v775
    %v794 = vsel %vm788, %v781, 920167782
    %v795 = vsel %vm787, %v778, %v794
    %v796 = vsel %vm786, %v793, %v795
    %v797 = vsel %vm785, %v775, %v778
    %v798 = vsel %vm788, %v784, 1326507024
    %v799 = vsel %vm787, %v781, %v798
    %v800 = vsel %vm786, %v797, %v799
    %v801 = vshll.u32 %v761, 8
    %v802 = vmul.u32.u64.compose %v801, %v800
    %v803 = vextract.low.u32 %v802
    %v804 = vextract.high.u32 %v802
    %v805 = vmul.u32.u64.compose %v801, %v796
    %v806 = vextract.low.u32 %v805
    %v807 = vextract.high.u32 %v805
    %v808 = vmul.u32 %v801, %v792
    %v809 = vadd.s32 %v804, %v806
    %vm810 = vc.u32 %v804, %v806
    %v811 = vadd.s32 %v807, 1
    %v812 = vsel %vm810, %v811, %v807
    %v813 = vadd.s32 %v808, %v812
    %v814 = vadd.s32 %v813, 536870912
    %v815 = vshrl.u32 %v814, 30
    %v816 = vshll.u32 %v815, 30
    %v817 = vsub.s32 %v813, %v816
    %vm818 = vcmp.lt.s32.totalorder %v817, 0
    %v819 = vsub.s32 0, %v817
    %v820 = vsel %vm818, %v819, %v817
    %v821 = vclz %v820
    %v822 = vsub.s32 %v821, 2
    %vm823 = vcmp.gt.s32.totalorder 0, %v822
    %v824 = vsel %vm823, 0, %v822
    %v825 = vsub.s32 32, %v824
    %v826 = vshll.u32 %v817, %v824
    %v827 = vshrl.u32 %v809, %v825
    %v828 = vor.u32 %v826, %v827
    %v829 = vsub.s32 4294967266, %v824
    %v830 = vadd.s32 %v829, 127
    %v831 = vshll.u32 %v830, 23
    %v832 = vor.u32 4788187, %v831
    %v833 = vand.u32 2147483647, %v832
    %v835 = vcvt.s32.f32 %v828
    %v836 = vmul.f32 %v835, %v833
    %v837 = vxor.u32 %v836, 2147483648
    %v838 = vsel %vm755, %v837, %v836
    %v839 = vsub.s32 4, %v815
    %v840 = vsel %vm755, %v839, %v815
    %v841 = vsel %vm754, %v229, %v838
    %v842 = vsel %vm754, 0, %v840
    %v843 = vcosq.f32.pop %v841
    %v844 = vsinq.f32.pop %v841
    %vm845 = vweird.f32 %v229
    %v846 = vadd.s32 %v842, 3
    %v847 = vand.u32 %v846, 3
    %vm848 = vcmp.lt.s32.totalorder %v847, 2
    %vm849 = vcmp.eq.s32.totalorder %v847, 0
    %v850 = vxor.u32 %v844, 2147483648
    %v851 = vsel %vm849, %v843, %v850
    %vm852 = vcmp.eq.s32.totalorder %v847, 2
    %v853 = vxor.u32 %v843, 2147483648
    %v854 = vsel %vm852, %v853, %v844
    %v855 = vsel %vm848, %v851, %v854
    %v856 = vsel %vm845, nan, %v855
    %v857 = vsel %vm232, %v224, %v336
    %v858 = vsel %vm232, %v225, %v440
    %v859 = vsel %vm232, %v226, %v544
    %v860 = vsel %vm232, %v227, %v648
    %v861 = vsel %vm232, %v228, %v752
    %v862 = vsel %vm232, %v229, %v856
    %v863 = vld [vmem:[#allocation14] sm:$0xff]
    %v864 = vld [vmem:[#allocation14 + $0x8] sm:$0xff]
    %v865 = vld [vmem:[#allocation16] sm:$0x1]
    %v867 = vlaneseq
    %v868 = vshrl.u32 %v867, 7
    %v869 = vsub.s32 0, %v868
    %v870 = vrot.slane %v865, %v869
    %vm872 = vcmask 130048
    %v874 = vsel %vm872, %v857, 0
    %v877 = vsel %vm872, %v858, 0
    %v880 = vsel %vm872, %v859, 0
    %v883 = vsel %vm872, %v860, 0
    %v886 = vsel %vm872, %v861, 0
    %v889 = vsel %vm872, %v862, 0
    %891 = vmatprep.subr.mxu0 0.0
    %892 = vmatpush1.msra.mxu0 0.0
    %893 = vmatprep.subr.mxu0 0.0
    %894 = vmatpush1.msra.mxu0 0.0
    %895 = vmatprep.subr.mxu0 0.0
    %896 = vmatpush1.msra.mxu0 0.0
    %897 = vmatprep.subr.mxu0 0.0
    %898 = vmatpush1.msra.mxu0 0.0
    %899 = vmatprep.subr.mxu0 0.0
    %900 = vmatpush1.msra.mxu0 0.0
    %901 = vmatprep.subr.mxu0 0.0
    %902 = vmatpush1.msra.mxu0 0.0
    %903 = vmatprep.subr.mxu0 0.0
    %904 = vmatpush1.msra.mxu0 0.0
    %905 = vmatprep.subr.mxu0 0.0
    %906 = vmatpush1.msra.mxu0 0.0
    %907 = vmatprep.subr.mxu0 0.0
    %908 = vmatpush1.msra.mxu0 0.0
    %909 = vmatprep.subr.mxu0 0.0
    %910 = vmatpush1.msra.mxu0 0.0
    %911 = vmatprep.subr.mxu0 0.0
    %912 = vmatpush1.msra.mxu0 0.0
    %913 = vmatprep.subr.mxu0 0.0
    %914 = vmatpush1.msra.mxu0 0.0
    %915 = vmatprep.subr.mxu0 0.0
    %916 = vmatpush1.msra.mxu0 0.0
    %917 = vmatprep.subr.mxu0 0.0
    %918 = vmatpush1.msra.mxu0 0.0
    %919 = vmatprep.subr.mxu0 0.0
    %920 = vmatpush1.msra.mxu0 %v864
    %921 = vmatprep.subr.mxu0 0.0
    %922 = vmatpush1.msra.mxu0 %v863
    %923 = vmatprep.subr.mxu0 0.0
    %924 = vmatpush2.msra.mxu0 0.0
    %925 = vmatprep.subr.mxu0 0.0
    %926 = vmatpush2.msra.mxu0 0.0
    %927 = vmatprep.subr.mxu0 0.0
    %928 = vmatpush2.msra.mxu0 0.0
    %929 = vmatprep.subr.mxu0 0.0
    %930 = vmatpush2.msra.mxu0 0.0
    %931 = vmatprep.subr.mxu0 0.0
    %932 = vmatpush2.msra.mxu0 0.0
    %933 = vmatprep.subr.mxu0 0.0
    %934 = vmatpush2.msra.mxu0 0.0
    %935 = vmatprep.subr.mxu0 0.0
    %936 = vmatpush2.msra.mxu0 0.0
    %937 = vmatprep.subr.mxu0 0.0
    %938 = vmatpush2.msra.mxu0 0.0
    %939 = vmatprep.subr.mxu0 0.0
    %940 = vmatpush2.msra.mxu0 0.0
    %941 = vmatprep.subr.mxu0 0.0
    %942 = vmatpush2.msra.mxu0 0.0
    %943 = vmatprep.subr.mxu0 0.0
    %944 = vmatpush2.msra.mxu0 0.0
    %945 = vmatprep.subr.mxu0 0.0
    %946 = vmatpush2.msra.mxu0 0.0
    %947 = vmatprep.subr.mxu0 0.0
    %948 = vmatpush2.msra.mxu0 0.0
    %949 = vmatprep.subr.mxu0 0.0
    %950 = vmatpush2.msra.mxu0 0.0
    %951 = vmatprep.subr.mxu0 0.0
    %952 = vmatpush2.msra.mxu0 0.0
    %953 = vmatprep.subr.mxu0 0.0
    %954 = vmatpush2.msra.mxu0 0.0
    %955 = vmatprep.mubr.f32.mxu0 0.0
    %956 = vmatmul.mubr.f32.gmra.mxu0 %v874
    %v957 = vpop.f32.mrf.mxu0
    %v958 = vadd.f32 %v870, %v957
    %v959 = vpop.f32.mrf.mxu0
    %960 = vmatprep.mubr.f32.mxu0 0.0
    %961 = vmatmul.mubr.f32.gmra.mxu0 %v877
    %v962 = vpop.f32.mrf.mxu0
    %v963 = vadd.f32 %v870, %v962
    %v964 = vpop.f32.mrf.mxu0
    %965 = vmatprep.mubr.f32.mxu0 0.0
    %966 = vmatmul.mubr.f32.gmra.mxu0 %v880
    %v967 = vpop.f32.mrf.mxu0
    %v968 = vadd.f32 %v870, %v967
    %v969 = vpop.f32.mrf.mxu0
    %970 = vmatprep.mubr.f32.mxu0 0.0
    %971 = vmatmul.mubr.f32.gmra.mxu0 %v883
    %v972 = vpop.f32.mrf.mxu0
    %v973 = vadd.f32 %v870, %v972
    %v974 = vpop.f32.mrf.mxu0
    %975 = vmatprep.mubr.f32.mxu0 0.0
    %976 = vmatmul.mubr.f32.gmra.mxu0 %v886
    %v977 = vpop.f32.mrf.mxu0
    %v978 = vadd.f32 %v870, %v977
    %v979 = vpop.f32.mrf.mxu0
    %980 = vmatprep.mubr.f32.mxu0 0.0
    %981 = vmatmul.mubr.f32.gmra.mxu0 %v889
    %v982 = vpop.f32.mrf.mxu0
    %v983 = vadd.f32 %v870, %v982
    %v984 = vpop.f32.mrf.mxu0
    %985 = vdwg.mxu0
    %988 = vrot.lane.b32.xlu0 %v963, 112
    %v989 = vpop.permute.xlu0 %988
    %990 = vrot.lane.b32.xlu0 %v968, 112
    %v991 = vpop.permute.xlu0 %990
    %v993 = vsel %vm872, %v958, 0
    %v995 = vsel %vm872, %v989, 0
    %v997 = vsel %vm872, %v991, 0
    %999 = vmatprep.subr.mxu0 0.0
    %1000 = vmatpush1.xpose.msra.mxu0 0.0
    %1001 = vmatprep.subr.mxu0 0.0
    %1002 = vmatpush1.xpose.msra.mxu0 0.0
    %1003 = vmatprep.subr.mxu0 0.0
    %1004 = vmatpush1.xpose.msra.mxu0 0.0
    %1005 = vmatprep.subr.mxu0 0.0
    %1006 = vmatpush1.xpose.msra.mxu0 0.0
    %1007 = vmatprep.subr.mxu0 0.0
    %1008 = vmatpush1.xpose.msra.mxu0 0.0
    %1009 = vmatprep.subr.mxu0 0.0
    %1010 = vmatpush1.xpose.msra.mxu0 0.0
    %1011 = vmatprep.subr.mxu0 0.0
    %1012 = vmatpush1.xpose.msra.mxu0 0.0
    %1013 = vmatprep.subr.mxu0 0.0
    %1014 = vmatpush1.xpose.msra.mxu0 0.0
    %1015 = vmatprep.subr.mxu0 0.0
    %1016 = vmatpush1.xpose.msra.mxu0 0.0
    %1017 = vmatprep.subr.mxu0 0.0
    %1018 = vmatpush1.xpose.msra.mxu0 0.0
    %1019 = vmatprep.subr.mxu0 0.0
    %1020 = vmatpush1.xpose.msra.mxu0 0.0
    %1021 = vmatprep.subr.mxu0 0.0
    %1022 = vmatpush1.xpose.msra.mxu0 0.0
    %1023 = vmatprep.subr.mxu0 0.0
    %1024 = vmatpush1.xpose.msra.mxu0 0.0
    %1025 = vmatprep.subr.mxu0 0.0
    %1026 = vmatpush1.xpose.msra.mxu0 0.0
    %1027 = vmatprep.subr.mxu0 0.0
    %1028 = vmatpush1.xpose.msra.mxu0 %v997
    %1029 = vmatprep.subr.mxu0 0.0
    %1030 = vmatpush1.xpose.msra.mxu0 %v995
    %1031 = vmatprep.subr.mxu0 0.0
    %1032 = vmatpush2.xpose.msra.mxu0 0.0
    %1033 = vmatprep.subr.mxu0 0.0
    %1034 = vmatpush2.xpose.msra.mxu0 0.0
    %1035 = vmatprep.subr.mxu0 0.0
    %1036 = vmatpush2.xpose.msra.mxu0 0.0
    %1037 = vmatprep.subr.mxu0 0.0
    %1038 = vmatpush2.xpose.msra.mxu0 0.0
    %1039 = vmatprep.subr.mxu0 0.0
    %1040 = vmatpush2.xpose.msra.mxu0 0.0
    %1041 = vmatprep.subr.mxu0 0.0
    %1042 = vmatpush2.xpose.msra.mxu0 0.0
    %1043 = vmatprep.subr.mxu0 0.0
    %1044 = vmatpush2.xpose.msra.mxu0 0.0
    %1045 = vmatprep.subr.mxu0 0.0
    %1046 = vmatpush2.xpose.msra.mxu0 0.0
    %1047 = vmatprep.subr.mxu0 0.0
    %1048 = vmatpush2.xpose.msra.mxu0 0.0
    %1049 = vmatprep.subr.mxu0 0.0
    %1050 = vmatpush2.xpose.msra.mxu0 0.0
    %1051 = vmatprep.subr.mxu0 0.0
    %1052 = vmatpush2.xpose.msra.mxu0 0.0
    %1053 = vmatprep.subr.mxu0 0.0
    %1054 = vmatpush2.xpose.msra.mxu0 0.0
    %1055 = vmatprep.subr.mxu0 0.0
    %1056 = vmatpush2.xpose.msra.mxu0 0.0
    %1057 = vmatprep.subr.mxu0 0.0
    %1058 = vmatpush2.xpose.msra.mxu0 0.0
    %1059 = vmatprep.subr.mxu0 0.0
    %1060 = vmatpush2.xpose.msra.mxu0 0.0
    %1061 = vmatprep.subr.mxu0 0.0
    %1062 = vmatpush2.xpose.msra.mxu0 0.0
    %1063 = vmatprep.mubr.f32.mxu0 0.0
    %1064 = vmatmul.mubr.f32.gmra.mxu0 %v993
    %v1065 = vpop.f32.mrf.mxu0
    %v1066 = vadd.f32 0.0, %v1065
    %v1067 = vpop.f32.mrf.mxu0
    %1068 = vdwg.mxu0
    %1071 = vrot.lane.b32.xlu0 %v978, 112
    %v1072 = vpop.permute.xlu0 %1071
    %1073 = vrot.lane.b32.xlu0 %v983, 112
    %v1074 = vpop.permute.xlu0 %1073
    %v1076 = vsel %vm872, %v973, 0
    %v1078 = vsel %vm872, %v1072, 0
    %v1080 = vsel %vm872, %v1074, 0
    %1082 = vmatprep.subr.mxu0 0.0
    %1083 = vmatpush1.xpose.msra.mxu0 0.0
    %1084 = vmatprep.subr.mxu0 0.0
    %1085 = vmatpush1.xpose.msra.mxu0 0.0
    %1086 = vmatprep.subr.mxu0 0.0
    %1087 = vmatpush1.xpose.msra.mxu0 0.0
    %1088 = vmatprep.subr.mxu0 0.0
    %1089 = vmatpush1.xpose.msra.mxu0 0.0
    %1090 = vmatprep.subr.mxu0 0.0
    %1091 = vmatpush1.xpose.msra.mxu0 0.0
    %1092 = vmatprep.subr.mxu0 0.0
    %1093 = vmatpush1.xpose.msra.mxu0 0.0
    %1094 = vmatprep.subr.mxu0 0.0
    %1095 = vmatpush1.xpose.msra.mxu0 0.0
    %1096 = vmatprep.subr.mxu0 0.0
    %1097 = vmatpush1.xpose.msra.mxu0 0.0
    %1098 = vmatprep.subr.mxu0 0.0
    %1099 = vmatpush1.xpose.msra.mxu0 0.0
    %1100 = vmatprep.subr.mxu0 0.0
    %1101 = vmatpush1.xpose.msra.mxu0 0.0
    %1102 = vmatprep.subr.mxu0 0.0
    %1103 = vmatpush1.xpose.msra.mxu0 0.0
    %1104 = vmatprep.subr.mxu0 0.0
    %1105 = vmatpush1.xpose.msra.mxu0 0.0
    %1106 = vmatprep.subr.mxu0 0.0
    %1107 = vmatpush1.xpose.msra.mxu0 0.0
    %1108 = vmatprep.subr.mxu0 0.0
    %1109 = vmatpush1.xpose.msra.mxu0 0.0
    %1110 = vmatprep.subr.mxu0 0.0
    %1111 = vmatpush1.xpose.msra.mxu0 %v1080
    %1112 = vmatprep.subr.mxu0 0.0
    %1113 = vmatpush1.xpose.msra.mxu0 %v1078
    %1114 = vmatprep.subr.mxu0 0.0
    %1115 = vmatpush2.xpose.msra.mxu0 0.0
    %1116 = vmatprep.subr.mxu0 0.0
    %1117 = vmatpush2.xpose.msra.mxu0 0.0
    %1118 = vmatprep.subr.mxu0 0.0
    %1119 = vmatpush2.xpose.msra.mxu0 0.0
    %1120 = vmatprep.subr.mxu0 0.0
    %1121 = vmatpush2.xpose.msra.mxu0 0.0
    %1122 = vmatprep.subr.mxu0 0.0
    %1123 = vmatpush2.xpose.msra.mxu0 0.0
    %1124 = vmatprep.subr.mxu0 0.0
    %1125 = vmatpush2.xpose.msra.mxu0 0.0
    %1126 = vmatprep.subr.mxu0 0.0
    %1127 = vmatpush2.xpose.msra.mxu0 0.0
    %1128 = vmatprep.subr.mxu0 0.0
    %1129 = vmatpush2.xpose.msra.mxu0 0.0
    %1130 = vmatprep.subr.mxu0 0.0
    %1131 = vmatpush2.xpose.msra.mxu0 0.0
    %1132 = vmatprep.subr.mxu0 0.0
    %1133 = vmatpush2.xpose.msra.mxu0 0.0
    %1134 = vmatprep.subr.mxu0 0.0
    %1135 = vmatpush2.xpose.msra.mxu0 0.0
    %1136 = vmatprep.subr.mxu0 0.0
    %1137 = vmatpush2.xpose.msra.mxu0 0.0
    %1138 = vmatprep.subr.mxu0 0.0
    %1139 = vmatpush2.xpose.msra.mxu0 0.0
    %1140 = vmatprep.subr.mxu0 0.0
    %1141 = vmatpush2.xpose.msra.mxu0 0.0
    %1142 = vmatprep.subr.mxu0 0.0
    %1143 = vmatpush2.xpose.msra.mxu0 0.0
    %1144 = vmatprep.subr.mxu0 0.0
    %1145 = vmatpush2.xpose.msra.mxu0 0.0
    %1146 = vmatprep.mubr.f32.mxu0 0.0
    %1147 = vmatmul.mubr.f32.gmra.mxu0 %v1076
    %v1148 = vpop.f32.mrf.mxu0
    %v1149 = vadd.f32 0.0, %v1148
    %v1150 = vpop.f32.mrf.mxu0
    %1151 = vdwg.mxu0
    %v1152 = vlaneseq
    %v1153 = vshrl.u32 %v1152, 7
    %v1154 = vsub.s32 0, %v1153
    %v1155 = vrot.slane %v163, %v1154
    %1157 = vbcast.lane.b32.xlu0 %v1155, 256
    %v1158 = vpop.permute.xlu0 %1157
    %v1159 = vlaneseq
    %v1160 = vshrl.u32 %v1159, 7
    %v1161 = vsub.s32 1, %v1160
    %v1162 = vrot.slane %v163, %v1161
    %1164 = vbcast.lane.b32.xlu0 %v1162, 256
    %v1165 = vpop.permute.xlu0 %1164
    %v1167 = vunpack.c.l.s4 1966171168
    %v1168 = vunpack.c.0.s8 %v1167
    %v1169 = vlaneseq
    %v1170 = vshrl.u32 %v1169, 7
    %v1171 = vsub.s32 %v1168, %v1170
    %v1172 = vrot.slane %v164, %v1171
    %v1173 = vcombine.high %v1172, %v1172
    %v1175 = vunpack.c.l.s4 1966171168
    %v1176 = vunpack.c.0.s8 %v1175
    %v1177 = vlaneseq
    %v1178 = vshrl.u32 %v1177, 7
    %v1179 = vsub.s32 %v1176, %v1178
    %v1180 = vrot.slane %v1172, %v1179
    %v1182 = vunpack.c.l.s4 1966171168
    %v1183 = vunpack.c.0.s8 %v1182
    %v1184 = vlaneseq
    %v1185 = vshrl.u32 %v1184, 7
    %v1186 = vsub.s32 %v1183, %v1185
    %v1187 = vrot.slane %v1173, %v1186
    %v1188 = vlaneseq
    %v1189 = vshrl.u32 %v1188, 7
    %v1190 = vsub.s32 0, %v1189
    %v1191 = vrot.slane %v1180, %v1190
    %v1192 = vlaneseq
    %v1193 = vshrl.u32 %v1192, 7
    %v1194 = vsub.s32 0, %v1193
    %v1195 = vrot.slane %v1187, %v1194
    %vm1198 = vcmp.ge.f32.partialorder %v1158, %v1191
    %vm1199 = vcmp.ge.f32.partialorder %v1165, %v1195
    %v1200 = vsel %vm1198, 1, 0
    %v1201 = vsel %vm1199, 1, 0
    %v1202 = vcvt.s32.f32 %v1200
    %v1203 = vcvt.s32.f32 %v1201
    %v1204 = vmul.f32 %v1066, %v1202
    %v1205 = vmul.f32 %v1149, %v1203
    %v1206 = vlaneseq
    %v1207 = vshrl.u32 %v1206, 7
    %vm1208 = vcmp.lt.s32.totalorder %v1207, 0
    %v1209 = vsub.s32 0, %v1207
    %v1210 = vsel %vm1208, %v1209, %v1207
    %v1211 = vshrl.u32 %v1210, 2
    %v1212 = vand.u32 %v1210, 3
    %v1213 = vsub.s32 0, %v1212
    %v1214 = vsel %vm1208, %v1213, %v1212
    %vm1215 = vcmp.ne.s32.totalorder %v1214, 0
    %vm1216 = vcmp.lt.s32.totalorder %v1214, 0
    %vm1217 = vmand %vm1216, %vm1215
    %v1218 = vadd.s32 %v1214, 4
    %v1219 = vsel %vm1217, %v1218, %v1214
    %v1220 = vsub.s32 %v166, 1
    %v1222 = vunpack.c.l.s4 1966171168
    %v1223 = vunpack.c.0.s8 %v1222
    %v1224 = vlaneseq
    %v1225 = vshrl.u32 %v1224, 7
    %v1226 = vsub.s32 %v1223, %v1225
    %v1227 = vrot.slane %v1220, %v1226
    %v1228 = vcombine.high %v1227, %v1227
    %v1230 = vunpack.c.l.s4 1966171168
    %v1231 = vunpack.c.0.s8 %v1230
    %v1232 = vlaneseq
    %v1233 = vshrl.u32 %v1232, 7
    %v1234 = vsub.s32 %v1231, %v1233
    %v1235 = vrot.slane %v1227, %v1234
    %v1237 = vunpack.c.l.s4 1966171168
    %v1238 = vunpack.c.0.s8 %v1237
    %v1239 = vlaneseq
    %v1240 = vshrl.u32 %v1239, 7
    %v1241 = vsub.s32 %v1238, %v1240
    %v1242 = vrot.slane %v1228, %v1241
    %v1243 = vlaneseq
    %v1244 = vshrl.u32 %v1243, 7
    %v1245 = vsub.s32 0, %v1244
    %v1246 = vrot.slane %v1235, %v1245
    %v1247 = vlaneseq
    %v1248 = vshrl.u32 %v1247, 7
    %v1249 = vsub.s32 0, %v1248
    %v1250 = vrot.slane %v1242, %v1249
    %vm1251 = vcmp.eq.s32.totalorder %v1219, %v1246
    %vm1252 = vcmp.eq.s32.totalorder %v1219, %v1250
    %v1255 = vunpack.c.l.s4 1966171168
    %v1256 = vunpack.c.0.s8 %v1255
    %v1257 = vlaneseq
    %v1258 = vshrl.u32 %v1257, 7
    %v1259 = vsub.s32 %v1256, %v1258
    %v1260 = vrot.slane %v167, %v1259
    %v1261 = vcombine.high %v1260, %v1260
    %v1263 = vunpack.c.l.s4 1966171168
    %v1264 = vunpack.c.0.s8 %v1263
    %v1265 = vlaneseq
    %v1266 = vshrl.u32 %v1265, 7
    %v1267 = vsub.s32 %v1264, %v1266
    %v1268 = vrot.slane %v1260, %v1267
    %v1270 = vunpack.c.l.s4 1966171168
    %v1271 = vunpack.c.0.s8 %v1270
    %v1272 = vlaneseq
    %v1273 = vshrl.u32 %v1272, 7
    %v1274 = vsub.s32 %v1271, %v1273
    %v1275 = vrot.slane %v1261, %v1274
    %vm1278 = vcmp.ne.f32.partialorder %v1268, 0.0
    %vm1279 = vcmp.ne.f32.partialorder %v1275, 0.0
    %v1280 = vsel %vm1278, 1, 0
    %v1281 = vsel %vm1279, 1, 0
    %v1282 = vlaneseq
    %v1283 = vshrl.u32 %v1282, 7
    %v1284 = vsub.s32 0, %v1283
    %v1285 = vrot.slane %v1280, %v1284
    %v1286 = vlaneseq
    %v1287 = vshrl.u32 %v1286, 7
    %v1288 = vsub.s32 0, %v1287
    %v1289 = vrot.slane %v1281, %v1288
    %vm1290 = vcmp.eq.s32.totalorder %v1285, 1
    %vm1291 = vcmp.eq.s32.totalorder %v1289, 1
    %vm1292 = vmand %vm1251, %vm1290
    %vm1293 = vmand %vm1252, %vm1291
    %vm1294 = vcmp.lt.s32.totalorder %v1207, 4
    %v1297 = vunpack.c.l.s4 1966171168
    %v1298 = vunpack.c.0.s8 %v1297
    %v1299 = vlaneseq
    %v1300 = vshrl.u32 %v1299, 7
    %v1301 = vsub.s32 %v1298, %v1300
    %v1302 = vrot.slane %v165, %v1301
    %v1303 = vcombine.high %v1302, %v1302
    %v1305 = vunpack.c.l.s4 1966171168
    %v1306 = vunpack.c.0.s8 %v1305
    %v1307 = vlaneseq
    %v1308 = vshrl.u32 %v1307, 7
    %v1309 = vsub.s32 %v1306, %v1308
    %v1310 = vrot.slane %v1302, %v1309
    %v1312 = vunpack.c.l.s4 1966171168
    %v1313 = vunpack.c.0.s8 %v1312
    %v1314 = vlaneseq
    %v1315 = vshrl.u32 %v1314, 7
    %v1316 = vsub.s32 %v1313, %v1315
    %v1317 = vrot.slane %v1303, %v1316
    %v1318 = vlaneseq
    %v1319 = vshrl.u32 %v1318, 7
    %v1320 = vsub.s32 0, %v1319
    %v1321 = vrot.slane %v1310, %v1320
    %v1322 = vlaneseq
    %v1323 = vshrl.u32 %v1322, 7
    %v1324 = vsub.s32 0, %v1323
    %v1325 = vrot.slane %v1317, %v1324
    %v1328 = vsel %vm1294, 1.0, %v1321
    %v1329 = vsel %vm1294, 1.0, %v1325
    %v1330 = vsel %vm1292, %v1328, 0.0
    %v1331 = vsel %vm1293, %v1329, 0.0
    %v1332 = vsel %vm872, %v1204, -inf
    %1333 = vmax.xlane.f32.xlu0 %v1332
    %v1334 = vpop.xlane.xlu0 %1333
    %v1335 = vsel %vm872, %v1205, -inf
    %1336 = vmax.xlane.f32.xlu0 %v1335
    %v1337 = vpop.xlane.xlu0 %1336
    %v1338 = vsub.f32 %v1204, %v1334
    %v1339 = vsub.f32 %v1205, %v1337
    %v1340 = vmul.f32 %v1338, 1.442695
    %v1341 = vpow.pop %v1340
    %v1342 = vmul.f32 %v1339, 1.442695
    %v1343 = vpow.pop %v1342
    %v1345 = vsel %vm872, %v1341, 0
    %v1348 = vsel %vm872, %v1330, 0
    %1350 = vmatprep.subr.mxu0 0.0
    %1351 = vmatpush1.xpose.msra.mxu0 0.0
    %1352 = vmatprep.subr.mxu0 0.0
    %1353 = vmatpush1.xpose.msra.mxu0 0.0
    %1354 = vmatprep.subr.mxu0 0.0
    %1355 = vmatpush1.xpose.msra.mxu0 0.0
    %1356 = vmatprep.subr.mxu0 0.0
    %1357 = vmatpush1.xpose.msra.mxu0 0.0
    %1358 = vmatprep.subr.mxu0 0.0
    %1359 = vmatpush1.xpose.msra.mxu0 0.0
    %1360 = vmatprep.subr.mxu0 0.0
    %1361 = vmatpush1.xpose.msra.mxu0 0.0
    %1362 = vmatprep.subr.mxu0 0.0
    %1363 = vmatpush1.xpose.msra.mxu0 0.0
    %1364 = vmatprep.subr.mxu0 0.0
    %1365 = vmatpush1.xpose.msra.mxu0 0.0
    %1366 = vmatprep.subr.mxu0 0.0
    %1367 = vmatpush1.xpose.msra.mxu0 0.0
    %1368 = vmatprep.subr.mxu0 0.0
    %1369 = vmatpush1.xpose.msra.mxu0 0.0
    %1370 = vmatprep.subr.mxu0 0.0
    %1371 = vmatpush1.xpose.msra.mxu0 0.0
    %1372 = vmatprep.subr.mxu0 0.0
    %1373 = vmatpush1.xpose.msra.mxu0 0.0
    %1374 = vmatprep.subr.mxu0 0.0
    %1375 = vmatpush1.xpose.msra.mxu0 0.0
    %1376 = vmatprep.subr.mxu0 0.0
    %1377 = vmatpush1.xpose.msra.mxu0 0.0
    %1378 = vmatprep.subr.mxu0 0.0
    %1379 = vmatpush1.xpose.msra.mxu0 0.0
    %1380 = vmatprep.subr.mxu0 0.0
    %1381 = vmatpush1.xpose.msra.mxu0 %v1348
    %1382 = vmatprep.subr.mxu0 0.0
    %1383 = vmatpush2.xpose.msra.mxu0 0.0
    %1384 = vmatprep.subr.mxu0 0.0
    %1385 = vmatpush2.xpose.msra.mxu0 0.0
    %1386 = vmatprep.subr.mxu0 0.0
    %1387 = vmatpush2.xpose.msra.mxu0 0.0
    %1388 = vmatprep.subr.mxu0 0.0
    %1389 = vmatpush2.xpose.msra.mxu0 0.0
    %1390 = vmatprep.subr.mxu0 0.0
    %1391 = vmatpush2.xpose.msra.mxu0 0.0
    %1392 = vmatprep.subr.mxu0 0.0
    %1393 = vmatpush2.xpose.msra.mxu0 0.0
    %1394 = vmatprep.subr.mxu0 0.0
    %1395 = vmatpush2.xpose.msra.mxu0 0.0
    %1396 = vmatprep.subr.mxu0 0.0
    %1397 = vmatpush2.xpose.msra.mxu0 0.0
    %1398 = vmatprep.subr.mxu0 0.0
    %1399 = vmatpush2.xpose.msra.mxu0 0.0
    %1400 = vmatprep.subr.mxu0 0.0
    %1401 = vmatpush2.xpose.msra.mxu0 0.0
    %1402 = vmatprep.subr.mxu0 0.0
    %1403 = vmatpush2.xpose.msra.mxu0 0.0
    %1404 = vmatprep.subr.mxu0 0.0
    %1405 = vmatpush2.xpose.msra.mxu0 0.0
    %1406 = vmatprep.subr.mxu0 0.0
    %1407 = vmatpush2.xpose.msra.mxu0 0.0
    %1408 = vmatprep.subr.mxu0 0.0
    %1409 = vmatpush2.xpose.msra.mxu0 0.0
    %1410 = vmatprep.subr.mxu0 0.0
    %1411 = vmatpush2.xpose.msra.mxu0 0.0
    %1412 = vmatprep.subr.mxu0 0.0
    %1413 = vmatpush2.xpose.msra.mxu0 0.0
    %1414 = vmatprep.mubr.f32.mxu0 0.0
    %1415 = vmatmul.mubr.f32.gmra.mxu0 %v1345
    %v1416 = vpop.f32.mrf.mxu0
    %v1417 = vadd.f32 0.0, %v1416
    %v1418 = vpop.f32.mrf.mxu0
    %1419 = vdwg.mxu0
    %v1421 = vsel %vm872, %v1343, 0
    %v1424 = vsel %vm872, %v1331, 0
    %1426 = vmatprep.subr.mxu0 0.0
    %1427 = vmatpush1.xpose.msra.mxu0 0.0
    %1428 = vmatprep.subr.mxu0 0.0
    %1429 = vmatpush1.xpose.msra.mxu0 0.0
    %1430 = vmatprep.subr.mxu0 0.0
    %1431 = vmatpush1.xpose.msra.mxu0 0.0
    %1432 = vmatprep.subr.mxu0 0.0
    %1433 = vmatpush1.xpose.msra.mxu0 0.0
    %1434 = vmatprep.subr.mxu0 0.0
    %1435 = vmatpush1.xpose.msra.mxu0 0.0
    %1436 = vmatprep.subr.mxu0 0.0
    %1437 = vmatpush1.xpose.msra.mxu0 0.0
    %1438 = vmatprep.subr.mxu0 0.0
    %1439 = vmatpush1.xpose.msra.mxu0 0.0
    %1440 = vmatprep.subr.mxu0 0.0
    %1441 = vmatpush1.xpose.msra.mxu0 0.0
    %1442 = vmatprep.subr.mxu0 0.0
    %1443 = vmatpush1.xpose.msra.mxu0 0.0
    %1444 = vmatprep.subr.mxu0 0.0
    %1445 = vmatpush1.xpose.msra.mxu0 0.0
    %1446 = vmatprep.subr.mxu0 0.0
    %1447 = vmatpush1.xpose.msra.mxu0 0.0
    %1448 = vmatprep.subr.mxu0 0.0
    %1449 = vmatpush1.xpose.msra.mxu0 0.0
    %1450 = vmatprep.subr.mxu0 0.0
    %1451 = vmatpush1.xpose.msra.mxu0 0.0
    %1452 = vmatprep.subr.mxu0 0.0
    %1453 = vmatpush1.xpose.msra.mxu0 0.0
    %1454 = vmatprep.subr.mxu0 0.0
    %1455 = vmatpush1.xpose.msra.mxu0 0.0
    %1456 = vmatprep.subr.mxu0 0.0
    %1457 = vmatpush1.xpose.msra.mxu0 %v1424
    %1458 = vmatprep.subr.mxu0 0.0
    %1459 = vmatpush2.xpose.msra.mxu0 0.0
    %1460 = vmatprep.subr.mxu0 0.0
    %1461 = vmatpush2.xpose.msra.mxu0 0.0
    %1462 = vmatprep.subr.mxu0 0.0
    %1463 = vmatpush2.xpose.msra.mxu0 0.0
    %1464 = vmatprep.subr.mxu0 0.0
    %1465 = vmatpush2.xpose.msra.mxu0 0.0
    %1466 = vmatprep.subr.mxu0 0.0
    %1467 = vmatpush2.xpose.msra.mxu0 0.0
    %1468 = vmatprep.subr.mxu0 0.0
    %1469 = vmatpush2.xpose.msra.mxu0 0.0
    %1470 = vmatprep.subr.mxu0 0.0
    %1471 = vmatpush2.xpose.msra.mxu0 0.0
    %1472 = vmatprep.subr.mxu0 0.0
    %1473 = vmatpush2.xpose.msra.mxu0 0.0
    %1474 = vmatprep.subr.mxu0 0.0
    %1475 = vmatpush2.xpose.msra.mxu0 0.0
    %1476 = vmatprep.subr.mxu0 0.0
    %1477 = vmatpush2.xpose.msra.mxu0 0.0
    %1478 = vmatprep.subr.mxu0 0.0
    %1479 = vmatpush2.xpose.msra.mxu0 0.0
    %1480 = vmatprep.subr.mxu0 0.0
    %1481 = vmatpush2.xpose.msra.mxu0 0.0
    %1482 = vmatprep.subr.mxu0 0.0
    %1483 = vmatpush2.xpose.msra.mxu0 0.0
    %1484 = vmatprep.subr.mxu0 0.0
    %1485 = vmatpush2.xpose.msra.mxu0 0.0
    %1486 = vmatprep.subr.mxu0 0.0
    %1487 = vmatpush2.xpose.msra.mxu0 0.0
    %1488 = vmatprep.subr.mxu0 0.0
    %1489 = vmatpush2.xpose.msra.mxu0 0.0
    %1490 = vmatprep.mubr.f32.mxu0 0.0
    %1491 = vmatmul.mubr.f32.gmra.mxu0 %v1421
    %v1492 = vpop.f32.mrf.mxu0
    %v1493 = vadd.f32 0.0, %v1492
    %v1494 = vpop.f32.mrf.mxu0
    %1495 = vdwg.mxu0
    %vm1496 = vcmp.gt.f32.partialorder %v1417, 0.0
    %vm1497 = vcmp.gt.f32.partialorder %v1493, 0.0
    %v1498 = vrcp.pop %v1417
    %v1499 = vrcp.pop %v1493
    %1502 = vrot.lane.b32.xlu0 %v1498, 4
    %v1503 = vpop.permute.xlu0 %1502
    %1504 = vrot.lane.b32.xlu0 %v1499, 4
    %v1505 = vpop.permute.xlu0 %1504
    %v1508 = vmul.f32 %v1417, %v1503
    %v1509 = vmul.f32 %v1493, %v1505
    %1512 = vrot.lane.b32.xlu0 %v1508, 124
    %v1513 = vpop.permute.xlu0 %1512
    %1514 = vrot.lane.b32.xlu0 %v1509, 124
    %v1515 = vpop.permute.xlu0 %1514
    %v1518 = vsel %vm1496, %v1513, 0.0
    %v1519 = vsel %vm1497, %v1515, 0.0
    %v1520 = vld [vmem:[%s9] sm:$0xf]
    %v1521 = vld [vmem:[#allocation17] sm:$0x1]
    %v1523 = vlaneseq
    %v1524 = vshrl.u32 %v1523, 7
    %v1525 = vsub.s32 0, %v1524
    %v1526 = vrot.slane %v1521, %v1525
    %vm1528 = vcmask 31744
    %v1530 = vsel %vm1528, %v1518, 0
    %v1533 = vsel %vm1528, %v1519, 0
    %vm1535 = vcmask 1043456
    %v1537 = vsel %vm1535, %v1520, 0
    %1539 = vmatprep.subr.mxu0 0.0
    %1540 = vmatpush1.msra.mxu0 0.0
    %1541 = vmatprep.subr.mxu0 0.0
    %1542 = vmatpush1.msra.mxu0 0.0
    %1543 = vmatprep.subr.mxu0 0.0
    %1544 = vmatpush1.msra.mxu0 0.0
    %1545 = vmatprep.subr.mxu0 0.0
    %1546 = vmatpush1.msra.mxu0 0.0
    %1547 = vmatprep.subr.mxu0 0.0
    %1548 = vmatpush1.msra.mxu0 0.0
    %1549 = vmatprep.subr.mxu0 0.0
    %1550 = vmatpush1.msra.mxu0 0.0
    %1551 = vmatprep.subr.mxu0 0.0
    %1552 = vmatpush1.msra.mxu0 0.0
    %1553 = vmatprep.subr.mxu0 0.0
    %1554 = vmatpush1.msra.mxu0 0.0
    %1555 = vmatprep.subr.mxu0 0.0
    %1556 = vmatpush1.msra.mxu0 0.0
    %1557 = vmatprep.subr.mxu0 0.0
    %1558 = vmatpush1.msra.mxu0 0.0
    %1559 = vmatprep.subr.mxu0 0.0
    %1560 = vmatpush1.msra.mxu0 0.0
    %1561 = vmatprep.subr.mxu0 0.0
    %1562 = vmatpush1.msra.mxu0 0.0
    %1563 = vmatprep.subr.mxu0 0.0
    %1564 = vmatpush1.msra.mxu0 0.0
    %1565 = vmatprep.subr.mxu0 0.0
    %1566 = vmatpush1.msra.mxu0 0.0
    %1567 = vmatprep.subr.mxu0 0.0
    %1568 = vmatpush1.msra.mxu0 0.0
    %1569 = vmatprep.subr.mxu0 0.0
    %1570 = vmatpush1.msra.mxu0 %v1537
    %1571 = vmatprep.subr.mxu0 0.0
    %1572 = vmatpush2.msra.mxu0 0.0
    %1573 = vmatprep.subr.mxu0 0.0
    %1574 = vmatpush2.msra.mxu0 0.0
    %1575 = vmatprep.subr.mxu0 0.0
    %1576 = vmatpush2.msra.mxu0 0.0
    %1577 = vmatprep.subr.mxu0 0.0
    %1578 = vmatpush2.msra.mxu0 0.0
    %1579 = vmatprep.subr.mxu0 0.0
    %1580 = vmatpush2.msra.mxu0 0.0
    %1581 = vmatprep.subr.mxu0 0.0
    %1582 = vmatpush2.msra.mxu0 0.0
    %1583 = vmatprep.subr.mxu0 0.0
    %1584 = vmatpush2.msra.mxu0 0.0
    %1585 = vmatprep.subr.mxu0 0.0
    %1586 = vmatpush2.msra.mxu0 0.0
    %1587 = vmatprep.subr.mxu0 0.0
    %1588 = vmatpush2.msra.mxu0 0.0
    %1589 = vmatprep.subr.mxu0 0.0
    %1590 = vmatpush2.msra.mxu0 0.0
    %1591 = vmatprep.subr.mxu0 0.0
    %1592 = vmatpush2.msra.mxu0 0.0
    %1593 = vmatprep.subr.mxu0 0.0
    %1594 = vmatpush2.msra.mxu0 0.0
    %1595 = vmatprep.subr.mxu0 0.0
    %1596 = vmatpush2.msra.mxu0 0.0
    %1597 = vmatprep.subr.mxu0 0.0
    %1598 = vmatpush2.msra.mxu0 0.0
    %1599 = vmatprep.subr.mxu0 0.0
    %1600 = vmatpush2.msra.mxu0 0.0
    %1601 = vmatprep.subr.mxu0 0.0
    %1602 = vmatpush2.msra.mxu0 0.0
    %1603 = vmatprep.mubr.f32.mxu0 0.0
    %1604 = vmatmul.mubr.f32.gmra.mxu0 %v1530
    %v1605 = vpop.f32.mrf.mxu0
    %v1606 = vadd.f32 %v1526, %v1605
    %v1607 = vpop.f32.mrf.mxu0
    %1608 = vmatprep.mubr.f32.mxu0 0.0
    %1609 = vmatmul.mubr.f32.gmra.mxu0 %v1533
    %v1610 = vpop.f32.mrf.mxu0
    %v1611 = vadd.f32 %v1526, %v1610
    %v1612 = vpop.f32.mrf.mxu0
    %1613 = vdwg.mxu0
    %v1614 = vld [vmem:[%s11] sm:$0xff]
    %v1615 = vld [vmem:[%s11 + $0x8] sm:$0xff]
    %v1616 = vld [vmem:[%s12] sm:$0x1]
    %v1618 = vlaneseq
    %v1619 = vshrl.u32 %v1618, 7
    %v1620 = vsub.s32 0, %v1619
    %v1621 = vrot.slane %v1616, %v1620
    %v1623 = vadd.f32 %v1606, %v1621
    %v1624 = vadd.f32 %v1611, %v1621
    %v1625 = vxor.u32 %v1623, 2147483648
    %v1626 = vxor.u32 %v1624, 2147483648
    %v1627 = vmul.f32 %v1625, 1.442695
    %v1628 = vpow.pop %v1627
    %v1629 = vmul.f32 %v1626, 1.442695
    %v1630 = vpow.pop %v1629
    %v1631 = vadd.f32 %v1628, 1.0
    %v1632 = vadd.f32 %v1630, 1.0
    %v1633 = vrcp.pop %v1631
    %v1634 = vmul.f32 1.0, %v1633
    %v1635 = vrcp.pop %v1632
    %v1636 = vmul.f32 1.0, %v1635
    %1637 = vrot.lane.b32.xlu0 %v1621, 96
    %v1638 = vpop.permute.xlu0 %1637
    %v1640 = vmul.f32 %v1634, %v1638
    %v1641 = vmul.f32 %v1636, %v1638
    %1644 = vrot.lane.b32.xlu0 %v1640, 32
    %v1645 = vpop.permute.xlu0 %1644
    %1646 = vrot.lane.b32.xlu0 %v1641, 32
    %v1647 = vpop.permute.xlu0 %1646
    %v1650 = vadd.f32 %v1606, %v1645
    %v1651 = vadd.f32 %v1611, %v1647
    %v1652 = vtanh.pop %v1650
    %v1653 = vtanh.pop %v1651
    %v1654 = vsub.f32 1.0, %v1634
    %v1655 = vsub.f32 1.0, %v1636
    %1658 = vrot.lane.b32.xlu0 %v1652, 112
    %v1659 = vpop.permute.xlu0 %1658
    %1660 = vrot.lane.b32.xlu0 %v1653, 112
    %v1661 = vpop.permute.xlu0 %1660
    %v1664 = vmul.f32 %v1654, %v1659
    %v1665 = vmul.f32 %v1655, %v1661
    %v1666 = vmul.f32 %v1634, 0.0
    %v1667 = vmul.f32 %v1636, 0.0
    %v1668 = vadd.f32 %v1664, %v1666
    %v1669 = vadd.f32 %v1665, %v1667
    %v1672 = vrot.slane %v1669, 7
    %vm1673 = vcmask 1041409
    %v1674 = vsel %vm1673, %v1672, %v1668
    %1675 = vrot.lane.b32.xlu0 %v1674, 112
    %v1676 = vpop.permute.xlu0 %1675
    %v1677 = vsel %vm872, %v1676, 0
    %1679 = vmatprep.subr.mxu0 0.0
    %1680 = vmatpush1.msra.mxu0 0.0
    %1681 = vmatprep.subr.mxu0 0.0
    %1682 = vmatpush1.msra.mxu0 0.0
    %1683 = vmatprep.subr.mxu0 0.0
    %1684 = vmatpush1.msra.mxu0 0.0
    %1685 = vmatprep.subr.mxu0 0.0
    %1686 = vmatpush1.msra.mxu0 0.0
    %1687 = vmatprep.subr.mxu0 0.0
    %1688 = vmatpush1.msra.mxu0 0.0
    %1689 = vmatprep.subr.mxu0 0.0
    %1690 = vmatpush1.msra.mxu0 0.0
    %1691 = vmatprep.subr.mxu0 0.0
    %1692 = vmatpush1.msra.mxu0 0.0
    %1693 = vmatprep.subr.mxu0 0.0
    %1694 = vmatpush1.msra.mxu0 0.0
    %1695 = vmatprep.subr.mxu0 0.0
    %1696 = vmatpush1.msra.mxu0 0.0
    %1697 = vmatprep.subr.mxu0 0.0
    %1698 = vmatpush1.msra.mxu0 0.0
    %1699 = vmatprep.subr.mxu0 0.0
    %1700 = vmatpush1.msra.mxu0 0.0
    %1701 = vmatprep.subr.mxu0 0.0
    %1702 = vmatpush1.msra.mxu0 0.0
    %1703 = vmatprep.subr.mxu0 0.0
    %1704 = vmatpush1.msra.mxu0 0.0
    %1705 = vmatprep.subr.mxu0 0.0
    %1706 = vmatpush1.msra.mxu0 0.0
    %1707 = vmatprep.subr.mxu0 0.0
    %1708 = vmatpush1.msra.mxu0 %v1615
    %1709 = vmatprep.subr.mxu0 0.0
    %1710 = vmatpush1.msra.mxu0 %v1614
    %1711 = vmatprep.subr.mxu0 0.0
    %1712 = vmatpush2.msra.mxu0 0.0
    %1713 = vmatprep.subr.mxu0 0.0
    %1714 = vmatpush2.msra.mxu0 0.0
    %1715 = vmatprep.subr.mxu0 0.0
    %1716 = vmatpush2.msra.mxu0 0.0
    %1717 = vmatprep.subr.mxu0 0.0
    %1718 = vmatpush2.msra.mxu0 0.0
    %1719 = vmatprep.subr.mxu0 0.0
    %1720 = vmatpush2.msra.mxu0 0.0
    %1721 = vmatprep.subr.mxu0 0.0
    %1722 = vmatpush2.msra.mxu0 0.0
    %1723 = vmatprep.subr.mxu0 0.0
    %1724 = vmatpush2.msra.mxu0 0.0
    %1725 = vmatprep.subr.mxu0 0.0
    %1726 = vmatpush2.msra.mxu0 0.0
    %1727 = vmatprep.subr.mxu0 0.0
    %1728 = vmatpush2.msra.mxu0 0.0
    %1729 = vmatprep.subr.mxu0 0.0
    %1730 = vmatpush2.msra.mxu0 0.0
    %1731 = vmatprep.subr.mxu0 0.0
    %1732 = vmatpush2.msra.mxu0 0.0
    %1733 = vmatprep.subr.mxu0 0.0
    %1734 = vmatpush2.msra.mxu0 0.0
    %1735 = vmatprep.subr.mxu0 0.0
    %1736 = vmatpush2.msra.mxu0 0.0
    %1737 = vmatprep.subr.mxu0 0.0
    %1738 = vmatpush2.msra.mxu0 0.0
    %1739 = vmatprep.subr.mxu0 0.0
    %1740 = vmatpush2.msra.mxu0 0.0
    %1741 = vmatprep.subr.mxu0 0.0
    %1742 = vmatpush2.msra.mxu0 0.0
    %1743 = vmatprep.mubr.f32.mxu0 0.0
    %1744 = vmatmul.mubr.f32.gmra.mxu0 %v1677
    %v1745 = vpop.f32.mrf.mxu0
    %v1746 = vadd.f32 %v1621, %v1745
    %v1747 = vpop.f32.mrf.mxu0
    %1748 = vdwg.mxu0
    %v1750 = vrot.slane %v1746, 7
    %v1753 = vadd.f32 %v1606, %v1750
    %v1754 = vadd.f32 %v1611, %v1746
    %v1755 = vxor.u32 %v1753, 2147483648
    %v1756 = vxor.u32 %v1754, 2147483648
    %v1757 = vmul.f32 %v1755, 1.442695
    %v1758 = vpow.pop %v1757
    %v1759 = vmul.f32 %v1756, 1.442695
    %v1760 = vpow.pop %v1759
    %v1761 = vadd.f32 %v1758, 1.0
    %v1762 = vadd.f32 %v1760, 1.0
    %v1763 = vrcp.pop %v1761
    %v1764 = vmul.f32 1.0, %v1763
    %v1765 = vrcp.pop %v1762
    %v1766 = vmul.f32 1.0, %v1765
    %1767 = vrot.lane.b32.xlu0 %v1750, 96
    %v1768 = vpop.permute.xlu0 %1767
    %1769 = vrot.lane.b32.xlu0 %v1746, 96
    %v1770 = vpop.permute.xlu0 %1769
    %v1773 = vmul.f32 %v1764, %v1768
    %v1774 = vmul.f32 %v1766, %v1770
    %1777 = vrot.lane.b32.xlu0 %v1773, 32
    %v1778 = vpop.permute.xlu0 %1777
    %1779 = vrot.lane.b32.xlu0 %v1774, 32
    %v1780 = vpop.permute.xlu0 %1779
    %v1783 = vadd.f32 %v1606, %v1778
    %v1784 = vadd.f32 %v1611, %v1780
    %v1785 = vtanh.pop %v1783
    %v1786 = vtanh.pop %v1784
    %v1787 = vsub.f32 1.0, %v1764
    %v1788 = vsub.f32 1.0, %v1766
    %1791 = vrot.lane.b32.xlu0 %v1785, 112
    %v1792 = vpop.permute.xlu0 %1791
    %1793 = vrot.lane.b32.xlu0 %v1786, 112
    %v1794 = vpop.permute.xlu0 %1793
    %v1797 = vmul.f32 %v1787, %v1792
    %v1798 = vmul.f32 %v1788, %v1794
    %v1799 = vrot.slane %v1668, 7
    %v1802 = vmul.f32 %v1764, %v1799
    %v1803 = vmul.f32 %v1766, %v1672
    %v1804 = vadd.f32 %v1797, %v1802
    %v1805 = vadd.f32 %v1798, %v1803
    %v1808 = vrot.slane %v1804, 1
    %v1809 = vsel %vm1673, %v1805, %v1808
    %1810 = vrot.lane.b32.xlu0 %v1809, 112
    %v1811 = vpop.permute.xlu0 %1810
    %v1812 = vsel %vm872, %v1811, 0
    %1814 = vmatprep.subr.mxu0 0.0
    %1815 = vmatpush1.msra.mxu0 0.0
    %1816 = vmatprep.subr.mxu0 0.0
    %1817 = vmatpush1.msra.mxu0 0.0
    %1818 = vmatprep.subr.mxu0 0.0
    %1819 = vmatpush1.msra.mxu0 0.0
    %1820 = vmatprep.subr.mxu0 0.0
    %1821 = vmatpush1.msra.mxu0 0.0
    %1822 = vmatprep.subr.mxu0 0.0
    %1823 = vmatpush1.msra.mxu0 0.0
    %1824 = vmatprep.subr.mxu0 0.0
    %1825 = vmatpush1.msra.mxu0 0.0
    %1826 = vmatprep.subr.mxu0 0.0
    %1827 = vmatpush1.msra.mxu0 0.0
    %1828 = vmatprep.subr.mxu0 0.0
    %1829 = vmatpush1.msra.mxu0 0.0
    %1830 = vmatprep.subr.mxu0 0.0
    %1831 = vmatpush1.msra.mxu0 0.0
    %1832 = vmatprep.subr.mxu0 0.0
    %1833 = vmatpush1.msra.mxu0 0.0
    %1834 = vmatprep.subr.mxu0 0.0
    %1835 = vmatpush1.msra.mxu0 0.0
    %1836 = vmatprep.subr.mxu0 0.0
    %1837 = vmatpush1.msra.mxu0 0.0
    %1838 = vmatprep.subr.mxu0 0.0
    %1839 = vmatpush1.msra.mxu0 0.0
    %1840 = vmatprep.subr.mxu0 0.0
    %1841 = vmatpush1.msra.mxu0 0.0
    %1842 = vmatprep.subr.mxu0 0.0
    %1843 = vmatpush1.msra.mxu0 %v1615
    %1844 = vmatprep.subr.mxu0 0.0
    %1845 = vmatpush1.msra.mxu0 %v1614
    %1846 = vmatprep.subr.mxu0 0.0
    %1847 = vmatpush2.msra.mxu0 0.0
    %1848 = vmatprep.subr.mxu0 0.0
    %1849 = vmatpush2.msra.mxu0 0.0
    %1850 = vmatprep.subr.mxu0 0.0
    %1851 = vmatpush2.msra.mxu0 0.0
    %1852 = vmatprep.subr.mxu0 0.0
    %1853 = vmatpush2.msra.mxu0 0.0
    %1854 = vmatprep.subr.mxu0 0.0
    %1855 = vmatpush2.msra.mxu0 0.0
    %1856 = vmatprep.subr.mxu0 0.0
    %1857 = vmatpush2.msra.mxu0 0.0
    %1858 = vmatprep.subr.mxu0 0.0
    %1859 = vmatpush2.msra.mxu0 0.0
    %1860 = vmatprep.subr.mxu0 0.0
    %1861 = vmatpush2.msra.mxu0 0.0
    %1862 = vmatprep.subr.mxu0 0.0
    %1863 = vmatpush2.msra.mxu0 0.0
    %1864 = vmatprep.subr.mxu0 0.0
    %1865 = vmatpush2.msra.mxu0 0.0
    %1866 = vmatprep.subr.mxu0 0.0
    %1867 = vmatpush2.msra.mxu0 0.0
    %1868 = vmatprep.subr.mxu0 0.0
    %1869 = vmatpush2.msra.mxu0 0.0
    %1870 = vmatprep.subr.mxu0 0.0
    %1871 = vmatpush2.msra.mxu0 0.0
    %1872 = vmatprep.subr.mxu0 0.0
    %1873 = vmatpush2.msra.mxu0 0.0
    %1874 = vmatprep.subr.mxu0 0.0
    %1875 = vmatpush2.msra.mxu0 0.0
    %1876 = vmatprep.subr.mxu0 0.0
    %1877 = vmatpush2.msra.mxu0 0.0
    %1878 = vmatprep.mubr.f32.mxu0 0.0
    %1879 = vmatmul.mubr.f32.gmra.mxu0 %v1812
    %v1880 = vpop.f32.mrf.mxu0
    %v1881 = vadd.f32 %v1621, %v1880
    %v1882 = vpop.f32.mrf.mxu0
    %1883 = vdwg.mxu0
    %v1885 = vrot.slane %v1881, 6
    %v1886 = vrot.slane %v1881, 7
    %v1889 = vadd.f32 %v1606, %v1885
    %v1890 = vadd.f32 %v1611, %v1886
    %v1891 = vxor.u32 %v1889, 2147483648
    %v1892 = vxor.u32 %v1890, 2147483648
    %v1893 = vmul.f32 %v1891, 1.442695
    %v1894 = vpow.pop %v1893
    %v1895 = vmul.f32 %v1892, 1.442695
    %v1896 = vpow.pop %v1895
    %v1897 = vadd.f32 %v1894, 1.0
    %v1898 = vadd.f32 %v1896, 1.0
    %v1899 = vrcp.pop %v1897
    %v1900 = vmul.f32 1.0, %v1899
    %v1901 = vrcp.pop %v1898
    %v1902 = vmul.f32 1.0, %v1901
    %1903 = vrot.lane.b32.xlu0 %v1885, 96
    %v1904 = vpop.permute.xlu0 %1903
    %1905 = vrot.lane.b32.xlu0 %v1886, 96
    %v1906 = vpop.permute.xlu0 %1905
    %v1909 = vmul.f32 %v1900, %v1904
    %v1910 = vmul.f32 %v1902, %v1906
    %1913 = vrot.lane.b32.xlu0 %v1909, 32
    %v1914 = vpop.permute.xlu0 %1913
    %1915 = vrot.lane.b32.xlu0 %v1910, 32
    %v1916 = vpop.permute.xlu0 %1915
    %v1919 = vadd.f32 %v1606, %v1914
    %v1920 = vadd.f32 %v1611, %v1916
    %v1921 = vtanh.pop %v1919
    %v1922 = vtanh.pop %v1920
    %v1923 = vsub.f32 1.0, %v1900
    %v1924 = vsub.f32 1.0, %v1902
    %1927 = vrot.lane.b32.xlu0 %v1921, 112
    %v1928 = vpop.permute.xlu0 %1927
    %1929 = vrot.lane.b32.xlu0 %v1922, 112
    %v1930 = vpop.permute.xlu0 %1929
    %v1933 = vmul.f32 %v1923, %v1928
    %v1934 = vmul.f32 %v1924, %v1930
    %v1935 = vrot.slane %v1804, 7
    %v1936 = vrot.slane %v1805, 7
    %v1939 = vmul.f32 %v1900, %v1935
    %v1940 = vmul.f32 %v1902, %v1936
    %v1941 = vadd.f32 %v1933, %v1939
    %v1942 = vadd.f32 %v1934, %v1940
    %v1945 = vrot.slane %v1941, 2
    %v1946 = vrot.slane %v1942, 1
    %v1947 = vsel %vm1673, %v1946, %v1945
    %1948 = vrot.lane.b32.xlu0 %v1947, 112
    %v1949 = vpop.permute.xlu0 %1948
    %v1950 = vsel %vm872, %v1949, 0
    %1952 = vmatprep.subr.mxu0 0.0
    %1953 = vmatpush1.msra.mxu0 0.0
    %1954 = vmatprep.subr.mxu0 0.0
    %1955 = vmatpush1.msra.mxu0 0.0
    %1956 = vmatprep.subr.mxu0 0.0
    %1957 = vmatpush1.msra.mxu0 0.0
    %1958 = vmatprep.subr.mxu0 0.0
    %1959 = vmatpush1.msra.mxu0 0.0
    %1960 = vmatprep.subr.mxu0 0.0
    %1961 = vmatpush1.msra.mxu0 0.0
    %1962 = vmatprep.subr.mxu0 0.0
    %1963 = vmatpush1.msra.mxu0 0.0
    %1964 = vmatprep.subr.mxu0 0.0
    %1965 = vmatpush1.msra.mxu0 0.0
    %1966 = vmatprep.subr.mxu0 0.0
    %1967 = vmatpush1.msra.mxu0 0.0
    %1968 = vmatprep.subr.mxu0 0.0
    %1969 = vmatpush1.msra.mxu0 0.0
    %1970 = vmatprep.subr.mxu0 0.0
    %1971 = vmatpush1.msra.mxu0 0.0
    %1972 = vmatprep.subr.mxu0 0.0
    %1973 = vmatpush1.msra.mxu0 0.0
    %1974 = vmatprep.subr.mxu0 0.0
    %1975 = vmatpush1.msra.mxu0 0.0
    %1976 = vmatprep.subr.mxu0 0.0
    %1977 = vmatpush1.msra.mxu0 0.0
    %1978 = vmatprep.subr.mxu0 0.0
    %1979 = vmatpush1.msra.mxu0 0.0
    %1980 = vmatprep.subr.mxu0 0.0
    %1981 = vmatpush1.msra.mxu0 %v1615
    %1982 = vmatprep.subr.mxu0 0.0
    %1983 = vmatpush1.msra.mxu0 %v1614
    %1984 = vmatprep.subr.mxu0 0.0
    %1985 = vmatpush2.msra.mxu0 0.0
    %1986 = vmatprep.subr.mxu0 0.0
    %1987 = vmatpush2.msra.mxu0 0.0
    %1988 = vmatprep.subr.mxu0 0.0
    %1989 = vmatpush2.msra.mxu0 0.0
    %1990 = vmatprep.subr.mxu0 0.0
    %1991 = vmatpush2.msra.mxu0 0.0
    %1992 = vmatprep.subr.mxu0 0.0
    %1993 = vmatpush2.msra.mxu0 0.0
    %1994 = vmatprep.subr.mxu0 0.0
    %1995 = vmatpush2.msra.mxu0 0.0
    %1996 = vmatprep.subr.mxu0 0.0
    %1997 = vmatpush2.msra.mxu0 0.0
    %1998 = vmatprep.subr.mxu0 0.0
    %1999 = vmatpush2.msra.mxu0 0.0
    %2000 = vmatprep.subr.mxu0 0.0
    %2001 = vmatpush2.msra.mxu0 0.0
    %2002 = vmatprep.subr.mxu0 0.0
    %2003 = vmatpush2.msra.mxu0 0.0
    %2004 = vmatprep.subr.mxu0 0.0
    %2005 = vmatpush2.msra.mxu0 0.0
    %2006 = vmatprep.subr.mxu0 0.0
    %2007 = vmatpush2.msra.mxu0 0.0
    %2008 = vmatprep.subr.mxu0 0.0
    %2009 = vmatpush2.msra.mxu0 0.0
    %2010 = vmatprep.subr.mxu0 0.0
    %2011 = vmatpush2.msra.mxu0 0.0
    %2012 = vmatprep.subr.mxu0 0.0
    %2013 = vmatpush2.msra.mxu0 0.0
    %2014 = vmatprep.subr.mxu0 0.0
    %2015 = vmatpush2.msra.mxu0 0.0
    %2016 = vmatprep.mubr.f32.mxu0 0.0
    %2017 = vmatmul.mubr.f32.gmra.mxu0 %v1950
    %v2018 = vpop.f32.mrf.mxu0
    %v2019 = vadd.f32 %v1621, %v2018
    %v2020 = vpop.f32.mrf.mxu0
    %2021 = vdwg.mxu0
    %v2023 = vrot.slane %v2019, 5
    %v2024 = vrot.slane %v2019, 6
    %v2027 = vadd.f32 %v1606, %v2023
    %v2028 = vadd.f32 %v1611, %v2024
    %v2029 = vxor.u32 %v2027, 2147483648
    %v2030 = vxor.u32 %v2028, 2147483648
    %v2031 = vmul.f32 %v2029, 1.442695
    %v2032 = vpow.pop %v2031
    %v2033 = vmul.f32 %v2030, 1.442695
    %v2034 = vpow.pop %v2033
    %v2035 = vadd.f32 %v2032, 1.0
    %v2036 = vadd.f32 %v2034, 1.0
    %v2037 = vrcp.pop %v2035
    %v2038 = vmul.f32 1.0, %v2037
    %v2039 = vrcp.pop %v2036
    %v2040 = vmul.f32 1.0, %v2039
    %2041 = vrot.lane.b32.xlu0 %v2023, 96
    %v2042 = vpop.permute.xlu0 %2041
    %2043 = vrot.lane.b32.xlu0 %v2024, 96
    %v2044 = vpop.permute.xlu0 %2043
    %v2047 = vmul.f32 %v2038, %v2042
    %v2048 = vmul.f32 %v2040, %v2044
    %2051 = vrot.lane.b32.xlu0 %v2047, 32
    %v2052 = vpop.permute.xlu0 %2051
    %2053 = vrot.lane.b32.xlu0 %v2048, 32
    %v2054 = vpop.permute.xlu0 %2053
    %v2057 = vadd.f32 %v1606, %v2052
    %v2058 = vadd.f32 %v1611, %v2054
    %v2059 = vtanh.pop %v2057
    %v2060 = vtanh.pop %v2058
    %v2061 = vsub.f32 1.0, %v2038
    %v2062 = vsub.f32 1.0, %v2040
    %2065 = vrot.lane.b32.xlu0 %v2059, 112
    %v2066 = vpop.permute.xlu0 %2065
    %2067 = vrot.lane.b32.xlu0 %v2060, 112
    %v2068 = vpop.permute.xlu0 %2067
    %v2071 = vmul.f32 %v2061, %v2066
    %v2072 = vmul.f32 %v2062, %v2068
    %v2073 = vrot.slane %v1941, 7
    %v2074 = vrot.slane %v1942, 7
    %v2077 = vmul.f32 %v2038, %v2073
    %v2078 = vmul.f32 %v2040, %v2074
    %v2079 = vadd.f32 %v2071, %v2077
    %v2080 = vadd.f32 %v2072, %v2078
    %v2083 = vrot.slane %v2079, 3
    %v2084 = vrot.slane %v2080, 2
    %v2085 = vsel %vm1673, %v2084, %v2083
    %2086 = vrot.lane.b32.xlu0 %v2085, 112
    %v2087 = vpop.permute.xlu0 %2086
    %v2088 = vsel %vm872, %v2087, 0
    %2090 = vmatprep.subr.mxu0 0.0
    %2091 = vmatpush1.msra.mxu0 0.0
    %2092 = vmatprep.subr.mxu0 0.0
    %2093 = vmatpush1.msra.mxu0 0.0
    %2094 = vmatprep.subr.mxu0 0.0
    %2095 = vmatpush1.msra.mxu0 0.0
    %2096 = vmatprep.subr.mxu0 0.0
    %2097 = vmatpush1.msra.mxu0 0.0
    %2098 = vmatprep.subr.mxu0 0.0
    %2099 = vmatpush1.msra.mxu0 0.0
    %2100 = vmatprep.subr.mxu0 0.0
    %2101 = vmatpush1.msra.mxu0 0.0
    %2102 = vmatprep.subr.mxu0 0.0
    %2103 = vmatpush1.msra.mxu0 0.0
    %2104 = vmatprep.subr.mxu0 0.0
    %2105 = vmatpush1.msra.mxu0 0.0
    %2106 = vmatprep.subr.mxu0 0.0
    %2107 = vmatpush1.msra.mxu0 0.0
    %2108 = vmatprep.subr.mxu0 0.0
    %2109 = vmatpush1.msra.mxu0 0.0
    %2110 = vmatprep.subr.mxu0 0.0
    %2111 = vmatpush1.msra.mxu0 0.0
    %2112 = vmatprep.subr.mxu0 0.0
    %2113 = vmatpush1.msra.mxu0 0.0
    %2114 = vmatprep.subr.mxu0 0.0
    %2115 = vmatpush1.msra.mxu0 0.0
    %2116 = vmatprep.subr.mxu0 0.0
    %2117 = vmatpush1.msra.mxu0 0.0
    %2118 = vmatprep.subr.mxu0 0.0
    %2119 = vmatpush1.msra.mxu0 %v1615
    %2120 = vmatprep.subr.mxu0 0.0
    %2121 = vmatpush1.msra.mxu0 %v1614
    %2122 = vmatprep.subr.mxu0 0.0
    %2123 = vmatpush2.msra.mxu0 0.0
    %2124 = vmatprep.subr.mxu0 0.0
    %2125 = vmatpush2.msra.mxu0 0.0
    %2126 = vmatprep.subr.mxu0 0.0
    %2127 = vmatpush2.msra.mxu0 0.0
    %2128 = vmatprep.subr.mxu0 0.0
    %2129 = vmatpush2.msra.mxu0 0.0
    %2130 = vmatprep.subr.mxu0 0.0
    %2131 = vmatpush2.msra.mxu0 0.0
    %2132 = vmatprep.subr.mxu0 0.0
    %2133 = vmatpush2.msra.mxu0 0.0
    %2134 = vmatprep.subr.mxu0 0.0
    %2135 = vmatpush2.msra.mxu0 0.0
    %2136 = vmatprep.subr.mxu0 0.0
    %2137 = vmatpush2.msra.mxu0 0.0
    %2138 = vmatprep.subr.mxu0 0.0
    %2139 = vmatpush2.msra.mxu0 0.0
    %2140 = vmatprep.subr.mxu0 0.0
    %2141 = vmatpush2.msra.mxu0 0.0
    %2142 = vmatprep.subr.mxu0 0.0
    %2143 = vmatpush2.msra.mxu0 0.0
    %2144 = vmatprep.subr.mxu0 0.0
    %2145 = vmatpush2.msra.mxu0 0.0
    %2146 = vmatprep.subr.mxu0 0.0
    %2147 = vmatpush2.msra.mxu0 0.0
    %2148 = vmatprep.subr.mxu0 0.0
    %2149 = vmatpush2.msra.mxu0 0.0
    %2150 = vmatprep.subr.mxu0 0.0
    %2151 = vmatpush2.msra.mxu0 0.0
    %2152 = vmatprep.subr.mxu0 0.0
    %2153 = vmatpush2.msra.mxu0 0.0
    %2154 = vmatprep.mubr.f32.mxu0 0.0
    %2155 = vmatmul.mubr.f32.gmra.mxu0 %v2088
    %v2156 = vpop.f32.mrf.mxu0
    %v2157 = vadd.f32 %v1621, %v2156
    %v2158 = vpop.f32.mrf.mxu0
    %2159 = vdwg.mxu0
    %v2161 = vrot.slane %v2157, 4
    %v2162 = vrot.slane %v2157, 5
    %v2165 = vadd.f32 %v1606, %v2161
    %v2166 = vadd.f32 %v1611, %v2162
    %v2167 = vxor.u32 %v2165, 2147483648
    %v2168 = vxor.u32 %v2166, 2147483648
    %v2169 = vmul.f32 %v2167, 1.442695
    %v2170 = vpow.pop %v2169
    %v2171 = vmul.f32 %v2168, 1.442695
    %v2172 = vpow.pop %v2171
    %v2173 = vadd.f32 %v2170, 1.0
    %v2174 = vadd.f32 %v2172, 1.0
    %v2175 = vrcp.pop %v2173
    %v2176 = vmul.f32 1.0, %v2175
    %v2177 = vrcp.pop %v2174
    %v2178 = vmul.f32 1.0, %v2177
    %2179 = vrot.lane.b32.xlu0 %v2161, 96
    %v2180 = vpop.permute.xlu0 %2179
    %2181 = vrot.lane.b32.xlu0 %v2162, 96
    %v2182 = vpop.permute.xlu0 %2181
    %v2185 = vmul.f32 %v2176, %v2180
    %v2186 = vmul.f32 %v2178, %v2182
    %2189 = vrot.lane.b32.xlu0 %v2185, 32
    %v2190 = vpop.permute.xlu0 %2189
    %2191 = vrot.lane.b32.xlu0 %v2186, 32
    %v2192 = vpop.permute.xlu0 %2191
    %v2195 = vadd.f32 %v1606, %v2190
    %v2196 = vadd.f32 %v1611, %v2192
    %v2197 = vtanh.pop %v2195
    %v2198 = vtanh.pop %v2196
    %v2199 = vsub.f32 1.0, %v2176
    %v2200 = vsub.f32 1.0, %v2178
    %2203 = vrot.lane.b32.xlu0 %v2197, 112
    %v2204 = vpop.permute.xlu0 %2203
    %2205 = vrot.lane.b32.xlu0 %v2198, 112
    %v2206 = vpop.permute.xlu0 %2205
    %v2209 = vmul.f32 %v2199, %v2204
    %v2210 = vmul.f32 %v2200, %v2206
    %v2211 = vrot.slane %v2079, 7
    %v2212 = vrot.slane %v2080, 7
    %v2215 = vmul.f32 %v2176, %v2211
    %v2216 = vmul.f32 %v2178, %v2212
    %v2217 = vadd.f32 %v2209, %v2215
    %v2218 = vadd.f32 %v2210, %v2216
    %v2221 = vrot.slane %v2217, 4
    %v2222 = vrot.slane %v2218, 3
    %v2223 = vsel %vm1673, %v2222, %v2221
    %2224 = vrot.lane.b32.xlu0 %v2223, 112
    %v2225 = vpop.permute.xlu0 %2224
    %v2226 = vsel %vm872, %v2225, 0
    %2228 = vmatprep.subr.mxu0 0.0
    %2229 = vmatpush1.msra.mxu0 0.0
    %2230 = vmatprep.subr.mxu0 0.0
    %2231 = vmatpush1.msra.mxu0 0.0
    %2232 = vmatprep.subr.mxu0 0.0
    %2233 = vmatpush1.msra.mxu0 0.0
    %2234 = vmatprep.subr.mxu0 0.0
    %2235 = vmatpush1.msra.mxu0 0.0
    %2236 = vmatprep.subr.mxu0 0.0
    %2237 = vmatpush1.msra.mxu0 0.0
    %2238 = vmatprep.subr.mxu0 0.0
    %2239 = vmatpush1.msra.mxu0 0.0
    %2240 = vmatprep.subr.mxu0 0.0
    %2241 = vmatpush1.msra.mxu0 0.0
    %2242 = vmatprep.subr.mxu0 0.0
    %2243 = vmatpush1.msra.mxu0 0.0
    %2244 = vmatprep.subr.mxu0 0.0
    %2245 = vmatpush1.msra.mxu0 0.0
    %2246 = vmatprep.subr.mxu0 0.0
    %2247 = vmatpush1.msra.mxu0 0.0
    %2248 = vmatprep.subr.mxu0 0.0
    %2249 = vmatpush1.msra.mxu0 0.0
    %2250 = vmatprep.subr.mxu0 0.0
    %2251 = vmatpush1.msra.mxu0 0.0
    %2252 = vmatprep.subr.mxu0 0.0
    %2253 = vmatpush1.msra.mxu0 0.0
    %2254 = vmatprep.subr.mxu0 0.0
    %2255 = vmatpush1.msra.mxu0 0.0
    %2256 = vmatprep.subr.mxu0 0.0
    %2257 = vmatpush1.msra.mxu0 %v1615
    %2258 = vmatprep.subr.mxu0 0.0
    %2259 = vmatpush1.msra.mxu0 %v1614
    %2260 = vmatprep.subr.mxu0 0.0
    %2261 = vmatpush2.msra.mxu0 0.0
    %2262 = vmatprep.subr.mxu0 0.0
    %2263 = vmatpush2.msra.mxu0 0.0
    %2264 = vmatprep.subr.mxu0 0.0
    %2265 = vmatpush2.msra.mxu0 0.0
    %2266 = vmatprep.subr.mxu0 0.0
    %2267 = vmatpush2.msra.mxu0 0.0
    %2268 = vmatprep.subr.mxu0 0.0
    %2269 = vmatpush2.msra.mxu0 0.0
    %2270 = vmatprep.subr.mxu0 0.0
    %2271 = vmatpush2.msra.mxu0 0.0
    %2272 = vmatprep.subr.mxu0 0.0
    %2273 = vmatpush2.msra.mxu0 0.0
    %2274 = vmatprep.subr.mxu0 0.0
    %2275 = vmatpush2.msra.mxu0 0.0
    %2276 = vmatprep.subr.mxu0 0.0
    %2277 = vmatpush2.msra.mxu0 0.0
    %2278 = vmatprep.subr.mxu0 0.0
    %2279 = vmatpush2.msra.mxu0 0.0
    %2280 = vmatprep.subr.mxu0 0.0
    %2281 = vmatpush2.msra.mxu0 0.0
    %2282 = vmatprep.subr.mxu0 0.0
    %2283 = vmatpush2.msra.mxu0 0.0
    %2284 = vmatprep.subr.mxu0 0.0
    %2285 = vmatpush2.msra.mxu0 0.0
    %2286 = vmatprep.subr.mxu0 0.0
    %2287 = vmatpush2.msra.mxu0 0.0
    %2288 = vmatprep.subr.mxu0 0.0
    %2289 = vmatpush2.msra.mxu0 0.0
    %2290 = vmatprep.subr.mxu0 0.0
    %2291 = vmatpush2.msra.mxu0 0.0
    %2292 = vmatprep.mubr.f32.mxu0 0.0
    %2293 = vmatmul.mubr.f32.gmra.mxu0 %v2226
    %v2294 = vpop.f32.mrf.mxu0
    %v2295 = vadd.f32 %v1621, %v2294
    %v2296 = vpop.f32.mrf.mxu0
    %2297 = vdwg.mxu0
    %v2299 = vrot.slane %v2295, 3
    %v2300 = vrot.slane %v2295, 4
    %v2303 = vadd.f32 %v1606, %v2299
    %v2304 = vadd.f32 %v1611, %v2300
    %v2305 = vxor.u32 %v2303, 2147483648
    %v2306 = vxor.u32 %v2304, 2147483648
    %v2307 = vmul.f32 %v2305, 1.442695
    %v2308 = vpow.pop %v2307
    %v2309 = vmul.f32 %v2306, 1.442695
    %v2310 = vpow.pop %v2309
    %v2311 = vadd.f32 %v2308, 1.0
    %v2312 = vadd.f32 %v2310, 1.0
    %v2313 = vrcp.pop %v2311
    %v2314 = vmul.f32 1.0, %v2313
    %v2315 = vrcp.pop %v2312
    %v2316 = vmul.f32 1.0, %v2315
    %2317 = vrot.lane.b32.xlu0 %v2299, 96
    %v2318 = vpop.permute.xlu0 %2317
    %2319 = vrot.lane.b32.xlu0 %v2300, 96
    %v2320 = vpop.permute.xlu0 %2319
    %v2323 = vmul.f32 %v2314, %v2318
    %v2324 = vmul.f32 %v2316, %v2320
    %2327 = vrot.lane.b32.xlu0 %v2323, 32
    %v2328 = vpop.permute.xlu0 %2327
    %2329 = vrot.lane.b32.xlu0 %v2324, 32
    %v2330 = vpop.permute.xlu0 %2329
    %v2333 = vadd.f32 %v1606, %v2328
    %v2334 = vadd.f32 %v1611, %v2330
    %v2335 = vtanh.pop %v2333
    %v2336 = vtanh.pop %v2334
    %v2337 = vsub.f32 1.0, %v2314
    %v2338 = vsub.f32 1.0, %v2316
    %2341 = vrot.lane.b32.xlu0 %v2335, 112
    %v2342 = vpop.permute.xlu0 %2341
    %2343 = vrot.lane.b32.xlu0 %v2336, 112
    %v2344 = vpop.permute.xlu0 %2343
    %v2347 = vmul.f32 %v2337, %v2342
    %v2348 = vmul.f32 %v2338, %v2344
    %v2349 = vrot.slane %v2217, 7
    %v2350 = vrot.slane %v2218, 7
    %v2353 = vmul.f32 %v2314, %v2349
    %v2354 = vmul.f32 %v2316, %v2350
    %v2355 = vadd.f32 %v2347, %v2353
    %v2356 = vadd.f32 %v2348, %v2354
    %v2359 = vrot.slane %v2355, 5
    %v2360 = vrot.slane %v2356, 4
    %v2361 = vsel %vm1673, %v2360, %v2359
    %2362 = vrot.lane.b32.xlu0 %v2361, 112
    %v2363 = vpop.permute.xlu0 %2362
    %v2364 = vsel %vm872, %v2363, 0
    %2366 = vmatprep.subr.mxu0 0.0
    %2367 = vmatpush1.msra.mxu0 0.0
    %2368 = vmatprep.subr.mxu0 0.0
    %2369 = vmatpush1.msra.mxu0 0.0
    %2370 = vmatprep.subr.mxu0 0.0
    %2371 = vmatpush1.msra.mxu0 0.0
    %2372 = vmatprep.subr.mxu0 0.0
    %2373 = vmatpush1.msra.mxu0 0.0
    %2374 = vmatprep.subr.mxu0 0.0
    %2375 = vmatpush1.msra.mxu0 0.0
    %2376 = vmatprep.subr.mxu0 0.0
    %2377 = vmatpush1.msra.mxu0 0.0
    %2378 = vmatprep.subr.mxu0 0.0
    %2379 = vmatpush1.msra.mxu0 0.0
    %2380 = vmatprep.subr.mxu0 0.0
    %2381 = vmatpush1.msra.mxu0 0.0
    %2382 = vmatprep.subr.mxu0 0.0
    %2383 = vmatpush1.msra.mxu0 0.0
    %2384 = vmatprep.subr.mxu0 0.0
    %2385 = vmatpush1.msra.mxu0 0.0
    %2386 = vmatprep.subr.mxu0 0.0
    %2387 = vmatpush1.msra.mxu0 0.0
    %2388 = vmatprep.subr.mxu0 0.0
    %2389 = vmatpush1.msra.mxu0 0.0
    %2390 = vmatprep.subr.mxu0 0.0
    %2391 = vmatpush1.msra.mxu0 0.0
    %2392 = vmatprep.subr.mxu0 0.0
    %2393 = vmatpush1.msra.mxu0 0.0
    %2394 = vmatprep.subr.mxu0 0.0
    %2395 = vmatpush1.msra.mxu0 %v1615
    %2396 = vmatprep.subr.mxu0 0.0
    %2397 = vmatpush1.msra.mxu0 %v1614
    %2398 = vmatprep.subr.mxu0 0.0
    %2399 = vmatpush2.msra.mxu0 0.0
    %2400 = vmatprep.subr.mxu0 0.0
    %2401 = vmatpush2.msra.mxu0 0.0
    %2402 = vmatprep.subr.mxu0 0.0
    %2403 = vmatpush2.msra.mxu0 0.0
    %2404 = vmatprep.subr.mxu0 0.0
    %2405 = vmatpush2.msra.mxu0 0.0
    %2406 = vmatprep.subr.mxu0 0.0
    %2407 = vmatpush2.msra.mxu0 0.0
    %2408 = vmatprep.subr.mxu0 0.0
    %2409 = vmatpush2.msra.mxu0 0.0
    %2410 = vmatprep.subr.mxu0 0.0
    %2411 = vmatpush2.msra.mxu0 0.0
    %2412 = vmatprep.subr.mxu0 0.0
    %2413 = vmatpush2.msra.mxu0 0.0
    %2414 = vmatprep.subr.mxu0 0.0
    %2415 = vmatpush2.msra.mxu0 0.0
    %2416 = vmatprep.subr.mxu0 0.0
    %2417 = vmatpush2.msra.mxu0 0.0
    %2418 = vmatprep.subr.mxu0 0.0
    %2419 = vmatpush2.msra.mxu0 0.0
    %2420 = vmatprep.subr.mxu0 0.0
    %2421 = vmatpush2.msra.mxu0 0.0
    %2422 = vmatprep.subr.mxu0 0.0
    %2423 = vmatpush2.msra.mxu0 0.0
    %2424 = vmatprep.subr.mxu0 0.0
    %2425 = vmatpush2.msra.mxu0 0.0
    %2426 = vmatprep.subr.mxu0 0.0
    %2427 = vmatpush2.msra.mxu0 0.0
    %2428 = vmatprep.subr.mxu0 0.0
    %2429 = vmatpush2.msra.mxu0 0.0
    %2430 = vmatprep.mubr.f32.mxu0 0.0
    %2431 = vmatmul.mubr.f32.gmra.mxu0 %v2364
    %v2432 = vpop.f32.mrf.mxu0
    %v2433 = vadd.f32 %v1621, %v2432
    %v2434 = vpop.f32.mrf.mxu0
    %2435 = vdwg.mxu0
    %v2437 = vrot.slane %v2433, 2
    %v2438 = vrot.slane %v2433, 3
    %v2441 = vadd.f32 %v1606, %v2437
    %v2442 = vadd.f32 %v1611, %v2438
    %v2443 = vxor.u32 %v2441, 2147483648
    %v2444 = vxor.u32 %v2442, 2147483648
    %v2445 = vmul.f32 %v2443, 1.442695
    %v2446 = vpow.pop %v2445
    %v2447 = vmul.f32 %v2444, 1.442695
    %v2448 = vpow.pop %v2447
    %v2449 = vadd.f32 %v2446, 1.0
    %v2450 = vadd.f32 %v2448, 1.0
    %v2451 = vrcp.pop %v2449
    %v2452 = vmul.f32 1.0, %v2451
    %v2453 = vrcp.pop %v2450
    %v2454 = vmul.f32 1.0, %v2453
    %2455 = vrot.lane.b32.xlu0 %v2437, 96
    %v2456 = vpop.permute.xlu0 %2455
    %2457 = vrot.lane.b32.xlu0 %v2438, 96
    %v2458 = vpop.permute.xlu0 %2457
    %v2461 = vmul.f32 %v2452, %v2456
    %v2462 = vmul.f32 %v2454, %v2458
    %2465 = vrot.lane.b32.xlu0 %v2461, 32
    %v2466 = vpop.permute.xlu0 %2465
    %2467 = vrot.lane.b32.xlu0 %v2462, 32
    %v2468 = vpop.permute.xlu0 %2467
    %v2471 = vadd.f32 %v1606, %v2466
    %v2472 = vadd.f32 %v1611, %v2468
    %v2473 = vtanh.pop %v2471
    %v2474 = vtanh.pop %v2472
    %v2475 = vsub.f32 1.0, %v2452
    %v2476 = vsub.f32 1.0, %v2454
    %2479 = vrot.lane.b32.xlu0 %v2473, 112
    %v2480 = vpop.permute.xlu0 %2479
    %2481 = vrot.lane.b32.xlu0 %v2474, 112
    %v2482 = vpop.permute.xlu0 %2481
    %v2485 = vmul.f32 %v2475, %v2480
    %v2486 = vmul.f32 %v2476, %v2482
    %v2487 = vrot.slane %v2355, 7
    %v2488 = vrot.slane %v2356, 7
    %v2491 = vmul.f32 %v2452, %v2487
    %v2492 = vmul.f32 %v2454, %v2488
    %v2493 = vadd.f32 %v2485, %v2491
    %v2494 = vadd.f32 %v2486, %v2492
    %v2497 = vrot.slane %v2493, 6
    %v2498 = vrot.slane %v2494, 5
    %v2499 = vsel %vm1673, %v2498, %v2497
    %2500 = vrot.lane.b32.xlu0 %v2499, 112
    %v2501 = vpop.permute.xlu0 %2500
    %v2502 = vsel %vm872, %v2501, 0
    %2504 = vmatprep.subr.mxu0 0.0
    %2505 = vmatpush1.msra.mxu0 0.0
    %2506 = vmatprep.subr.mxu0 0.0
    %2507 = vmatpush1.msra.mxu0 0.0
    %2508 = vmatprep.subr.mxu0 0.0
    %2509 = vmatpush1.msra.mxu0 0.0
    %2510 = vmatprep.subr.mxu0 0.0
    %2511 = vmatpush1.msra.mxu0 0.0
    %2512 = vmatprep.subr.mxu0 0.0
    %2513 = vmatpush1.msra.mxu0 0.0
    %2514 = vmatprep.subr.mxu0 0.0
    %2515 = vmatpush1.msra.mxu0 0.0
    %2516 = vmatprep.subr.mxu0 0.0
    %2517 = vmatpush1.msra.mxu0 0.0
    %2518 = vmatprep.subr.mxu0 0.0
    %2519 = vmatpush1.msra.mxu0 0.0
    %2520 = vmatprep.subr.mxu0 0.0
    %2521 = vmatpush1.msra.mxu0 0.0
    %2522 = vmatprep.subr.mxu0 0.0
    %2523 = vmatpush1.msra.mxu0 0.0
    %2524 = vmatprep.subr.mxu0 0.0
    %2525 = vmatpush1.msra.mxu0 0.0
    %2526 = vmatprep.subr.mxu0 0.0
    %2527 = vmatpush1.msra.mxu0 0.0
    %2528 = vmatprep.subr.mxu0 0.0
    %2529 = vmatpush1.msra.mxu0 0.0
    %2530 = vmatprep.subr.mxu0 0.0
    %2531 = vmatpush1.msra.mxu0 0.0
    %2532 = vmatprep.subr.mxu0 0.0
    %2533 = vmatpush1.msra.mxu0 %v1615
    %2534 = vmatprep.subr.mxu0 0.0
    %2535 = vmatpush1.msra.mxu0 %v1614
    %2536 = vmatprep.subr.mxu0 0.0
    %2537 = vmatpush2.msra.mxu0 0.0
    %2538 = vmatprep.subr.mxu0 0.0
    %2539 = vmatpush2.msra.mxu0 0.0
    %2540 = vmatprep.subr.mxu0 0.0
    %2541 = vmatpush2.msra.mxu0 0.0
    %2542 = vmatprep.subr.mxu0 0.0
    %2543 = vmatpush2.msra.mxu0 0.0
    %2544 = vmatprep.subr.mxu0 0.0
    %2545 = vmatpush2.msra.mxu0 0.0
    %2546 = vmatprep.subr.mxu0 0.0
    %2547 = vmatpush2.msra.mxu0 0.0
    %2548 = vmatprep.subr.mxu0 0.0
    %2549 = vmatpush2.msra.mxu0 0.0
    %2550 = vmatprep.subr.mxu0 0.0
    %2551 = vmatpush2.msra.mxu0 0.0
    %2552 = vmatprep.subr.mxu0 0.0
    %2553 = vmatpush2.msra.mxu0 0.0
    %2554 = vmatprep.subr.mxu0 0.0
    %2555 = vmatpush2.msra.mxu0 0.0
    %2556 = vmatprep.subr.mxu0 0.0
    %2557 = vmatpush2.msra.mxu0 0.0
    %2558 = vmatprep.subr.mxu0 0.0
    %2559 = vmatpush2.msra.mxu0 0.0
    %2560 = vmatprep.subr.mxu0 0.0
    %2561 = vmatpush2.msra.mxu0 0.0
    %2562 = vmatprep.subr.mxu0 0.0
    %2563 = vmatpush2.msra.mxu0 0.0
    %2564 = vmatprep.subr.mxu0 0.0
    %2565 = vmatpush2.msra.mxu0 0.0
    %2566 = vmatprep.subr.mxu0 0.0
    %2567 = vmatpush2.msra.mxu0 0.0
    %2568 = vmatprep.mubr.f32.mxu0 0.0
    %2569 = vmatmul.mubr.f32.gmra.mxu0 %v2502
    %v2570 = vpop.f32.mrf.mxu0
    %v2571 = vadd.f32 %v1621, %v2570
    %v2572 = vpop.f32.mrf.mxu0
    %2573 = vdwg.mxu0
    %v2575 = vrot.slane %v2571, 1
    %v2576 = vrot.slane %v2571, 2
    %v2579 = vadd.f32 %v1606, %v2575
    %v2580 = vadd.f32 %v1611, %v2576
    %v2581 = vxor.u32 %v2579, 2147483648
    %v2582 = vxor.u32 %v2580, 2147483648
    %v2583 = vmul.f32 %v2581, 1.442695
    %v2584 = vpow.pop %v2583
    %v2585 = vmul.f32 %v2582, 1.442695
    %v2586 = vpow.pop %v2585
    %v2587 = vadd.f32 %v2584, 1.0
    %v2588 = vadd.f32 %v2586, 1.0
    %v2589 = vrcp.pop %v2587
    %v2590 = vmul.f32 1.0, %v2589
    %v2591 = vrcp.pop %v2588
    %v2592 = vmul.f32 1.0, %v2591
    %2593 = vrot.lane.b32.xlu0 %v2575, 96
    %v2594 = vpop.permute.xlu0 %2593
    %2595 = vrot.lane.b32.xlu0 %v2576, 96
    %v2596 = vpop.permute.xlu0 %2595
    %v2599 = vmul.f32 %v2590, %v2594
    %v2600 = vmul.f32 %v2592, %v2596
    %2603 = vrot.lane.b32.xlu0 %v2599, 32
    %v2604 = vpop.permute.xlu0 %2603
    %2605 = vrot.lane.b32.xlu0 %v2600, 32
    %v2606 = vpop.permute.xlu0 %2605
    %v2609 = vadd.f32 %v1606, %v2604
    %v2610 = vadd.f32 %v1611, %v2606
    %v2611 = vtanh.pop %v2609
    %v2612 = vtanh.pop %v2610
    %v2613 = vsub.f32 1.0, %v2590
    %v2614 = vsub.f32 1.0, %v2592
    %2617 = vrot.lane.b32.xlu0 %v2611, 112
    %v2618 = vpop.permute.xlu0 %2617
    %2619 = vrot.lane.b32.xlu0 %v2612, 112
    %v2620 = vpop.permute.xlu0 %2619
    %v2623 = vmul.f32 %v2613, %v2618
    %v2624 = vmul.f32 %v2614, %v2620
    %v2625 = vrot.slane %v2493, 7
    %v2626 = vrot.slane %v2494, 7
    %v2629 = vmul.f32 %v2590, %v2625
    %v2630 = vmul.f32 %v2592, %v2626
    %v2631 = vadd.f32 %v2623, %v2629
    %v2632 = vadd.f32 %v2624, %v2630
    %2635 = vrot.lane.b32.xlu0 %v1947, 16
    %v2636 = vpop.permute.xlu0 %2635
    %2638 = vrot.lane.b32.xlu0 %v2085, 32
    %v2639 = vpop.permute.xlu0 %2638
    %2641 = vrot.lane.b32.xlu0 %v2223, 48
    %v2642 = vpop.permute.xlu0 %2641
    %2644 = vrot.lane.b32.xlu0 %v2361, 64
    %v2645 = vpop.permute.xlu0 %2644
    %2647 = vrot.lane.b32.xlu0 %v2499, 80
    %v2648 = vpop.permute.xlu0 %2647
    %v2652 = vrot.slane %v2631, 7
    %v2653 = vrot.slane %v2632, 6
    %v2654 = vsel %vm1673, %v2653, %v2652
    %2655 = vrot.lane.b32.xlu0 %v2654, 96
    %v2656 = vpop.permute.xlu0 %2655
    %v2658 = vsel %vm872, %v1676, %v1809
    %vm2659 = vcmask 261120
    %v2660 = vsel %vm2659, %v2658, %v2636
    %vm2661 = vcmask 392192
    %v2662 = vsel %vm2661, %v2660, %v2639
    %vm2663 = vcmask 523264
    %v2664 = vsel %vm2663, %v2662, %v2642
    %vm2665 = vcmask 654336
    %v2666 = vsel %vm2665, %v2664, %v2645
    %vm2667 = vcmask 785408
    %v2668 = vsel %vm2667, %v2666, %v2648
    %vm2669 = vcmask 916480
    %v2670 = vsel %vm2669, %v2668, %v2656
    %2671 = vst [vmem:[#allocation19] sm:$0x3] %v2670
    // Predicated region
    $region94: #{tpu_custom_call.1} parent=1 // pred_check
      _
    $region95: #{tpu_custom_call.1} parent=1 // pred_check_branch
      %2673 = sbr.rel (0) target = $region97
    $region96: #{tpu_custom_call.1} parent=1 // pred_region
      %s2675 = ssub.s32 32, 32
      %2676 = vsyncadd [#allocation4], %s2675
      %s2678 = sshll.u32 [#allocation19], 4
      %s2679 = int_to_ptr.vmem [resolvable:$true] %s2678
      %2681 = dma.vmem_to_hbm [thread:$0]  %s2679, 32, %s13, [#allocation4]
    $region97: #{tpu_custom_call.1} parent=1 // pred_fallthru
      _
    // Predicated region
    $region98: #{tpu_custom_call.1} parent=1 // pred_check
      _
    $region99: #{tpu_custom_call.1} parent=1 // pred_check_branch
      %2683 = sbr.rel (0) target = $region101
    $region100: #{tpu_custom_call.1} parent=1 // pred_region
      %2684 = dma.done [#allocation4], 32
    $region101: #{tpu_custom_call.1} parent=1 // pred_fallthru
      _
    %2685 = vsyncpa [#allocation3], 1
    %2686 = vsyncpa [#allocation6], 1
    %2687 = vsyncpa [#allocation9], 1
    %2688 = vsyncpa [#allocation12], 1
    %2689 = vsyncpa [#allocation15], 1
    %2690 = vsyncpa [#allocation18], 1
    %2691 = vsyncpa [#allocation4], 1

</llo_original>
